<compile_context>
chip_gen: v5e
topology: v5e:2x2
jax: 0.10.0
libtpu: 0.0.40
codegen_flags: <defaults>
</compile_context>

<pallas_src>
import jax
import jax.numpy as jnp
from jax.experimental import pallas as pl
from jax.experimental.pallas import tpu as pltpu

EPS = 1e-5


def conv_bn_kernel(w_ref, x_ref, gb_ref, o_ref):
    # w_ref:  (Cout_blk, Cin)   bf16 1x1-conv weight block
    # x_ref:  (Cin, M)          bf16 flattened input (same block every grid step)
    # gb_ref: (Cout_blk, 2)     f32 packed [gamma | beta]
    # o_ref:  (Cout_blk, M)     f32 output block
    y = jnp.dot(w_ref[...], x_ref[...], preferred_element_type=jnp.float32)

    inv_m = jnp.float32(1.0 / y.shape[1])
    # Both reductions walk the same resident y; Mosaic schedules them together.
    s1 = jnp.sum(y, axis=1, keepdims=True)          # (Cout_blk, 1)
    s2 = jnp.sum(y * y, axis=1, keepdims=True)      # (Cout_blk, 1)
    mean = s1 * inv_m
    # single-pass biased variance; clamp guards against cancellation
    var = jnp.maximum(s2 * inv_m - mean * mean, 0.0)

    gamma = gb_ref[:, 0:1]                          # (Cout_blk, 1)
    beta = gb_ref[:, 1:2]                           # (Cout_blk, 1)
    scale = jax.lax.rsqrt(var + EPS) * gamma        # f32 epilogue (v5e VPU has no bf16)
    shift = beta - mean * scale
    o_ref[...] = (y * scale + shift).astype(o_ref.dtype)


def conv2d_1x1_batchnorm(x_nchw, w_oihw, gamma, beta, *,
                         cout_blocks=1, out_dtype=jnp.float32):
    """x_nchw: (1, Cin, H, W); w_oihw: (Cout, Cin, 1, 1); gamma/beta: (Cout,)"""
    n, cin, h, w = x_nchw.shape
    cout = w_oihw.shape[0]
    # Transpose-free path relies on N == 1 (NCHW -> (Cin, M) is a pure reshape).
    # TODO(synk): for N > 1 a batched formulation (or wrapper transpose) is needed.
    assert n == 1
    m = n * h * w

    # bf16 matmul operands (MXU-native); BN math stays f32 inside the kernel.
    x2d = x_nchw.reshape(cin, m).astype(jnp.bfloat16)     # free reshape + cast
    w2d = w_oihw.reshape(cout, cin).astype(jnp.bfloat16)  # free reshape (1x1 kernel)
    gb = jnp.stack([gamma.astype(jnp.float32),
                    beta.astype(jnp.float32)], axis=1)    # (Cout, 2) single small DMA

    assert cout % cout_blocks == 0
    cout_blk = cout // cout_blocks
    assert cout_blk % 8 == 0                               # sublane alignment

    if cout_blocks > 1:
        # v7x: map one Cout block per TensorCore (BN stats are per-channel, split exact).
        semantics = (pltpu.CORE_PARALLEL,)
    else:
        # v5e/v6e: single grid step -> no per-step overhead, no duplicated small DMAs.
        semantics = ("arbitrary",)

    out2d = pl.pallas_call(
        conv_bn_kernel,
        out_shape=jax.ShapeDtypeStruct((cout, m), out_dtype),
        grid=(cout_blocks,),
        in_specs=[
            pl.BlockSpec((cout_blk, cin), lambda i: (i, 0)),  # w block
            pl.BlockSpec((cin, m), lambda i: (0, 0)),         # x (resident across steps)
            pl.BlockSpec((cout_blk, 2), lambda i: (i, 0)),    # packed gamma/beta block
        ],
        out_specs=pl.BlockSpec((cout_blk, m), lambda i: (i, 0)),
        compiler_params=pltpu.CompilerParams(dimension_semantics=semantics),
    )(w2d, x2d, gb)

    return out2d.reshape(n, cout, h, w)                     # free reshape back to NCHW


if __name__ == "__main__":
    key = jax.random.PRNGKey(0)
    k_x, k_w = jax.random.split(key)

    # shapes implied by the module: x [1, 120, 14, 14], conv weight [720, 120, 1, 1]
    N, CIN, H, W = 1, 120, 14, 14
    COUT = 720

    x = jax.random.normal(k_x, (N, CIN, H, W), dtype=jnp.float32)
    # deterministic conv weight (kaiming-ish scaling; synthetic, no checkpoint)
    w = jax.random.normal(k_w, (COUT, CIN, 1, 1), dtype=jnp.float32) * (1.0 / jnp.sqrt(CIN))
    gamma = jnp.ones((COUT,), dtype=jnp.float32)   # BatchNorm2d default affine init
    beta = jnp.zeros((COUT,), dtype=jnp.float32)

    out = conv2d_1x1_batchnorm(x, w, gamma, beta)
    jax.block_until_ready(out)
    assert out.shape == (N, COUT, H, W)

    # reference: same bf16-cast matmul inputs, f32 accumulation, f32 BN epilogue
    y_ref = jnp.dot(w.reshape(COUT, CIN).astype(jnp.bfloat16),
                    x.reshape(CIN, H * W).astype(jnp.bfloat16),
                    preferred_element_type=jnp.float32)
    mu = jnp.mean(y_ref, axis=1, keepdims=True)
    va = jnp.mean(jnp.square(y_ref - mu), axis=1, keepdims=True)
    ref = ((y_ref - mu) * jax.lax.rsqrt(va + EPS) * gamma[:, None]
           + beta[:, None]).reshape(N, COUT, H, W)
    assert jnp.allclose(out, ref, atol=1e-2, rtol=1e-2)

    # sanity: training-mode BN output must be ~zero-mean, ~unit-var per channel
    # (tolerances slightly loosened for the bf16 matmul inputs)
    ch_mean = jnp.mean(out, axis=(0, 2, 3))
    ch_var = jnp.var(out, axis=(0, 2, 3))
    assert jnp.max(jnp.abs(ch_mean)) < 2e-3
    assert jnp.max(jnp.abs(ch_var - 1.0)) < 2e-2

    print("KERNEL_OK")
</pallas_src>

<mosaic_0001>
module attributes {stable_mosaic.version = 11 : i64} {
  func.func @conv_bn_kernel(%arg0: i32, %arg1: memref<720x120xbf16, #tpu.memory_space<vmem>>, %arg2: memref<120x196xbf16, #tpu.memory_space<vmem>>, %arg3: memref<720x2xf32, #tpu.memory_space<vmem>>, %arg4: memref<720x196xf32, #tpu.memory_space<vmem>>) attributes {dimension_semantics = [#tpu.dimension_semantics<arbitrary>], iteration_bounds = array<i64: 1>, scalar_prefetch = 0 : i64, scratch_operands = 0 : i64, tpu.core_type = #tpu.core_type<tc>, window_params = [{transform_indices = @transform_0, window_bounds = array<i64: 720, 120>}, {pipeline_mode = #tpu.pipeline_mode<synchronous>, transform_indices = @transform_1, window_bounds = array<i64: 120, 196>}, {transform_indices = @transform_2, window_bounds = array<i64: 720, 2>}, {transform_indices = @transform_3, window_bounds = array<i64: 720, 196>}]} {
    %c0 = arith.constant 0 : index
    %c0_0 = arith.constant 0 : index
    %0 = vector.load %arg1[%c0, %c0_0] : memref<720x120xbf16, #tpu.memory_space<vmem>>, vector<720x120xbf16>
    %c0_1 = arith.constant 0 : index
    %c0_2 = arith.constant 0 : index
    %1 = vector.load %arg2[%c0_1, %c0_2] : memref<120x196xbf16, #tpu.memory_space<vmem>>, vector<120x196xbf16>
    %cst = arith.constant dense<0.000000e+00> : vector<720x196xf32>
    %2 = tpu.matmul %0, %1, %cst {dimension_numbers = #tpu.dot_dimension_numbers<[1], [0], [0], [1], [0, 0, 1, 1], [], []>} : vector<720x120xbf16>, vector<120x196xbf16>, vector<720x196xf32> -> vector<720x196xf32>
    %cst_3 = arith.constant dense<0.000000e+00> : vector<720xf32>
    %3 = vector.multi_reduction <add>, %2, %cst_3 [1] : vector<720x196xf32> to vector<720xf32>
    %4 = vector.shape_cast %3 : vector<720xf32> to vector<720x1xf32>
    %5 = arith.mulf %2, %2 : vector<720x196xf32>
    %cst_4 = arith.constant dense<0.000000e+00> : vector<720xf32>
    %6 = vector.multi_reduction <add>, %5, %cst_4 [1] : vector<720x196xf32> to vector<720xf32>
    %7 = vector.shape_cast %6 : vector<720xf32> to vector<720x1xf32>
    %cst_5 = arith.constant 0.00510204071 : f32
    %8 = vector.broadcast %cst_5 : f32 to vector<720x1xf32>
    %9 = arith.mulf %4, %8 : vector<720x1xf32>
    %cst_6 = arith.constant 0.00510204071 : f32
    %10 = vector.broadcast %cst_6 : f32 to vector<720x1xf32>
    %11 = arith.mulf %7, %10 : vector<720x1xf32>
    %12 = arith.mulf %9, %9 : vector<720x1xf32>
    %13 = arith.subf %11, %12 : vector<720x1xf32>
    %cst_7 = arith.constant 0.000000e+00 : f32
    %14 = vector.broadcast %cst_7 : f32 to vector<720x1xf32>
    %15 = arith.maximumf %13, %14 : vector<720x1xf32>
    %c0_8 = arith.constant 0 : index
    %c0_9 = arith.constant 0 : index
    %16 = vector.load %arg3[%c0_8, %c0_9] : memref<720x2xf32, #tpu.memory_space<vmem>>, vector<720x1xf32>
    %c0_10 = arith.constant 0 : index
    %c1 = arith.constant 1 : index
    %17 = vector.load %arg3[%c0_10, %c1] : memref<720x2xf32, #tpu.memory_space<vmem>>, vector<720x1xf32>
    %cst_11 = arith.constant 9.99999974E-6 : f32
    %18 = vector.broadcast %cst_11 : f32 to vector<720x1xf32>
    %19 = arith.addf %15, %18 : vector<720x1xf32>
    %20 = math.rsqrt %19 : vector<720x1xf32>
    %21 = arith.mulf %20, %16 : vector<720x1xf32>
    %22 = arith.mulf %9, %21 : vector<720x1xf32>
    %23 = arith.subf %17, %22 : vector<720x1xf32>
    %24 = vector.broadcast %21 : vector<720x1xf32> to vector<720x196xf32>
    %25 = arith.mulf %2, %24 : vector<720x196xf32>
    %26 = vector.broadcast %23 : vector<720x1xf32> to vector<720x196xf32>
    %27 = arith.addf %25, %26 : vector<720x196xf32>
    %c0_12 = arith.constant 0 : index
    %c0_13 = arith.constant 0 : index
    %28 = vector.load %arg4[%c0_12, %c0_13] : memref<720x196xf32, #tpu.memory_space<vmem>>, vector<720x196xf32>
    tpu.vector_store %arg4[%c0_12, %c0_13], %27 {strides = array<i32>} : memref<720x196xf32, #tpu.memory_space<vmem>>, vector<720x196xf32>,
    return
  }
  func.func @transform_0(%arg0: i32) -> (i32, i32) {
    %c0_i32 = arith.constant 0 : i32
    %c0_i32_0 = arith.constant 0 : i32
    return %arg0, %c0_i32 : i32, i32
  }
  func.func @transform_1(%arg0: i32) -> (i32, i32) {
    %c0_i32 = arith.constant 0 : i32
    %c0_i32_0 = arith.constant 0 : i32
    %c0_i32_1 = arith.constant 0 : i32
    return %c0_i32, %c0_i32_0 : i32, i32
  }
  func.func @transform_2(%arg0: i32) -> (i32, i32) {
    %c0_i32 = arith.constant 0 : i32
    %c0_i32_0 = arith.constant 0 : i32
    return %arg0, %c0_i32 : i32, i32
  }
  func.func @transform_3(%arg0: i32) -> (i32, i32) {
    %c0_i32 = arith.constant 0 : i32
    %c0_i32_0 = arith.constant 0 : i32
    return %arg0, %c0_i32 : i32, i32
  }
}

</mosaic_0001>

<llo_original>
// kernel: tpu_custom_call.1
$region0: #{tpu_custom_call.1}
  #allocation0 [shape = 'u32[]', space=smem, size = 0x4, offset = 0x4, fixed_abs, tag = 'smem constant byte address 0x4 - core index']
  #allocation1 [shape = 'u32[72,128]{1,0:T(1,128)}', space=vmem, size = 0x9000, scoped, tag = 'internal scratch']
  %s0 = inlined_call_operand.vmem [shape: bf16[720,120], index: 0, kind: input, shape index: {}]
  %s1 = inlined_call_operand.vmem [shape: bf16[120,196], index: 1, kind: input, shape index: {}]
  %s2 = inlined_call_operand.vmem [shape: f32[720,2], index: 2, kind: input, shape index: {}]
  %s3 = inlined_call_operand.vmem [shape: f32[720,196], index: 3, kind: output, shape index: {}]
  %s4 = sld [smem:[#allocation0]]
  $region22: #{tpu_custom_call.1} parent=0
    _
  %s6 = ssub.s32 1, %s4
  %s7 = scalar_select 0, %s6, %s4
  // Predicated region
  $region2: #{tpu_custom_call.1} parent=0 // pred_check
    _
  $region3: #{tpu_custom_call.1} parent=0 // pred_check_branch
    %9 = sbr.rel (0) target = $region5
  $region4: #{tpu_custom_call.1} parent=0 // pred_region
    _
  $region5: #{tpu_custom_call.1} parent=0 // pred_fallthru
    _
  // Predicated region
  $region6: #{tpu_custom_call.1} parent=0 // pred_check
    _
  $region7: #{tpu_custom_call.1} parent=0 // pred_check_branch
    %11 = sbr.rel (0) target = $region9
  $region8: #{tpu_custom_call.1} parent=0 // pred_region
    _
  $region9: #{tpu_custom_call.1} parent=0 // pred_fallthru
    _
  // Predicated region
  $region10: #{tpu_custom_call.1} parent=0 // pred_check
    _
  $region11: #{tpu_custom_call.1} parent=0 // pred_check_branch
    %13 = sbr.rel (0) target = $region13
  $region12: #{tpu_custom_call.1} parent=0 // pred_region
    _
  $region13: #{tpu_custom_call.1} parent=0 // pred_fallthru
    _
  %v14 = vld [vmem:[%s0] sm:$0xf]
  %v15 = vld [vmem:[%s0 + $0x4] sm:$0xf]
  %v16 = vld [vmem:[%s0 + $0x8] sm:$0xf]
  %v17 = vld [vmem:[%s0 + $0xc] sm:$0xf]
  %v18 = vld [vmem:[%s0 + $0x10] sm:$0xf]
  %v19 = vld [vmem:[%s0 + $0x14] sm:$0xf]
  %v20 = vld [vmem:[%s0 + $0x18] sm:$0xf]
  %v21 = vld [vmem:[%s0 + $0x1c] sm:$0xf]
  %v22 = vld [vmem:[%s0 + $0x20] sm:$0xf]
  %v23 = vld [vmem:[%s0 + $0x24] sm:$0xf]
  %v24 = vld [vmem:[%s0 + $0x28] sm:$0xf]
  %v25 = vld [vmem:[%s0 + $0x2c] sm:$0xf]
  %v26 = vld [vmem:[%s0 + $0x30] sm:$0xf]
  %v27 = vld [vmem:[%s0 + $0x34] sm:$0xf]
  %v28 = vld [vmem:[%s0 + $0x38] sm:$0xf]
  %v29 = vld [vmem:[%s0 + $0x3c] sm:$0xf]
  %v30 = vld [vmem:[%s0 + $0x40] sm:$0xf]
  %v31 = vld [vmem:[%s0 + $0x44] sm:$0xf]
  %v32 = vld [vmem:[%s0 + $0x48] sm:$0xf]
  %v33 = vld [vmem:[%s0 + $0x4c] sm:$0xf]
  %v34 = vld [vmem:[%s0 + $0x50] sm:$0xf]
  %v35 = vld [vmem:[%s0 + $0x54] sm:$0xf]
  %v36 = vld [vmem:[%s0 + $0x58] sm:$0xf]
  %v37 = vld [vmem:[%s0 + $0x5c] sm:$0xf]
  %v38 = vld [vmem:[%s0 + $0x60] sm:$0xf]
  %v39 = vld [vmem:[%s0 + $0x64] sm:$0xf]
  %v40 = vld [vmem:[%s0 + $0x68] sm:$0xf]
  %v41 = vld [vmem:[%s0 + $0x6c] sm:$0xf]
  %v42 = vld [vmem:[%s0 + $0x70] sm:$0xf]
  %v43 = vld [vmem:[%s0 + $0x74] sm:$0xf]
  %v44 = vld [vmem:[%s0 + $0x78] sm:$0xf]
  %v45 = vld [vmem:[%s0 + $0x7c] sm:$0xf]
  %v46 = vld [vmem:[%s0 + $0x80] sm:$0xf]
  %v47 = vld [vmem:[%s0 + $0x84] sm:$0xf]
  %v48 = vld [vmem:[%s0 + $0x88] sm:$0xf]
  %v49 = vld [vmem:[%s0 + $0x8c] sm:$0xf]
  %v50 = vld [vmem:[%s0 + $0x90] sm:$0xf]
  %v51 = vld [vmem:[%s0 + $0x94] sm:$0xf]
  %v52 = vld [vmem:[%s0 + $0x98] sm:$0xf]
  %v53 = vld [vmem:[%s0 + $0x9c] sm:$0xf]
  %v54 = vld [vmem:[%s0 + $0xa0] sm:$0xf]
  %v55 = vld [vmem:[%s0 + $0xa4] sm:$0xf]
  %v56 = vld [vmem:[%s0 + $0xa8] sm:$0xf]
  %v57 = vld [vmem:[%s0 + $0xac] sm:$0xf]
  %v58 = vld [vmem:[%s0 + $0xb0] sm:$0xf]
  %v59 = vld [vmem:[%s0 + $0xb4] sm:$0xf]
  %v60 = vld [vmem:[%s0 + $0xb8] sm:$0xf]
  %v61 = vld [vmem:[%s0 + $0xbc] sm:$0xf]
  %v62 = vld [vmem:[%s0 + $0xc0] sm:$0xf]
  %v63 = vld [vmem:[%s0 + $0xc4] sm:$0xf]
  %v64 = vld [vmem:[%s0 + $0xc8] sm:$0xf]
  %v65 = vld [vmem:[%s0 + $0xcc] sm:$0xf]
  %v66 = vld [vmem:[%s0 + $0xd0] sm:$0xf]
  %v67 = vld [vmem:[%s0 + $0xd4] sm:$0xf]
  %v68 = vld [vmem:[%s0 + $0xd8] sm:$0xf]
  %v69 = vld [vmem:[%s0 + $0xdc] sm:$0xf]
  %v70 = vld [vmem:[%s0 + $0xe0] sm:$0xf]
  %v71 = vld [vmem:[%s0 + $0xe4] sm:$0xf]
  %v72 = vld [vmem:[%s0 + $0xe8] sm:$0xf]
  %v73 = vld [vmem:[%s0 + $0xec] sm:$0xf]
  %v74 = vld [vmem:[%s0 + $0xf0] sm:$0xf]
  %v75 = vld [vmem:[%s0 + $0xf4] sm:$0xf]
  %v76 = vld [vmem:[%s0 + $0xf8] sm:$0xf]
  %v77 = vld [vmem:[%s0 + $0xfc] sm:$0xf]
  %v78 = vld [vmem:[%s0 + $0x100] sm:$0xf]
  %v79 = vld [vmem:[%s0 + $0x104] sm:$0xf]
  %v80 = vld [vmem:[%s0 + $0x108] sm:$0xf]
  %v81 = vld [vmem:[%s0 + $0x10c] sm:$0xf]
  %v82 = vld [vmem:[%s0 + $0x110] sm:$0xf]
  %v83 = vld [vmem:[%s0 + $0x114] sm:$0xf]
  %v84 = vld [vmem:[%s0 + $0x118] sm:$0xf]
  %v85 = vld [vmem:[%s0 + $0x11c] sm:$0xf]
  %v86 = vld [vmem:[%s0 + $0x120] sm:$0xf]
  %v87 = vld [vmem:[%s0 + $0x124] sm:$0xf]
  %v88 = vld [vmem:[%s0 + $0x128] sm:$0xf]
  %v89 = vld [vmem:[%s0 + $0x12c] sm:$0xf]
  %v90 = vld [vmem:[%s0 + $0x130] sm:$0xf]
  %v91 = vld [vmem:[%s0 + $0x134] sm:$0xf]
  %v92 = vld [vmem:[%s0 + $0x138] sm:$0xf]
  %v93 = vld [vmem:[%s0 + $0x13c] sm:$0xf]
  %v94 = vld [vmem:[%s0 + $0x140] sm:$0xf]
  %v95 = vld [vmem:[%s0 + $0x144] sm:$0xf]
  %v96 = vld [vmem:[%s0 + $0x148] sm:$0xf]
  %v97 = vld [vmem:[%s0 + $0x14c] sm:$0xf]
  %v98 = vld [vmem:[%s0 + $0x150] sm:$0xf]
  %v99 = vld [vmem:[%s0 + $0x154] sm:$0xf]
  %v100 = vld [vmem:[%s0 + $0x158] sm:$0xf]
  %v101 = vld [vmem:[%s0 + $0x15c] sm:$0xf]
  %v102 = vld [vmem:[%s0 + $0x160] sm:$0xf]
  %v103 = vld [vmem:[%s0 + $0x164] sm:$0xf]
  %v104 = vld [vmem:[%s1] sm:$0xff]
  %v105 = vld [vmem:[%s1 + $0x8] sm:$0xff]
  %v106 = vld [vmem:[%s1 + $0x10] sm:$0xff]
  %v107 = vld [vmem:[%s1 + $0x18] sm:$0xff]
  %v108 = vld [vmem:[%s1 + $0x20] sm:$0xff]
  %v109 = vld [vmem:[%s1 + $0x28] sm:$0xff]
  %v110 = vld [vmem:[%s1 + $0x30] sm:$0xff]
  %v111 = vld [vmem:[%s1 + $0x38] sm:$0xff]
  %v112 = vld [vmem:[%s1 + $0x40] sm:$0xff]
  %v113 = vld [vmem:[%s1 + $0x48] sm:$0xff]
  %v114 = vld [vmem:[%s1 + $0x50] sm:$0xff]
  %v115 = vld [vmem:[%s1 + $0x58] sm:$0xff]
  %v116 = vld [vmem:[%s1 + $0x60] sm:$0xff]
  %v117 = vld [vmem:[%s1 + $0x68] sm:$0xff]
  %v118 = vld [vmem:[%s1 + $0x70] sm:$0xff]
  %v209 = vunpack.c.l.b16 %v14
  %v210 = vunpack.c.l.b16 %v15
  %v211 = vunpack.c.l.b16 %v16
  %v212 = vunpack.c.l.b16 %v17
  %v213 = vunpack.c.l.b16 %v18
  %v214 = vunpack.c.l.b16 %v19
  %v215 = vunpack.c.l.b16 %v20
  %v216 = vunpack.c.l.b16 %v21
  %v217 = vunpack.c.l.b16 %v22
  %v218 = vunpack.c.l.b16 %v23
  %v219 = vunpack.c.l.b16 %v24
  %v220 = vunpack.c.l.b16 %v25
  %v221 = vunpack.c.l.b16 %v26
  %v222 = vunpack.c.l.b16 %v27
  %v223 = vunpack.c.l.b16 %v28
  %v224 = vunpack.c.l.b16 %v29
  %v225 = vunpack.c.l.b16 %v30
  %v226 = vunpack.c.l.b16 %v31
  %v227 = vunpack.c.l.b16 %v32
  %v228 = vunpack.c.l.b16 %v33
  %v229 = vunpack.c.l.b16 %v34
  %v230 = vunpack.c.l.b16 %v35
  %v231 = vunpack.c.l.b16 %v36
  %v232 = vunpack.c.l.b16 %v37
  %v233 = vunpack.c.l.b16 %v38
  %v234 = vunpack.c.l.b16 %v39
  %v235 = vunpack.c.l.b16 %v40
  %v236 = vunpack.c.l.b16 %v41
  %v237 = vunpack.c.l.b16 %v42
  %v238 = vunpack.c.l.b16 %v43
  %v239 = vunpack.c.l.b16 %v44
  %v240 = vunpack.c.l.b16 %v45
  %v241 = vunpack.c.l.b16 %v46
  %v242 = vunpack.c.l.b16 %v47
  %v243 = vunpack.c.l.b16 %v48
  %v244 = vunpack.c.l.b16 %v49
  %v245 = vunpack.c.l.b16 %v50
  %v246 = vunpack.c.l.b16 %v51
  %v247 = vunpack.c.l.b16 %v52
  %v248 = vunpack.c.l.b16 %v53
  %v249 = vunpack.c.l.b16 %v54
  %v250 = vunpack.c.l.b16 %v55
  %v251 = vunpack.c.l.b16 %v56
  %v252 = vunpack.c.l.b16 %v57
  %v253 = vunpack.c.l.b16 %v58
  %v254 = vunpack.c.l.b16 %v59
  %v255 = vunpack.c.l.b16 %v60
  %v256 = vunpack.c.l.b16 %v61
  %v257 = vunpack.c.l.b16 %v62
  %v258 = vunpack.c.l.b16 %v63
  %v259 = vunpack.c.l.b16 %v64
  %v260 = vunpack.c.l.b16 %v65
  %v261 = vunpack.c.l.b16 %v66
  %v262 = vunpack.c.l.b16 %v67
  %v263 = vunpack.c.l.b16 %v68
  %v264 = vunpack.c.l.b16 %v69
  %v265 = vunpack.c.l.b16 %v70
  %v266 = vunpack.c.l.b16 %v71
  %v267 = vunpack.c.l.b16 %v72
  %v268 = vunpack.c.l.b16 %v73
  %v269 = vunpack.c.l.b16 %v74
  %v270 = vunpack.c.l.b16 %v75
  %v271 = vunpack.c.l.b16 %v76
  %v272 = vunpack.c.l.b16 %v77
  %v273 = vunpack.c.l.b16 %v78
  %v274 = vunpack.c.l.b16 %v79
  %v275 = vunpack.c.l.b16 %v80
  %v276 = vunpack.c.l.b16 %v81
  %v277 = vunpack.c.l.b16 %v82
  %v278 = vunpack.c.l.b16 %v83
  %v279 = vunpack.c.l.b16 %v84
  %v280 = vunpack.c.l.b16 %v85
  %v281 = vunpack.c.l.b16 %v86
  %v282 = vunpack.c.l.b16 %v87
  %v283 = vunpack.c.l.b16 %v88
  %v284 = vunpack.c.l.b16 %v89
  %v285 = vunpack.c.l.b16 %v90
  %v286 = vunpack.c.l.b16 %v91
  %v287 = vunpack.c.l.b16 %v92
  %v288 = vunpack.c.l.b16 %v93
  %v289 = vunpack.c.l.b16 %v94
  %v290 = vunpack.c.l.b16 %v95
  %v291 = vunpack.c.l.b16 %v96
  %v292 = vunpack.c.l.b16 %v97
  %v293 = vunpack.c.l.b16 %v98
  %v294 = vunpack.c.l.b16 %v99
  %v295 = vunpack.c.l.b16 %v100
  %v296 = vunpack.c.l.b16 %v101
  %v297 = vunpack.c.l.b16 %v102
  %v298 = vunpack.c.l.b16 %v103
  %v299 = vpack.c.b16 %v210, %v209
  %v300 = vpack.c.b16 %v212, %v211
  %v301 = vpack.c.b16 %v214, %v213
  %v302 = vpack.c.b16 %v216, %v215
  %v303 = vpack.c.b16 %v218, %v217
  %v304 = vpack.c.b16 %v220, %v219
  %v305 = vpack.c.b16 %v222, %v221
  %v306 = vpack.c.b16 %v224, %v223
  %v307 = vpack.c.b16 %v226, %v225
  %v308 = vpack.c.b16 %v228, %v227
  %v309 = vpack.c.b16 %v230, %v229
  %v310 = vpack.c.b16 %v232, %v231
  %v311 = vpack.c.b16 %v234, %v233
  %v312 = vpack.c.b16 %v236, %v235
  %v313 = vpack.c.b16 %v238, %v237
  %v314 = vpack.c.b16 %v240, %v239
  %v315 = vpack.c.b16 %v242, %v241
  %v316 = vpack.c.b16 %v244, %v243
  %v317 = vpack.c.b16 %v246, %v245
  %v318 = vpack.c.b16 %v248, %v247
  %v319 = vpack.c.b16 %v250, %v249
  %v320 = vpack.c.b16 %v252, %v251
  %v321 = vpack.c.b16 %v254, %v253
  %v322 = vpack.c.b16 %v256, %v255
  %v323 = vpack.c.b16 %v258, %v257
  %v324 = vpack.c.b16 %v260, %v259
  %v325 = vpack.c.b16 %v262, %v261
  %v326 = vpack.c.b16 %v264, %v263
  %v327 = vpack.c.b16 %v266, %v265
  %v328 = vpack.c.b16 %v268, %v267
  %v329 = vpack.c.b16 %v270, %v269
  %v330 = vpack.c.b16 %v272, %v271
  %v331 = vpack.c.b16 %v274, %v273
  %v332 = vpack.c.b16 %v276, %v275
  %v333 = vpack.c.b16 %v278, %v277
  %v334 = vpack.c.b16 %v280, %v279
  %v335 = vpack.c.b16 %v282, %v281
  %v336 = vpack.c.b16 %v284, %v283
  %v337 = vpack.c.b16 %v286, %v285
  %v338 = vpack.c.b16 %v288, %v287
  %v339 = vpack.c.b16 %v290, %v289
  %v340 = vpack.c.b16 %v292, %v291
  %v341 = vpack.c.b16 %v294, %v293
  %v342 = vpack.c.b16 %v296, %v295
  %v343 = vpack.c.b16 %v298, %v297
  %v359 = vunpack.c.l.b16 %v104
  %v360 = vunpack.c.h.b16 %v104
  %v361 = vunpack.c.l.b16 %v105
  %v362 = vunpack.c.h.b16 %v105
  %v363 = vunpack.c.l.b16 %v106
  %v364 = vunpack.c.h.b16 %v106
  %v365 = vunpack.c.l.b16 %v107
  %v366 = vunpack.c.h.b16 %v107
  %v367 = vunpack.c.l.b16 %v108
  %v368 = vunpack.c.h.b16 %v108
  %v369 = vunpack.c.l.b16 %v109
  %v370 = vunpack.c.h.b16 %v109
  %v371 = vunpack.c.l.b16 %v110
  %v372 = vunpack.c.h.b16 %v110
  %v373 = vunpack.c.l.b16 %v111
  %v374 = vunpack.c.h.b16 %v111
  %v375 = vunpack.c.l.b16 %v112
  %v376 = vunpack.c.h.b16 %v112
  %v377 = vunpack.c.l.b16 %v113
  %v378 = vunpack.c.h.b16 %v113
  %v379 = vunpack.c.l.b16 %v114
  %v380 = vunpack.c.h.b16 %v114
  %v381 = vunpack.c.l.b16 %v115
  %v382 = vunpack.c.h.b16 %v115
  %v383 = vunpack.c.l.b16 %v116
  %v384 = vunpack.c.h.b16 %v116
  %v385 = vunpack.c.l.b16 %v117
  %v386 = vunpack.c.h.b16 %v117
  %v387 = vunpack.c.l.b16 %v118
  %v388 = vunpack.c.h.b16 %v118
  %v389 = vpack.c.b16 %v361, %v359
  %v390 = vpack.c.b16 %v362, %v360
  %v391 = vpack.c.b16 %v365, %v363
  %v392 = vpack.c.b16 %v366, %v364
  %v393 = vpack.c.b16 %v369, %v367
  %v394 = vpack.c.b16 %v370, %v368
  %v395 = vpack.c.b16 %v373, %v371
  %v396 = vpack.c.b16 %v374, %v372
  %v397 = vpack.c.b16 %v377, %v375
  %v398 = vpack.c.b16 %v378, %v376
  %v399 = vpack.c.b16 %v381, %v379
  %v400 = vpack.c.b16 %v382, %v380
  %v401 = vpack.c.b16 %v385, %v383
  %v402 = vpack.c.b16 %v386, %v384
  %v403 = vpack.c.b16 %v387, %v387
  %v404 = vpack.c.b16 %v388, %v388
  %vm419 = vcmask 982016
  %v421 = vsel %vm419, %v299, 0
  %v424 = vsel %vm419, %v300, 0
  %v427 = vsel %vm419, %v301, 0
  %v430 = vsel %vm419, %v302, 0
  %v433 = vsel %vm419, %v303, 0
  %v436 = vsel %vm419, %v304, 0
  %v439 = vsel %vm419, %v305, 0
  %v442 = vsel %vm419, %v306, 0
  %v445 = vsel %vm419, %v307, 0
  %v448 = vsel %vm419, %v308, 0
  %v451 = vsel %vm419, %v309, 0
  %v454 = vsel %vm419, %v310, 0
  %v457 = vsel %vm419, %v311, 0
  %v460 = vsel %vm419, %v312, 0
  %v463 = vsel %vm419, %v313, 0
  %v466 = vsel %vm419, %v314, 0
  %v469 = vsel %vm419, %v315, 0
  %v472 = vsel %vm419, %v316, 0
  %v475 = vsel %vm419, %v317, 0
  %v478 = vsel %vm419, %v318, 0
  %v481 = vsel %vm419, %v319, 0
  %v484 = vsel %vm419, %v320, 0
  %v487 = vsel %vm419, %v321, 0
  %v490 = vsel %vm419, %v322, 0
  %v493 = vsel %vm419, %v323, 0
  %v496 = vsel %vm419, %v324, 0
  %v499 = vsel %vm419, %v325, 0
  %v502 = vsel %vm419, %v326, 0
  %v505 = vsel %vm419, %v327, 0
  %v508 = vsel %vm419, %v328, 0
  %v511 = vsel %vm419, %v329, 0
  %v514 = vsel %vm419, %v330, 0
  %v517 = vsel %vm419, %v331, 0
  %v520 = vsel %vm419, %v332, 0
  %v523 = vsel %vm419, %v333, 0
  %v526 = vsel %vm419, %v334, 0
  %v529 = vsel %vm419, %v335, 0
  %v532 = vsel %vm419, %v336, 0
  %v535 = vsel %vm419, %v337, 0
  %v538 = vsel %vm419, %v338, 0
  %v541 = vsel %vm419, %v339, 0
  %v544 = vsel %vm419, %v340, 0
  %v547 = vsel %vm419, %v341, 0
  %v550 = vsel %vm419, %v342, 0
  %v553 = vsel %vm419, %v343, 0
  %vm555 = vcmask 1043456
  %v557 = vsel %vm555, %v403, 0
  %v560 = vsel %vm555, %v404, 0
  %562 = vmatpush.bf16.msra.mxu0 %v557
  %563 = vmatpush.bf16.msra.mxu0 %v401
  %564 = vmatpush.bf16.msra.mxu0 %v399
  %565 = vmatpush.bf16.msra.mxu0 %v397
  %566 = vmatpush.bf16.msra.mxu0 %v395
  %567 = vmatpush.bf16.msra.mxu0 %v393
  %568 = vmatpush.bf16.msra.mxu0 %v391
  %569 = vmatpush.bf16.msra.mxu0 %v389
  %570 = vmatmul.bf16.gmra.mxu0 %v421
  %v571 = vpop.f32.mrf.mxu0
  %v572 = vadd.f32 0.0, %v571
  %v573 = vpop.f32.mrf.mxu0
  %v574 = vadd.f32 0.0, %v573
  %575 = vmatmul.bf16.gmra.mxu0 %v424
  %v576 = vpop.f32.mrf.mxu0
  %v577 = vadd.f32 0.0, %v576
  %v578 = vpop.f32.mrf.mxu0
  %v579 = vadd.f32 0.0, %v578
  %580 = vmatmul.bf16.gmra.mxu0 %v427
  %v581 = vpop.f32.mrf.mxu0
  %v582 = vadd.f32 0.0, %v581
  %v583 = vpop.f32.mrf.mxu0
  %v584 = vadd.f32 0.0, %v583
  %585 = vmatmul.bf16.gmra.mxu0 %v430
  %v586 = vpop.f32.mrf.mxu0
  %v587 = vadd.f32 0.0, %v586
  %v588 = vpop.f32.mrf.mxu0
  %v589 = vadd.f32 0.0, %v588
  %590 = vmatmul.bf16.gmra.mxu0 %v433
  %v591 = vpop.f32.mrf.mxu0
  %v592 = vadd.f32 0.0, %v591
  %v593 = vpop.f32.mrf.mxu0
  %v594 = vadd.f32 0.0, %v593
  %595 = vmatmul.bf16.gmra.mxu0 %v436
  %v596 = vpop.f32.mrf.mxu0
  %v597 = vadd.f32 0.0, %v596
  %v598 = vpop.f32.mrf.mxu0
  %v599 = vadd.f32 0.0, %v598
  %600 = vmatmul.bf16.gmra.mxu0 %v439
  %v601 = vpop.f32.mrf.mxu0
  %v602 = vadd.f32 0.0, %v601
  %v603 = vpop.f32.mrf.mxu0
  %v604 = vadd.f32 0.0, %v603
  %605 = vmatmul.bf16.gmra.mxu0 %v442
  %v606 = vpop.f32.mrf.mxu0
  %v607 = vadd.f32 0.0, %v606
  %v608 = vpop.f32.mrf.mxu0
  %v609 = vadd.f32 0.0, %v608
  %610 = vmatmul.bf16.gmra.mxu0 %v445
  %v611 = vpop.f32.mrf.mxu0
  %v612 = vadd.f32 0.0, %v611
  %v613 = vpop.f32.mrf.mxu0
  %v614 = vadd.f32 0.0, %v613
  %615 = vmatmul.bf16.gmra.mxu0 %v448
  %v616 = vpop.f32.mrf.mxu0
  %v617 = vadd.f32 0.0, %v616
  %v618 = vpop.f32.mrf.mxu0
  %v619 = vadd.f32 0.0, %v618
  %620 = vmatmul.bf16.gmra.mxu0 %v451
  %v621 = vpop.f32.mrf.mxu0
  %v622 = vadd.f32 0.0, %v621
  %v623 = vpop.f32.mrf.mxu0
  %v624 = vadd.f32 0.0, %v623
  %625 = vmatmul.bf16.gmra.mxu0 %v454
  %v626 = vpop.f32.mrf.mxu0
  %v627 = vadd.f32 0.0, %v626
  %v628 = vpop.f32.mrf.mxu0
  %v629 = vadd.f32 0.0, %v628
  %630 = vmatmul.bf16.gmra.mxu0 %v457
  %v631 = vpop.f32.mrf.mxu0
  %v632 = vadd.f32 0.0, %v631
  %v633 = vpop.f32.mrf.mxu0
  %v634 = vadd.f32 0.0, %v633
  %635 = vmatmul.bf16.gmra.mxu0 %v460
  %v636 = vpop.f32.mrf.mxu0
  %v637 = vadd.f32 0.0, %v636
  %v638 = vpop.f32.mrf.mxu0
  %v639 = vadd.f32 0.0, %v638
  %640 = vmatmul.bf16.gmra.mxu0 %v463
  %v641 = vpop.f32.mrf.mxu0
  %v642 = vadd.f32 0.0, %v641
  %v643 = vpop.f32.mrf.mxu0
  %v644 = vadd.f32 0.0, %v643
  %645 = vmatmul.bf16.gmra.mxu0 %v466
  %v646 = vpop.f32.mrf.mxu0
  %v647 = vadd.f32 0.0, %v646
  %v648 = vpop.f32.mrf.mxu0
  %v649 = vadd.f32 0.0, %v648
  %650 = vmatmul.bf16.gmra.mxu0 %v469
  %v651 = vpop.f32.mrf.mxu0
  %v652 = vadd.f32 0.0, %v651
  %v653 = vpop.f32.mrf.mxu0
  %v654 = vadd.f32 0.0, %v653
  %655 = vmatmul.bf16.gmra.mxu0 %v472
  %v656 = vpop.f32.mrf.mxu0
  %v657 = vadd.f32 0.0, %v656
  %v658 = vpop.f32.mrf.mxu0
  %v659 = vadd.f32 0.0, %v658
  %660 = vmatmul.bf16.gmra.mxu0 %v475
  %v661 = vpop.f32.mrf.mxu0
  %v662 = vadd.f32 0.0, %v661
  %v663 = vpop.f32.mrf.mxu0
  %v664 = vadd.f32 0.0, %v663
  %665 = vmatmul.bf16.gmra.mxu0 %v478
  %v666 = vpop.f32.mrf.mxu0
  %v667 = vadd.f32 0.0, %v666
  %v668 = vpop.f32.mrf.mxu0
  %v669 = vadd.f32 0.0, %v668
  %670 = vmatmul.bf16.gmra.mxu0 %v481
  %v671 = vpop.f32.mrf.mxu0
  %v672 = vadd.f32 0.0, %v671
  %v673 = vpop.f32.mrf.mxu0
  %v674 = vadd.f32 0.0, %v673
  %675 = vmatmul.bf16.gmra.mxu0 %v484
  %v676 = vpop.f32.mrf.mxu0
  %v677 = vadd.f32 0.0, %v676
  %v678 = vpop.f32.mrf.mxu0
  %v679 = vadd.f32 0.0, %v678
  %680 = vmatmul.bf16.gmra.mxu0 %v487
  %v681 = vpop.f32.mrf.mxu0
  %v682 = vadd.f32 0.0, %v681
  %v683 = vpop.f32.mrf.mxu0
  %v684 = vadd.f32 0.0, %v683
  %685 = vmatmul.bf16.gmra.mxu0 %v490
  %v686 = vpop.f32.mrf.mxu0
  %v687 = vadd.f32 0.0, %v686
  %v688 = vpop.f32.mrf.mxu0
  %v689 = vadd.f32 0.0, %v688
  %690 = vmatmul.bf16.gmra.mxu0 %v493
  %v691 = vpop.f32.mrf.mxu0
  %v692 = vadd.f32 0.0, %v691
  %v693 = vpop.f32.mrf.mxu0
  %v694 = vadd.f32 0.0, %v693
  %695 = vmatmul.bf16.gmra.mxu0 %v496
  %v696 = vpop.f32.mrf.mxu0
  %v697 = vadd.f32 0.0, %v696
  %v698 = vpop.f32.mrf.mxu0
  %v699 = vadd.f32 0.0, %v698
  %700 = vmatmul.bf16.gmra.mxu0 %v499
  %v701 = vpop.f32.mrf.mxu0
  %v702 = vadd.f32 0.0, %v701
  %v703 = vpop.f32.mrf.mxu0
  %v704 = vadd.f32 0.0, %v703
  %705 = vmatmul.bf16.gmra.mxu0 %v502
  %v706 = vpop.f32.mrf.mxu0
  %v707 = vadd.f32 0.0, %v706
  %v708 = vpop.f32.mrf.mxu0
  %v709 = vadd.f32 0.0, %v708
  %710 = vmatmul.bf16.gmra.mxu0 %v505
  %v711 = vpop.f32.mrf.mxu0
  %v712 = vadd.f32 0.0, %v711
  %v713 = vpop.f32.mrf.mxu0
  %v714 = vadd.f32 0.0, %v713
  %715 = vmatmul.bf16.gmra.mxu0 %v508
  %v716 = vpop.f32.mrf.mxu0
  %v717 = vadd.f32 0.0, %v716
  %v718 = vpop.f32.mrf.mxu0
  %v719 = vadd.f32 0.0, %v718
  %720 = vmatmul.bf16.gmra.mxu0 %v511
  %v721 = vpop.f32.mrf.mxu0
  %v722 = vadd.f32 0.0, %v721
  %v723 = vpop.f32.mrf.mxu0
  %v724 = vadd.f32 0.0, %v723
  %725 = vmatmul.bf16.gmra.mxu0 %v514
  %v726 = vpop.f32.mrf.mxu0
  %v727 = vadd.f32 0.0, %v726
  %v728 = vpop.f32.mrf.mxu0
  %v729 = vadd.f32 0.0, %v728
  %730 = vmatmul.bf16.gmra.mxu0 %v517
  %v731 = vpop.f32.mrf.mxu0
  %v732 = vadd.f32 0.0, %v731
  %v733 = vpop.f32.mrf.mxu0
  %v734 = vadd.f32 0.0, %v733
  %735 = vmatmul.bf16.gmra.mxu0 %v520
  %v736 = vpop.f32.mrf.mxu0
  %v737 = vadd.f32 0.0, %v736
  %v738 = vpop.f32.mrf.mxu0
  %v739 = vadd.f32 0.0, %v738
  %740 = vmatmul.bf16.gmra.mxu0 %v523
  %v741 = vpop.f32.mrf.mxu0
  %v742 = vadd.f32 0.0, %v741
  %v743 = vpop.f32.mrf.mxu0
  %v744 = vadd.f32 0.0, %v743
  %745 = vmatmul.bf16.gmra.mxu0 %v526
  %v746 = vpop.f32.mrf.mxu0
  %v747 = vadd.f32 0.0, %v746
  %v748 = vpop.f32.mrf.mxu0
  %v749 = vadd.f32 0.0, %v748
  %750 = vmatmul.bf16.gmra.mxu0 %v529
  %v751 = vpop.f32.mrf.mxu0
  %v752 = vadd.f32 0.0, %v751
  %v753 = vpop.f32.mrf.mxu0
  %v754 = vadd.f32 0.0, %v753
  %755 = vmatmul.bf16.gmra.mxu0 %v532
  %v756 = vpop.f32.mrf.mxu0
  %v757 = vadd.f32 0.0, %v756
  %v758 = vpop.f32.mrf.mxu0
  %v759 = vadd.f32 0.0, %v758
  %760 = vmatmul.bf16.gmra.mxu0 %v535
  %v761 = vpop.f32.mrf.mxu0
  %v762 = vadd.f32 0.0, %v761
  %v763 = vpop.f32.mrf.mxu0
  %v764 = vadd.f32 0.0, %v763
  %765 = vmatmul.bf16.gmra.mxu0 %v538
  %v766 = vpop.f32.mrf.mxu0
  %v767 = vadd.f32 0.0, %v766
  %v768 = vpop.f32.mrf.mxu0
  %v769 = vadd.f32 0.0, %v768
  %770 = vmatmul.bf16.gmra.mxu0 %v541
  %v771 = vpop.f32.mrf.mxu0
  %v772 = vadd.f32 0.0, %v771
  %v773 = vpop.f32.mrf.mxu0
  %v774 = vadd.f32 0.0, %v773
  %775 = vmatmul.bf16.gmra.mxu0 %v544
  %v776 = vpop.f32.mrf.mxu0
  %v777 = vadd.f32 0.0, %v776
  %v778 = vpop.f32.mrf.mxu0
  %v779 = vadd.f32 0.0, %v778
  %780 = vmatmul.bf16.gmra.mxu0 %v547
  %v781 = vpop.f32.mrf.mxu0
  %v782 = vadd.f32 0.0, %v781
  %v783 = vpop.f32.mrf.mxu0
  %v784 = vadd.f32 0.0, %v783
  %785 = vmatmul.bf16.gmra.mxu0 %v550
  %v786 = vpop.f32.mrf.mxu0
  %v787 = vadd.f32 0.0, %v786
  %v788 = vpop.f32.mrf.mxu0
  %v789 = vadd.f32 0.0, %v788
  %790 = vmatmul.bf16.gmra.mxu0 %v553
  %v791 = vpop.f32.mrf.mxu0
  %v792 = vadd.f32 0.0, %v791
  %v793 = vpop.f32.mrf.mxu0
  %v794 = vadd.f32 0.0, %v793
  %795 = vdwg.mxu0
  %796 = vmatpush.bf16.msra.mxu0 %v560
  %797 = vmatpush.bf16.msra.mxu0 %v402
  %798 = vmatpush.bf16.msra.mxu0 %v400
  %799 = vmatpush.bf16.msra.mxu0 %v398
  %800 = vmatpush.bf16.msra.mxu0 %v396
  %801 = vmatpush.bf16.msra.mxu0 %v394
  %802 = vmatpush.bf16.msra.mxu0 %v392
  %803 = vmatpush.bf16.msra.mxu0 %v390
  %804 = vmatmul.bf16.gmra.mxu0 %v421
  %v805 = vpop.f32.mrf.mxu0
  %v806 = vadd.f32 0.0, %v805
  %v807 = vpop.f32.mrf.mxu0
  %v808 = vadd.f32 0.0, %v807
  %809 = vmatmul.bf16.gmra.mxu0 %v424
  %v810 = vpop.f32.mrf.mxu0
  %v811 = vadd.f32 0.0, %v810
  %v812 = vpop.f32.mrf.mxu0
  %v813 = vadd.f32 0.0, %v812
  %814 = vmatmul.bf16.gmra.mxu0 %v427
  %v815 = vpop.f32.mrf.mxu0
  %v816 = vadd.f32 0.0, %v815
  %v817 = vpop.f32.mrf.mxu0
  %v818 = vadd.f32 0.0, %v817
  %819 = vmatmul.bf16.gmra.mxu0 %v430
  %v820 = vpop.f32.mrf.mxu0
  %v821 = vadd.f32 0.0, %v820
  %v822 = vpop.f32.mrf.mxu0
  %v823 = vadd.f32 0.0, %v822
  %824 = vmatmul.bf16.gmra.mxu0 %v433
  %v825 = vpop.f32.mrf.mxu0
  %v826 = vadd.f32 0.0, %v825
  %v827 = vpop.f32.mrf.mxu0
  %v828 = vadd.f32 0.0, %v827
  %829 = vmatmul.bf16.gmra.mxu0 %v436
  %v830 = vpop.f32.mrf.mxu0
  %v831 = vadd.f32 0.0, %v830
  %v832 = vpop.f32.mrf.mxu0
  %v833 = vadd.f32 0.0, %v832
  %834 = vmatmul.bf16.gmra.mxu0 %v439
  %v835 = vpop.f32.mrf.mxu0
  %v836 = vadd.f32 0.0, %v835
  %v837 = vpop.f32.mrf.mxu0
  %v838 = vadd.f32 0.0, %v837
  %839 = vmatmul.bf16.gmra.mxu0 %v442
  %v840 = vpop.f32.mrf.mxu0
  %v841 = vadd.f32 0.0, %v840
  %v842 = vpop.f32.mrf.mxu0
  %v843 = vadd.f32 0.0, %v842
  %844 = vmatmul.bf16.gmra.mxu0 %v445
  %v845 = vpop.f32.mrf.mxu0
  %v846 = vadd.f32 0.0, %v845
  %v847 = vpop.f32.mrf.mxu0
  %v848 = vadd.f32 0.0, %v847
  %849 = vmatmul.bf16.gmra.mxu0 %v448
  %v850 = vpop.f32.mrf.mxu0
  %v851 = vadd.f32 0.0, %v850
  %v852 = vpop.f32.mrf.mxu0
  %v853 = vadd.f32 0.0, %v852
  %854 = vmatmul.bf16.gmra.mxu0 %v451
  %v855 = vpop.f32.mrf.mxu0
  %v856 = vadd.f32 0.0, %v855
  %v857 = vpop.f32.mrf.mxu0
  %v858 = vadd.f32 0.0, %v857
  %859 = vmatmul.bf16.gmra.mxu0 %v454
  %v860 = vpop.f32.mrf.mxu0
  %v861 = vadd.f32 0.0, %v860
  %v862 = vpop.f32.mrf.mxu0
  %v863 = vadd.f32 0.0, %v862
  %864 = vmatmul.bf16.gmra.mxu0 %v457
  %v865 = vpop.f32.mrf.mxu0
  %v866 = vadd.f32 0.0, %v865
  %v867 = vpop.f32.mrf.mxu0
  %v868 = vadd.f32 0.0, %v867
  %869 = vmatmul.bf16.gmra.mxu0 %v460
  %v870 = vpop.f32.mrf.mxu0
  %v871 = vadd.f32 0.0, %v870
  %v872 = vpop.f32.mrf.mxu0
  %v873 = vadd.f32 0.0, %v872
  %874 = vmatmul.bf16.gmra.mxu0 %v463
  %v875 = vpop.f32.mrf.mxu0
  %v876 = vadd.f32 0.0, %v875
  %v877 = vpop.f32.mrf.mxu0
  %v878 = vadd.f32 0.0, %v877
  %879 = vmatmul.bf16.gmra.mxu0 %v466
  %v880 = vpop.f32.mrf.mxu0
  %v881 = vadd.f32 0.0, %v880
  %v882 = vpop.f32.mrf.mxu0
  %v883 = vadd.f32 0.0, %v882
  %884 = vmatmul.bf16.gmra.mxu0 %v469
  %v885 = vpop.f32.mrf.mxu0
  %v886 = vadd.f32 0.0, %v885
  %v887 = vpop.f32.mrf.mxu0
  %v888 = vadd.f32 0.0, %v887
  %889 = vmatmul.bf16.gmra.mxu0 %v472
  %v890 = vpop.f32.mrf.mxu0
  %v891 = vadd.f32 0.0, %v890
  %v892 = vpop.f32.mrf.mxu0
  %v893 = vadd.f32 0.0, %v892
  %894 = vmatmul.bf16.gmra.mxu0 %v475
  %v895 = vpop.f32.mrf.mxu0
  %v896 = vadd.f32 0.0, %v895
  %v897 = vpop.f32.mrf.mxu0
  %v898 = vadd.f32 0.0, %v897
  %899 = vmatmul.bf16.gmra.mxu0 %v478
  %v900 = vpop.f32.mrf.mxu0
  %v901 = vadd.f32 0.0, %v900
  %v902 = vpop.f32.mrf.mxu0
  %v903 = vadd.f32 0.0, %v902
  %904 = vmatmul.bf16.gmra.mxu0 %v481
  %v905 = vpop.f32.mrf.mxu0
  %v906 = vadd.f32 0.0, %v905
  %v907 = vpop.f32.mrf.mxu0
  %v908 = vadd.f32 0.0, %v907
  %909 = vmatmul.bf16.gmra.mxu0 %v484
  %v910 = vpop.f32.mrf.mxu0
  %v911 = vadd.f32 0.0, %v910
  %v912 = vpop.f32.mrf.mxu0
  %v913 = vadd.f32 0.0, %v912
  %914 = vmatmul.bf16.gmra.mxu0 %v487
  %v915 = vpop.f32.mrf.mxu0
  %v916 = vadd.f32 0.0, %v915
  %v917 = vpop.f32.mrf.mxu0
  %v918 = vadd.f32 0.0, %v917
  %919 = vmatmul.bf16.gmra.mxu0 %v490
  %v920 = vpop.f32.mrf.mxu0
  %v921 = vadd.f32 0.0, %v920
  %v922 = vpop.f32.mrf.mxu0
  %v923 = vadd.f32 0.0, %v922
  %924 = vmatmul.bf16.gmra.mxu0 %v493
  %v925 = vpop.f32.mrf.mxu0
  %v926 = vadd.f32 0.0, %v925
  %v927 = vpop.f32.mrf.mxu0
  %v928 = vadd.f32 0.0, %v927
  %929 = vmatmul.bf16.gmra.mxu0 %v496
  %v930 = vpop.f32.mrf.mxu0
  %v931 = vadd.f32 0.0, %v930
  %v932 = vpop.f32.mrf.mxu0
  %v933 = vadd.f32 0.0, %v932
  %934 = vmatmul.bf16.gmra.mxu0 %v499
  %v935 = vpop.f32.mrf.mxu0
  %v936 = vadd.f32 0.0, %v935
  %v937 = vpop.f32.mrf.mxu0
  %v938 = vadd.f32 0.0, %v937
  %939 = vmatmul.bf16.gmra.mxu0 %v502
  %v940 = vpop.f32.mrf.mxu0
  %v941 = vadd.f32 0.0, %v940
  %v942 = vpop.f32.mrf.mxu0
  %v943 = vadd.f32 0.0, %v942
  %944 = vmatmul.bf16.gmra.mxu0 %v505
  %v945 = vpop.f32.mrf.mxu0
  %v946 = vadd.f32 0.0, %v945
  %v947 = vpop.f32.mrf.mxu0
  %v948 = vadd.f32 0.0, %v947
  %949 = vmatmul.bf16.gmra.mxu0 %v508
  %v950 = vpop.f32.mrf.mxu0
  %v951 = vadd.f32 0.0, %v950
  %v952 = vpop.f32.mrf.mxu0
  %v953 = vadd.f32 0.0, %v952
  %954 = vmatmul.bf16.gmra.mxu0 %v511
  %v955 = vpop.f32.mrf.mxu0
  %v956 = vadd.f32 0.0, %v955
  %v957 = vpop.f32.mrf.mxu0
  %v958 = vadd.f32 0.0, %v957
  %959 = vmatmul.bf16.gmra.mxu0 %v514
  %v960 = vpop.f32.mrf.mxu0
  %v961 = vadd.f32 0.0, %v960
  %v962 = vpop.f32.mrf.mxu0
  %v963 = vadd.f32 0.0, %v962
  %964 = vmatmul.bf16.gmra.mxu0 %v517
  %v965 = vpop.f32.mrf.mxu0
  %v966 = vadd.f32 0.0, %v965
  %v967 = vpop.f32.mrf.mxu0
  %v968 = vadd.f32 0.0, %v967
  %969 = vmatmul.bf16.gmra.mxu0 %v520
  %v970 = vpop.f32.mrf.mxu0
  %v971 = vadd.f32 0.0, %v970
  %v972 = vpop.f32.mrf.mxu0
  %v973 = vadd.f32 0.0, %v972
  %974 = vmatmul.bf16.gmra.mxu0 %v523
  %v975 = vpop.f32.mrf.mxu0
  %v976 = vadd.f32 0.0, %v975
  %v977 = vpop.f32.mrf.mxu0
  %v978 = vadd.f32 0.0, %v977
  %979 = vmatmul.bf16.gmra.mxu0 %v526
  %v980 = vpop.f32.mrf.mxu0
  %v981 = vadd.f32 0.0, %v980
  %v982 = vpop.f32.mrf.mxu0
  %v983 = vadd.f32 0.0, %v982
  %984 = vmatmul.bf16.gmra.mxu0 %v529
  %v985 = vpop.f32.mrf.mxu0
  %v986 = vadd.f32 0.0, %v985
  %v987 = vpop.f32.mrf.mxu0
  %v988 = vadd.f32 0.0, %v987
  %989 = vmatmul.bf16.gmra.mxu0 %v532
  %v990 = vpop.f32.mrf.mxu0
  %v991 = vadd.f32 0.0, %v990
  %v992 = vpop.f32.mrf.mxu0
  %v993 = vadd.f32 0.0, %v992
  %994 = vmatmul.bf16.gmra.mxu0 %v535
  %v995 = vpop.f32.mrf.mxu0
  %v996 = vadd.f32 0.0, %v995
  %v997 = vpop.f32.mrf.mxu0
  %v998 = vadd.f32 0.0, %v997
  %999 = vmatmul.bf16.gmra.mxu0 %v538
  %v1000 = vpop.f32.mrf.mxu0
  %v1001 = vadd.f32 0.0, %v1000
  %v1002 = vpop.f32.mrf.mxu0
  %v1003 = vadd.f32 0.0, %v1002
  %1004 = vmatmul.bf16.gmra.mxu0 %v541
  %v1005 = vpop.f32.mrf.mxu0
  %v1006 = vadd.f32 0.0, %v1005
  %v1007 = vpop.f32.mrf.mxu0
  %v1008 = vadd.f32 0.0, %v1007
  %1009 = vmatmul.bf16.gmra.mxu0 %v544
  %v1010 = vpop.f32.mrf.mxu0
  %v1011 = vadd.f32 0.0, %v1010
  %v1012 = vpop.f32.mrf.mxu0
  %v1013 = vadd.f32 0.0, %v1012
  %1014 = vmatmul.bf16.gmra.mxu0 %v547
  %v1015 = vpop.f32.mrf.mxu0
  %v1016 = vadd.f32 0.0, %v1015
  %v1017 = vpop.f32.mrf.mxu0
  %v1018 = vadd.f32 0.0, %v1017
  %1019 = vmatmul.bf16.gmra.mxu0 %v550
  %v1020 = vpop.f32.mrf.mxu0
  %v1021 = vadd.f32 0.0, %v1020
  %v1022 = vpop.f32.mrf.mxu0
  %v1023 = vadd.f32 0.0, %v1022
  %1024 = vmatmul.bf16.gmra.mxu0 %v553
  %v1025 = vpop.f32.mrf.mxu0
  %v1026 = vadd.f32 0.0, %v1025
  %v1027 = vpop.f32.mrf.mxu0
  %v1028 = vadd.f32 0.0, %v1027
  %1029 = vdwg.mxu0
  %vm1030 = vcmask 556032
  %v1031 = vsel %vm1030, %v806, 0.0
  %v1032 = vadd.f32 %v572, %v1031
  %1033 = vadd.xlane.f32.xlu0 %v1032
  %v1034 = vpop.xlane.xlu0 %1033
  %v1035 = vsel %vm1030, %v808, 0.0
  %v1036 = vadd.f32 %v574, %v1035
  %1037 = vadd.xlane.f32.xlu0 %v1036
  %v1038 = vpop.xlane.xlu0 %1037
  %v1039 = vsel %vm1030, %v811, 0.0
  %v1040 = vadd.f32 %v577, %v1039
  %1041 = vadd.xlane.f32.xlu0 %v1040
  %v1042 = vpop.xlane.xlu0 %1041
  %v1043 = vsel %vm1030, %v813, 0.0
  %v1044 = vadd.f32 %v579, %v1043
  %1045 = vadd.xlane.f32.xlu0 %v1044
  %v1046 = vpop.xlane.xlu0 %1045
  %v1047 = vsel %vm1030, %v816, 0.0
  %v1048 = vadd.f32 %v582, %v1047
  %1049 = vadd.xlane.f32.xlu0 %v1048
  %v1050 = vpop.xlane.xlu0 %1049
  %v1051 = vsel %vm1030, %v818, 0.0
  %v1052 = vadd.f32 %v584, %v1051
  %1053 = vadd.xlane.f32.xlu0 %v1052
  %v1054 = vpop.xlane.xlu0 %1053
  %v1055 = vsel %vm1030, %v821, 0.0
  %v1056 = vadd.f32 %v587, %v1055
  %1057 = vadd.xlane.f32.xlu0 %v1056
  %v1058 = vpop.xlane.xlu0 %1057
  %v1059 = vsel %vm1030, %v823, 0.0
  %v1060 = vadd.f32 %v589, %v1059
  %1061 = vadd.xlane.f32.xlu0 %v1060
  %v1062 = vpop.xlane.xlu0 %1061
  %v1063 = vsel %vm1030, %v826, 0.0
  %v1064 = vadd.f32 %v592, %v1063
  %1065 = vadd.xlane.f32.xlu0 %v1064
  %v1066 = vpop.xlane.xlu0 %1065
  %v1067 = vsel %vm1030, %v828, 0.0
  %v1068 = vadd.f32 %v594, %v1067
  %1069 = vadd.xlane.f32.xlu0 %v1068
  %v1070 = vpop.xlane.xlu0 %1069
  %v1071 = vsel %vm1030, %v831, 0.0
  %v1072 = vadd.f32 %v597, %v1071
  %1073 = vadd.xlane.f32.xlu0 %v1072
  %v1074 = vpop.xlane.xlu0 %1073
  %v1075 = vsel %vm1030, %v833, 0.0
  %v1076 = vadd.f32 %v599, %v1075
  %1077 = vadd.xlane.f32.xlu0 %v1076
  %v1078 = vpop.xlane.xlu0 %1077
  %v1079 = vsel %vm1030, %v836, 0.0
  %v1080 = vadd.f32 %v602, %v1079
  %1081 = vadd.xlane.f32.xlu0 %v1080
  %v1082 = vpop.xlane.xlu0 %1081
  %v1083 = vsel %vm1030, %v838, 0.0
  %v1084 = vadd.f32 %v604, %v1083
  %1085 = vadd.xlane.f32.xlu0 %v1084
  %v1086 = vpop.xlane.xlu0 %1085
  %v1087 = vsel %vm1030, %v841, 0.0
  %v1088 = vadd.f32 %v607, %v1087
  %1089 = vadd.xlane.f32.xlu0 %v1088
  %v1090 = vpop.xlane.xlu0 %1089
  %v1091 = vsel %vm1030, %v843, 0.0
  %v1092 = vadd.f32 %v609, %v1091
  %1093 = vadd.xlane.f32.xlu0 %v1092
  %v1094 = vpop.xlane.xlu0 %1093
  %v1095 = vsel %vm1030, %v846, 0.0
  %v1096 = vadd.f32 %v612, %v1095
  %1097 = vadd.xlane.f32.xlu0 %v1096
  %v1098 = vpop.xlane.xlu0 %1097
  %v1099 = vsel %vm1030, %v848, 0.0
  %v1100 = vadd.f32 %v614, %v1099
  %1101 = vadd.xlane.f32.xlu0 %v1100
  %v1102 = vpop.xlane.xlu0 %1101
  %v1103 = vsel %vm1030, %v851, 0.0
  %v1104 = vadd.f32 %v617, %v1103
  %1105 = vadd.xlane.f32.xlu0 %v1104
  %v1106 = vpop.xlane.xlu0 %1105
  %v1107 = vsel %vm1030, %v853, 0.0
  %v1108 = vadd.f32 %v619, %v1107
  %1109 = vadd.xlane.f32.xlu0 %v1108
  %v1110 = vpop.xlane.xlu0 %1109
  %v1111 = vsel %vm1030, %v856, 0.0
  %v1112 = vadd.f32 %v622, %v1111
  %1113 = vadd.xlane.f32.xlu0 %v1112
  %v1114 = vpop.xlane.xlu0 %1113
  %v1115 = vsel %vm1030, %v858, 0.0
  %v1116 = vadd.f32 %v624, %v1115
  %1117 = vadd.xlane.f32.xlu0 %v1116
  %v1118 = vpop.xlane.xlu0 %1117
  %v1119 = vsel %vm1030, %v861, 0.0
  %v1120 = vadd.f32 %v627, %v1119
  %1121 = vadd.xlane.f32.xlu0 %v1120
  %v1122 = vpop.xlane.xlu0 %1121
  %v1123 = vsel %vm1030, %v863, 0.0
  %v1124 = vadd.f32 %v629, %v1123
  %1125 = vadd.xlane.f32.xlu0 %v1124
  %v1126 = vpop.xlane.xlu0 %1125
  %v1127 = vsel %vm1030, %v866, 0.0
  %v1128 = vadd.f32 %v632, %v1127
  %1129 = vadd.xlane.f32.xlu0 %v1128
  %v1130 = vpop.xlane.xlu0 %1129
  %v1131 = vsel %vm1030, %v868, 0.0
  %v1132 = vadd.f32 %v634, %v1131
  %1133 = vadd.xlane.f32.xlu0 %v1132
  %v1134 = vpop.xlane.xlu0 %1133
  %v1135 = vsel %vm1030, %v871, 0.0
  %v1136 = vadd.f32 %v637, %v1135
  %1137 = vadd.xlane.f32.xlu0 %v1136
  %v1138 = vpop.xlane.xlu0 %1137
  %v1139 = vsel %vm1030, %v873, 0.0
  %v1140 = vadd.f32 %v639, %v1139
  %1141 = vadd.xlane.f32.xlu0 %v1140
  %v1142 = vpop.xlane.xlu0 %1141
  %v1143 = vsel %vm1030, %v876, 0.0
  %v1144 = vadd.f32 %v642, %v1143
  %1145 = vadd.xlane.f32.xlu0 %v1144
  %v1146 = vpop.xlane.xlu0 %1145
  %v1147 = vsel %vm1030, %v878, 0.0
  %v1148 = vadd.f32 %v644, %v1147
  %1149 = vadd.xlane.f32.xlu0 %v1148
  %v1150 = vpop.xlane.xlu0 %1149
  %v1151 = vsel %vm1030, %v881, 0.0
  %v1152 = vadd.f32 %v647, %v1151
  %1153 = vadd.xlane.f32.xlu0 %v1152
  %v1154 = vpop.xlane.xlu0 %1153
  %v1155 = vsel %vm1030, %v883, 0.0
  %v1156 = vadd.f32 %v649, %v1155
  %1157 = vadd.xlane.f32.xlu0 %v1156
  %v1158 = vpop.xlane.xlu0 %1157
  %v1159 = vsel %vm1030, %v886, 0.0
  %v1160 = vadd.f32 %v652, %v1159
  %1161 = vadd.xlane.f32.xlu0 %v1160
  %v1162 = vpop.xlane.xlu0 %1161
  %v1163 = vsel %vm1030, %v888, 0.0
  %v1164 = vadd.f32 %v654, %v1163
  %1165 = vadd.xlane.f32.xlu0 %v1164
  %v1166 = vpop.xlane.xlu0 %1165
  %v1167 = vsel %vm1030, %v891, 0.0
  %v1168 = vadd.f32 %v657, %v1167
  %1169 = vadd.xlane.f32.xlu0 %v1168
  %v1170 = vpop.xlane.xlu0 %1169
  %v1171 = vsel %vm1030, %v893, 0.0
  %v1172 = vadd.f32 %v659, %v1171
  %1173 = vadd.xlane.f32.xlu0 %v1172
  %v1174 = vpop.xlane.xlu0 %1173
  %v1175 = vsel %vm1030, %v896, 0.0
  %v1176 = vadd.f32 %v662, %v1175
  %1177 = vadd.xlane.f32.xlu0 %v1176
  %v1178 = vpop.xlane.xlu0 %1177
  %v1179 = vsel %vm1030, %v898, 0.0
  %v1180 = vadd.f32 %v664, %v1179
  %1181 = vadd.xlane.f32.xlu0 %v1180
  %v1182 = vpop.xlane.xlu0 %1181
  %v1183 = vsel %vm1030, %v901, 0.0
  %v1184 = vadd.f32 %v667, %v1183
  %1185 = vadd.xlane.f32.xlu0 %v1184
  %v1186 = vpop.xlane.xlu0 %1185
  %v1187 = vsel %vm1030, %v903, 0.0
  %v1188 = vadd.f32 %v669, %v1187
  %1189 = vadd.xlane.f32.xlu0 %v1188
  %v1190 = vpop.xlane.xlu0 %1189
  %v1191 = vsel %vm1030, %v906, 0.0
  %v1192 = vadd.f32 %v672, %v1191
  %1193 = vadd.xlane.f32.xlu0 %v1192
  %v1194 = vpop.xlane.xlu0 %1193
  %v1195 = vsel %vm1030, %v908, 0.0
  %v1196 = vadd.f32 %v674, %v1195
  %1197 = vadd.xlane.f32.xlu0 %v1196
  %v1198 = vpop.xlane.xlu0 %1197
  %v1199 = vsel %vm1030, %v911, 0.0
  %v1200 = vadd.f32 %v677, %v1199
  %1201 = vadd.xlane.f32.xlu0 %v1200
  %v1202 = vpop.xlane.xlu0 %1201
  %v1203 = vsel %vm1030, %v913, 0.0
  %v1204 = vadd.f32 %v679, %v1203
  %1205 = vadd.xlane.f32.xlu0 %v1204
  %v1206 = vpop.xlane.xlu0 %1205
  %v1207 = vsel %vm1030, %v916, 0.0
  %v1208 = vadd.f32 %v682, %v1207
  %1209 = vadd.xlane.f32.xlu0 %v1208
  %v1210 = vpop.xlane.xlu0 %1209
  %v1211 = vsel %vm1030, %v918, 0.0
  %v1212 = vadd.f32 %v684, %v1211
  %1213 = vadd.xlane.f32.xlu0 %v1212
  %v1214 = vpop.xlane.xlu0 %1213
  %v1215 = vsel %vm1030, %v921, 0.0
  %v1216 = vadd.f32 %v687, %v1215
  %1217 = vadd.xlane.f32.xlu0 %v1216
  %v1218 = vpop.xlane.xlu0 %1217
  %v1219 = vsel %vm1030, %v923, 0.0
  %v1220 = vadd.f32 %v689, %v1219
  %1221 = vadd.xlane.f32.xlu0 %v1220
  %v1222 = vpop.xlane.xlu0 %1221
  %v1223 = vsel %vm1030, %v926, 0.0
  %v1224 = vadd.f32 %v692, %v1223
  %1225 = vadd.xlane.f32.xlu0 %v1224
  %v1226 = vpop.xlane.xlu0 %1225
  %v1227 = vsel %vm1030, %v928, 0.0
  %v1228 = vadd.f32 %v694, %v1227
  %1229 = vadd.xlane.f32.xlu0 %v1228
  %v1230 = vpop.xlane.xlu0 %1229
  %v1231 = vsel %vm1030, %v931, 0.0
  %v1232 = vadd.f32 %v697, %v1231
  %1233 = vadd.xlane.f32.xlu0 %v1232
  %v1234 = vpop.xlane.xlu0 %1233
  %v1235 = vsel %vm1030, %v933, 0.0
  %v1236 = vadd.f32 %v699, %v1235
  %1237 = vadd.xlane.f32.xlu0 %v1236
  %v1238 = vpop.xlane.xlu0 %1237
  %v1239 = vsel %vm1030, %v936, 0.0
  %v1240 = vadd.f32 %v702, %v1239
  %1241 = vadd.xlane.f32.xlu0 %v1240
  %v1242 = vpop.xlane.xlu0 %1241
  %v1243 = vsel %vm1030, %v938, 0.0
  %v1244 = vadd.f32 %v704, %v1243
  %1245 = vadd.xlane.f32.xlu0 %v1244
  %v1246 = vpop.xlane.xlu0 %1245
  %v1247 = vsel %vm1030, %v941, 0.0
  %v1248 = vadd.f32 %v707, %v1247
  %1249 = vadd.xlane.f32.xlu0 %v1248
  %v1250 = vpop.xlane.xlu0 %1249
  %v1251 = vsel %vm1030, %v943, 0.0
  %v1252 = vadd.f32 %v709, %v1251
  %1253 = vadd.xlane.f32.xlu0 %v1252
  %v1254 = vpop.xlane.xlu0 %1253
  %v1255 = vsel %vm1030, %v946, 0.0
  %v1256 = vadd.f32 %v712, %v1255
  %1257 = vadd.xlane.f32.xlu0 %v1256
  %v1258 = vpop.xlane.xlu0 %1257
  %v1259 = vsel %vm1030, %v948, 0.0
  %v1260 = vadd.f32 %v714, %v1259
  %1261 = vadd.xlane.f32.xlu0 %v1260
  %v1262 = vpop.xlane.xlu0 %1261
  %v1263 = vsel %vm1030, %v951, 0.0
  %v1264 = vadd.f32 %v717, %v1263
  %1265 = vadd.xlane.f32.xlu0 %v1264
  %v1266 = vpop.xlane.xlu0 %1265
  %v1267 = vsel %vm1030, %v953, 0.0
  %v1268 = vadd.f32 %v719, %v1267
  %1269 = vadd.xlane.f32.xlu0 %v1268
  %v1270 = vpop.xlane.xlu0 %1269
  %v1271 = vsel %vm1030, %v956, 0.0
  %v1272 = vadd.f32 %v722, %v1271
  %1273 = vadd.xlane.f32.xlu0 %v1272
  %v1274 = vpop.xlane.xlu0 %1273
  %v1275 = vsel %vm1030, %v958, 0.0
  %v1276 = vadd.f32 %v724, %v1275
  %1277 = vadd.xlane.f32.xlu0 %v1276
  %v1278 = vpop.xlane.xlu0 %1277
  %v1279 = vsel %vm1030, %v961, 0.0
  %v1280 = vadd.f32 %v727, %v1279
  %1281 = vadd.xlane.f32.xlu0 %v1280
  %v1282 = vpop.xlane.xlu0 %1281
  %v1283 = vsel %vm1030, %v963, 0.0
  %v1284 = vadd.f32 %v729, %v1283
  %1285 = vadd.xlane.f32.xlu0 %v1284
  %v1286 = vpop.xlane.xlu0 %1285
  %v1287 = vsel %vm1030, %v966, 0.0
  %v1288 = vadd.f32 %v732, %v1287
  %1289 = vadd.xlane.f32.xlu0 %v1288
  %v1290 = vpop.xlane.xlu0 %1289
  %v1291 = vsel %vm1030, %v968, 0.0
  %v1292 = vadd.f32 %v734, %v1291
  %1293 = vadd.xlane.f32.xlu0 %v1292
  %v1294 = vpop.xlane.xlu0 %1293
  %v1295 = vsel %vm1030, %v971, 0.0
  %v1296 = vadd.f32 %v737, %v1295
  %1297 = vadd.xlane.f32.xlu0 %v1296
  %v1298 = vpop.xlane.xlu0 %1297
  %v1299 = vsel %vm1030, %v973, 0.0
  %v1300 = vadd.f32 %v739, %v1299
  %1301 = vadd.xlane.f32.xlu0 %v1300
  %v1302 = vpop.xlane.xlu0 %1301
  %v1303 = vsel %vm1030, %v976, 0.0
  %v1304 = vadd.f32 %v742, %v1303
  %1305 = vadd.xlane.f32.xlu0 %v1304
  %v1306 = vpop.xlane.xlu0 %1305
  %v1307 = vsel %vm1030, %v978, 0.0
  %v1308 = vadd.f32 %v744, %v1307
  %1309 = vadd.xlane.f32.xlu0 %v1308
  %v1310 = vpop.xlane.xlu0 %1309
  %v1311 = vsel %vm1030, %v981, 0.0
  %v1312 = vadd.f32 %v747, %v1311
  %1313 = vadd.xlane.f32.xlu0 %v1312
  %v1314 = vpop.xlane.xlu0 %1313
  %v1315 = vsel %vm1030, %v983, 0.0
  %v1316 = vadd.f32 %v749, %v1315
  %1317 = vadd.xlane.f32.xlu0 %v1316
  %v1318 = vpop.xlane.xlu0 %1317
  %v1319 = vsel %vm1030, %v986, 0.0
  %v1320 = vadd.f32 %v752, %v1319
  %1321 = vadd.xlane.f32.xlu0 %v1320
  %v1322 = vpop.xlane.xlu0 %1321
  %v1323 = vsel %vm1030, %v988, 0.0
  %v1324 = vadd.f32 %v754, %v1323
  %1325 = vadd.xlane.f32.xlu0 %v1324
  %v1326 = vpop.xlane.xlu0 %1325
  %v1327 = vsel %vm1030, %v991, 0.0
  %v1328 = vadd.f32 %v757, %v1327
  %1329 = vadd.xlane.f32.xlu0 %v1328
  %v1330 = vpop.xlane.xlu0 %1329
  %v1331 = vsel %vm1030, %v993, 0.0
  %v1332 = vadd.f32 %v759, %v1331
  %1333 = vadd.xlane.f32.xlu0 %v1332
  %v1334 = vpop.xlane.xlu0 %1333
  %v1335 = vsel %vm1030, %v996, 0.0
  %v1336 = vadd.f32 %v762, %v1335
  %1337 = vadd.xlane.f32.xlu0 %v1336
  %v1338 = vpop.xlane.xlu0 %1337
  %v1339 = vsel %vm1030, %v998, 0.0
  %v1340 = vadd.f32 %v764, %v1339
  %1341 = vadd.xlane.f32.xlu0 %v1340
  %v1342 = vpop.xlane.xlu0 %1341
  %v1343 = vsel %vm1030, %v1001, 0.0
  %v1344 = vadd.f32 %v767, %v1343
  %1345 = vadd.xlane.f32.xlu0 %v1344
  %v1346 = vpop.xlane.xlu0 %1345
  %v1347 = vsel %vm1030, %v1003, 0.0
  %v1348 = vadd.f32 %v769, %v1347
  %1349 = vadd.xlane.f32.xlu0 %v1348
  %v1350 = vpop.xlane.xlu0 %1349
  %v1351 = vsel %vm1030, %v1006, 0.0
  %v1352 = vadd.f32 %v772, %v1351
  %1353 = vadd.xlane.f32.xlu0 %v1352
  %v1354 = vpop.xlane.xlu0 %1353
  %v1355 = vsel %vm1030, %v1008, 0.0
  %v1356 = vadd.f32 %v774, %v1355
  %1357 = vadd.xlane.f32.xlu0 %v1356
  %v1358 = vpop.xlane.xlu0 %1357
  %v1359 = vsel %vm1030, %v1011, 0.0
  %v1360 = vadd.f32 %v777, %v1359
  %1361 = vadd.xlane.f32.xlu0 %v1360
  %v1362 = vpop.xlane.xlu0 %1361
  %v1363 = vsel %vm1030, %v1013, 0.0
  %v1364 = vadd.f32 %v779, %v1363
  %1365 = vadd.xlane.f32.xlu0 %v1364
  %v1366 = vpop.xlane.xlu0 %1365
  %v1367 = vsel %vm1030, %v1016, 0.0
  %v1368 = vadd.f32 %v782, %v1367
  %1369 = vadd.xlane.f32.xlu0 %v1368
  %v1370 = vpop.xlane.xlu0 %1369
  %v1371 = vsel %vm1030, %v1018, 0.0
  %v1372 = vadd.f32 %v784, %v1371
  %1373 = vadd.xlane.f32.xlu0 %v1372
  %v1374 = vpop.xlane.xlu0 %1373
  %v1375 = vsel %vm1030, %v1021, 0.0
  %v1376 = vadd.f32 %v787, %v1375
  %1377 = vadd.xlane.f32.xlu0 %v1376
  %v1378 = vpop.xlane.xlu0 %1377
  %v1379 = vsel %vm1030, %v1023, 0.0
  %v1380 = vadd.f32 %v789, %v1379
  %1381 = vadd.xlane.f32.xlu0 %v1380
  %v1382 = vpop.xlane.xlu0 %1381
  %v1383 = vsel %vm1030, %v1026, 0.0
  %v1384 = vadd.f32 %v792, %v1383
  %1385 = vadd.xlane.f32.xlu0 %v1384
  %v1386 = vpop.xlane.xlu0 %1385
  %v1387 = vsel %vm1030, %v1028, 0.0
  %v1388 = vadd.f32 %v794, %v1387
  %1389 = vadd.xlane.f32.xlu0 %v1388
  %v1390 = vpop.xlane.xlu0 %1389
  %v1391 = vmul.f32 %v572, %v572
  %v1392 = vmul.f32 %v806, %v806
  %v1393 = vmul.f32 %v574, %v574
  %v1394 = vmul.f32 %v808, %v808
  %v1395 = vmul.f32 %v577, %v577
  %v1396 = vmul.f32 %v811, %v811
  %v1397 = vmul.f32 %v579, %v579
  %v1398 = vmul.f32 %v813, %v813
  %v1399 = vmul.f32 %v582, %v582
  %v1400 = vmul.f32 %v816, %v816
  %v1401 = vmul.f32 %v584, %v584
  %v1402 = vmul.f32 %v818, %v818
  %v1403 = vmul.f32 %v587, %v587
  %v1404 = vmul.f32 %v821, %v821
  %v1405 = vmul.f32 %v589, %v589
  %v1406 = vmul.f32 %v823, %v823
  %v1407 = vmul.f32 %v592, %v592
  %v1408 = vmul.f32 %v826, %v826
  %v1409 = vmul.f32 %v594, %v594
  %v1410 = vmul.f32 %v828, %v828
  %v1411 = vmul.f32 %v597, %v597
  %v1412 = vmul.f32 %v831, %v831
  %v1413 = vmul.f32 %v599, %v599
  %v1414 = vmul.f32 %v833, %v833
  %v1415 = vmul.f32 %v602, %v602
  %v1416 = vmul.f32 %v836, %v836
  %v1417 = vmul.f32 %v604, %v604
  %v1418 = vmul.f32 %v838, %v838
  %v1419 = vmul.f32 %v607, %v607
  %v1420 = vmul.f32 %v841, %v841
  %v1421 = vmul.f32 %v609, %v609
  %v1422 = vmul.f32 %v843, %v843
  %v1423 = vmul.f32 %v612, %v612
  %v1424 = vmul.f32 %v846, %v846
  %v1425 = vmul.f32 %v614, %v614
  %v1426 = vmul.f32 %v848, %v848
  %v1427 = vmul.f32 %v617, %v617
  %v1428 = vmul.f32 %v851, %v851
  %v1429 = vmul.f32 %v619, %v619
  %v1430 = vmul.f32 %v853, %v853
  %v1431 = vmul.f32 %v622, %v622
  %v1432 = vmul.f32 %v856, %v856
  %v1433 = vmul.f32 %v624, %v624
  %v1434 = vmul.f32 %v858, %v858
  %v1435 = vmul.f32 %v627, %v627
  %v1436 = vmul.f32 %v861, %v861
  %v1437 = vmul.f32 %v629, %v629
  %v1438 = vmul.f32 %v863, %v863
  %v1439 = vmul.f32 %v632, %v632
  %v1440 = vmul.f32 %v866, %v866
  %v1441 = vmul.f32 %v634, %v634
  %v1442 = vmul.f32 %v868, %v868
  %v1443 = vmul.f32 %v637, %v637
  %v1444 = vmul.f32 %v871, %v871
  %v1445 = vmul.f32 %v639, %v639
  %v1446 = vmul.f32 %v873, %v873
  %v1447 = vmul.f32 %v642, %v642
  %v1448 = vmul.f32 %v876, %v876
  %v1449 = vmul.f32 %v644, %v644
  %v1450 = vmul.f32 %v878, %v878
  %v1451 = vmul.f32 %v647, %v647
  %v1452 = vmul.f32 %v881, %v881
  %v1453 = vmul.f32 %v649, %v649
  %v1454 = vmul.f32 %v883, %v883
  %v1455 = vmul.f32 %v652, %v652
  %v1456 = vmul.f32 %v886, %v886
  %v1457 = vmul.f32 %v654, %v654
  %v1458 = vmul.f32 %v888, %v888
  %v1459 = vmul.f32 %v657, %v657
  %v1460 = vmul.f32 %v891, %v891
  %v1461 = vmul.f32 %v659, %v659
  %v1462 = vmul.f32 %v893, %v893
  %v1463 = vmul.f32 %v662, %v662
  %v1464 = vmul.f32 %v896, %v896
  %v1465 = vmul.f32 %v664, %v664
  %v1466 = vmul.f32 %v898, %v898
  %v1467 = vmul.f32 %v667, %v667
  %v1468 = vmul.f32 %v901, %v901
  %v1469 = vmul.f32 %v669, %v669
  %v1470 = vmul.f32 %v903, %v903
  %v1471 = vmul.f32 %v672, %v672
  %v1472 = vmul.f32 %v906, %v906
  %v1473 = vmul.f32 %v674, %v674
  %v1474 = vmul.f32 %v908, %v908
  %v1475 = vmul.f32 %v677, %v677
  %v1476 = vmul.f32 %v911, %v911
  %v1477 = vmul.f32 %v679, %v679
  %v1478 = vmul.f32 %v913, %v913
  %v1479 = vmul.f32 %v682, %v682
  %v1480 = vmul.f32 %v916, %v916
  %v1481 = vmul.f32 %v684, %v684
  %v1482 = vmul.f32 %v918, %v918
  %v1483 = vmul.f32 %v687, %v687
  %v1484 = vmul.f32 %v921, %v921
  %v1485 = vmul.f32 %v689, %v689
  %v1486 = vmul.f32 %v923, %v923
  %v1487 = vmul.f32 %v692, %v692
  %v1488 = vmul.f32 %v926, %v926
  %v1489 = vmul.f32 %v694, %v694
  %v1490 = vmul.f32 %v928, %v928
  %v1491 = vmul.f32 %v697, %v697
  %v1492 = vmul.f32 %v931, %v931
  %v1493 = vmul.f32 %v699, %v699
  %v1494 = vmul.f32 %v933, %v933
  %v1495 = vmul.f32 %v702, %v702
  %v1496 = vmul.f32 %v936, %v936
  %v1497 = vmul.f32 %v704, %v704
  %v1498 = vmul.f32 %v938, %v938
  %v1499 = vmul.f32 %v707, %v707
  %v1500 = vmul.f32 %v941, %v941
  %v1501 = vmul.f32 %v709, %v709
  %v1502 = vmul.f32 %v943, %v943
  %v1503 = vmul.f32 %v712, %v712
  %v1504 = vmul.f32 %v946, %v946
  %v1505 = vmul.f32 %v714, %v714
  %v1506 = vmul.f32 %v948, %v948
  %v1507 = vmul.f32 %v717, %v717
  %v1508 = vmul.f32 %v951, %v951
  %v1509 = vmul.f32 %v719, %v719
  %v1510 = vmul.f32 %v953, %v953
  %v1511 = vmul.f32 %v722, %v722
  %v1512 = vmul.f32 %v956, %v956
  %v1513 = vmul.f32 %v724, %v724
  %v1514 = vmul.f32 %v958, %v958
  %v1515 = vmul.f32 %v727, %v727
  %v1516 = vmul.f32 %v961, %v961
  %v1517 = vmul.f32 %v729, %v729
  %v1518 = vmul.f32 %v963, %v963
  %v1519 = vmul.f32 %v732, %v732
  %v1520 = vmul.f32 %v966, %v966
  %v1521 = vmul.f32 %v734, %v734
  %v1522 = vmul.f32 %v968, %v968
  %v1523 = vmul.f32 %v737, %v737
  %v1524 = vmul.f32 %v971, %v971
  %v1525 = vmul.f32 %v739, %v739
  %v1526 = vmul.f32 %v973, %v973
  %v1527 = vmul.f32 %v742, %v742
  %v1528 = vmul.f32 %v976, %v976
  %v1529 = vmul.f32 %v744, %v744
  %v1530 = vmul.f32 %v978, %v978
  %v1531 = vmul.f32 %v747, %v747
  %v1532 = vmul.f32 %v981, %v981
  %v1533 = vmul.f32 %v749, %v749
  %v1534 = vmul.f32 %v983, %v983
  %v1535 = vmul.f32 %v752, %v752
  %v1536 = vmul.f32 %v986, %v986
  %v1537 = vmul.f32 %v754, %v754
  %v1538 = vmul.f32 %v988, %v988
  %v1539 = vmul.f32 %v757, %v757
  %v1540 = vmul.f32 %v991, %v991
  %v1541 = vmul.f32 %v759, %v759
  %v1542 = vmul.f32 %v993, %v993
  %v1543 = vmul.f32 %v762, %v762
  %v1544 = vmul.f32 %v996, %v996
  %v1545 = vmul.f32 %v764, %v764
  %v1546 = vmul.f32 %v998, %v998
  %v1547 = vmul.f32 %v767, %v767
  %v1548 = vmul.f32 %v1001, %v1001
  %v1549 = vmul.f32 %v769, %v769
  %v1550 = vmul.f32 %v1003, %v1003
  %v1551 = vmul.f32 %v772, %v772
  %v1552 = vmul.f32 %v1006, %v1006
  %v1553 = vmul.f32 %v774, %v774
  %v1554 = vmul.f32 %v1008, %v1008
  %v1555 = vmul.f32 %v777, %v777
  %v1556 = vmul.f32 %v1011, %v1011
  %v1557 = vmul.f32 %v779, %v779
  %v1558 = vmul.f32 %v1013, %v1013
  %v1559 = vmul.f32 %v782, %v782
  %v1560 = vmul.f32 %v1016, %v1016
  %v1561 = vmul.f32 %v784, %v784
  %v1562 = vmul.f32 %v1018, %v1018
  %v1563 = vmul.f32 %v787, %v787
  %v1564 = vmul.f32 %v1021, %v1021
  %v1565 = vmul.f32 %v789, %v789
  %v1566 = vmul.f32 %v1023, %v1023
  %v1567 = vmul.f32 %v792, %v792
  %v1568 = vmul.f32 %v1026, %v1026
  %v1569 = vmul.f32 %v794, %v794
  %v1570 = vmul.f32 %v1028, %v1028
  %v1571 = vsel %vm1030, %v1392, 0.0
  %v1572 = vadd.f32 %v1391, %v1571
  %1573 = vadd.xlane.f32.xlu0 %v1572
  %v1574 = vpop.xlane.xlu0 %1573
  %v1575 = vsel %vm1030, %v1394, 0.0
  %v1576 = vadd.f32 %v1393, %v1575
  %1577 = vadd.xlane.f32.xlu0 %v1576
  %v1578 = vpop.xlane.xlu0 %1577
  %v1579 = vsel %vm1030, %v1396, 0.0
  %v1580 = vadd.f32 %v1395, %v1579
  %1581 = vadd.xlane.f32.xlu0 %v1580
  %v1582 = vpop.xlane.xlu0 %1581
  %v1583 = vsel %vm1030, %v1398, 0.0
  %v1584 = vadd.f32 %v1397, %v1583
  %1585 = vadd.xlane.f32.xlu0 %v1584
  %v1586 = vpop.xlane.xlu0 %1585
  %v1587 = vsel %vm1030, %v1400, 0.0
  %v1588 = vadd.f32 %v1399, %v1587
  %1589 = vadd.xlane.f32.xlu0 %v1588
  %v1590 = vpop.xlane.xlu0 %1589
  %v1591 = vsel %vm1030, %v1402, 0.0
  %v1592 = vadd.f32 %v1401, %v1591
  %1593 = vadd.xlane.f32.xlu0 %v1592
  %v1594 = vpop.xlane.xlu0 %1593
  %v1595 = vsel %vm1030, %v1404, 0.0
  %v1596 = vadd.f32 %v1403, %v1595
  %1597 = vadd.xlane.f32.xlu0 %v1596
  %v1598 = vpop.xlane.xlu0 %1597
  %v1599 = vsel %vm1030, %v1406, 0.0
  %v1600 = vadd.f32 %v1405, %v1599
  %1601 = vadd.xlane.f32.xlu0 %v1600
  %v1602 = vpop.xlane.xlu0 %1601
  %v1603 = vsel %vm1030, %v1408, 0.0
  %v1604 = vadd.f32 %v1407, %v1603
  %1605 = vadd.xlane.f32.xlu0 %v1604
  %v1606 = vpop.xlane.xlu0 %1605
  %v1607 = vsel %vm1030, %v1410, 0.0
  %v1608 = vadd.f32 %v1409, %v1607
  %1609 = vadd.xlane.f32.xlu0 %v1608
  %v1610 = vpop.xlane.xlu0 %1609
  %v1611 = vsel %vm1030, %v1412, 0.0
  %v1612 = vadd.f32 %v1411, %v1611
  %1613 = vadd.xlane.f32.xlu0 %v1612
  %v1614 = vpop.xlane.xlu0 %1613
  %v1615 = vsel %vm1030, %v1414, 0.0
  %v1616 = vadd.f32 %v1413, %v1615
  %1617 = vadd.xlane.f32.xlu0 %v1616
  %v1618 = vpop.xlane.xlu0 %1617
  %v1619 = vsel %vm1030, %v1416, 0.0
  %v1620 = vadd.f32 %v1415, %v1619
  %1621 = vadd.xlane.f32.xlu0 %v1620
  %v1622 = vpop.xlane.xlu0 %1621
  %v1623 = vsel %vm1030, %v1418, 0.0
  %v1624 = vadd.f32 %v1417, %v1623
  %1625 = vadd.xlane.f32.xlu0 %v1624
  %v1626 = vpop.xlane.xlu0 %1625
  %v1627 = vsel %vm1030, %v1420, 0.0
  %v1628 = vadd.f32 %v1419, %v1627
  %1629 = vadd.xlane.f32.xlu0 %v1628
  %v1630 = vpop.xlane.xlu0 %1629
  %v1631 = vsel %vm1030, %v1422, 0.0
  %v1632 = vadd.f32 %v1421, %v1631
  %1633 = vadd.xlane.f32.xlu0 %v1632
  %v1634 = vpop.xlane.xlu0 %1633
  %v1635 = vsel %vm1030, %v1424, 0.0
  %v1636 = vadd.f32 %v1423, %v1635
  %1637 = vadd.xlane.f32.xlu0 %v1636
  %v1638 = vpop.xlane.xlu0 %1637
  %v1639 = vsel %vm1030, %v1426, 0.0
  %v1640 = vadd.f32 %v1425, %v1639
  %1641 = vadd.xlane.f32.xlu0 %v1640
  %v1642 = vpop.xlane.xlu0 %1641
  %v1643 = vsel %vm1030, %v1428, 0.0
  %v1644 = vadd.f32 %v1427, %v1643
  %1645 = vadd.xlane.f32.xlu0 %v1644
  %v1646 = vpop.xlane.xlu0 %1645
  %v1647 = vsel %vm1030, %v1430, 0.0
  %v1648 = vadd.f32 %v1429, %v1647
  %1649 = vadd.xlane.f32.xlu0 %v1648
  %v1650 = vpop.xlane.xlu0 %1649
  %v1651 = vsel %vm1030, %v1432, 0.0
  %v1652 = vadd.f32 %v1431, %v1651
  %1653 = vadd.xlane.f32.xlu0 %v1652
  %v1654 = vpop.xlane.xlu0 %1653
  %v1655 = vsel %vm1030, %v1434, 0.0
  %v1656 = vadd.f32 %v1433, %v1655
  %1657 = vadd.xlane.f32.xlu0 %v1656
  %v1658 = vpop.xlane.xlu0 %1657
  %v1659 = vsel %vm1030, %v1436, 0.0
  %v1660 = vadd.f32 %v1435, %v1659
  %1661 = vadd.xlane.f32.xlu0 %v1660
  %v1662 = vpop.xlane.xlu0 %1661
  %v1663 = vsel %vm1030, %v1438, 0.0
  %v1664 = vadd.f32 %v1437, %v1663
  %1665 = vadd.xlane.f32.xlu0 %v1664
  %v1666 = vpop.xlane.xlu0 %1665
  %v1667 = vsel %vm1030, %v1440, 0.0
  %v1668 = vadd.f32 %v1439, %v1667
  %1669 = vadd.xlane.f32.xlu0 %v1668
  %v1670 = vpop.xlane.xlu0 %1669
  %v1671 = vsel %vm1030, %v1442, 0.0
  %v1672 = vadd.f32 %v1441, %v1671
  %1673 = vadd.xlane.f32.xlu0 %v1672
  %v1674 = vpop.xlane.xlu0 %1673
  %v1675 = vsel %vm1030, %v1444, 0.0
  %v1676 = vadd.f32 %v1443, %v1675
  %1677 = vadd.xlane.f32.xlu0 %v1676
  %v1678 = vpop.xlane.xlu0 %1677
  %v1679 = vsel %vm1030, %v1446, 0.0
  %v1680 = vadd.f32 %v1445, %v1679
  %1681 = vadd.xlane.f32.xlu0 %v1680
  %v1682 = vpop.xlane.xlu0 %1681
  %v1683 = vsel %vm1030, %v1448, 0.0
  %v1684 = vadd.f32 %v1447, %v1683
  %1685 = vadd.xlane.f32.xlu0 %v1684
  %v1686 = vpop.xlane.xlu0 %1685
  %v1687 = vsel %vm1030, %v1450, 0.0
  %v1688 = vadd.f32 %v1449, %v1687
  %1689 = vadd.xlane.f32.xlu0 %v1688
  %v1690 = vpop.xlane.xlu0 %1689
  %v1691 = vsel %vm1030, %v1452, 0.0
  %v1692 = vadd.f32 %v1451, %v1691
  %1693 = vadd.xlane.f32.xlu0 %v1692
  %v1694 = vpop.xlane.xlu0 %1693
  %v1695 = vsel %vm1030, %v1454, 0.0
  %v1696 = vadd.f32 %v1453, %v1695
  %1697 = vadd.xlane.f32.xlu0 %v1696
  %v1698 = vpop.xlane.xlu0 %1697
  %v1699 = vsel %vm1030, %v1456, 0.0
  %v1700 = vadd.f32 %v1455, %v1699
  %1701 = vadd.xlane.f32.xlu0 %v1700
  %v1702 = vpop.xlane.xlu0 %1701
  %v1703 = vsel %vm1030, %v1458, 0.0
  %v1704 = vadd.f32 %v1457, %v1703
  %1705 = vadd.xlane.f32.xlu0 %v1704
  %v1706 = vpop.xlane.xlu0 %1705
  %v1707 = vsel %vm1030, %v1460, 0.0
  %v1708 = vadd.f32 %v1459, %v1707
  %1709 = vadd.xlane.f32.xlu0 %v1708
  %v1710 = vpop.xlane.xlu0 %1709
  %v1711 = vsel %vm1030, %v1462, 0.0
  %v1712 = vadd.f32 %v1461, %v1711
  %1713 = vadd.xlane.f32.xlu0 %v1712
  %v1714 = vpop.xlane.xlu0 %1713
  %v1715 = vsel %vm1030, %v1464, 0.0
  %v1716 = vadd.f32 %v1463, %v1715
  %1717 = vadd.xlane.f32.xlu0 %v1716
  %v1718 = vpop.xlane.xlu0 %1717
  %v1719 = vsel %vm1030, %v1466, 0.0
  %v1720 = vadd.f32 %v1465, %v1719
  %1721 = vadd.xlane.f32.xlu0 %v1720
  %v1722 = vpop.xlane.xlu0 %1721
  %v1723 = vsel %vm1030, %v1468, 0.0
  %v1724 = vadd.f32 %v1467, %v1723
  %1725 = vadd.xlane.f32.xlu0 %v1724
  %v1726 = vpop.xlane.xlu0 %1725
  %v1727 = vsel %vm1030, %v1470, 0.0
  %v1728 = vadd.f32 %v1469, %v1727
  %1729 = vadd.xlane.f32.xlu0 %v1728
  %v1730 = vpop.xlane.xlu0 %1729
  %v1731 = vsel %vm1030, %v1472, 0.0
  %v1732 = vadd.f32 %v1471, %v1731
  %1733 = vadd.xlane.f32.xlu0 %v1732
  %v1734 = vpop.xlane.xlu0 %1733
  %v1735 = vsel %vm1030, %v1474, 0.0
  %v1736 = vadd.f32 %v1473, %v1735
  %1737 = vadd.xlane.f32.xlu0 %v1736
  %v1738 = vpop.xlane.xlu0 %1737
  %v1739 = vsel %vm1030, %v1476, 0.0
  %v1740 = vadd.f32 %v1475, %v1739
  %1741 = vadd.xlane.f32.xlu0 %v1740
  %v1742 = vpop.xlane.xlu0 %1741
  %v1743 = vsel %vm1030, %v1478, 0.0
  %v1744 = vadd.f32 %v1477, %v1743
  %1745 = vadd.xlane.f32.xlu0 %v1744
  %v1746 = vpop.xlane.xlu0 %1745
  %v1747 = vsel %vm1030, %v1480, 0.0
  %v1748 = vadd.f32 %v1479, %v1747
  %1749 = vadd.xlane.f32.xlu0 %v1748
  %v1750 = vpop.xlane.xlu0 %1749
  %v1751 = vsel %vm1030, %v1482, 0.0
  %v1752 = vadd.f32 %v1481, %v1751
  %1753 = vadd.xlane.f32.xlu0 %v1752
  %v1754 = vpop.xlane.xlu0 %1753
  %v1755 = vsel %vm1030, %v1484, 0.0
  %v1756 = vadd.f32 %v1483, %v1755
  %1757 = vadd.xlane.f32.xlu0 %v1756
  %v1758 = vpop.xlane.xlu0 %1757
  %v1759 = vsel %vm1030, %v1486, 0.0
  %v1760 = vadd.f32 %v1485, %v1759
  %1761 = vadd.xlane.f32.xlu0 %v1760
  %v1762 = vpop.xlane.xlu0 %1761
  %v1763 = vsel %vm1030, %v1488, 0.0
  %v1764 = vadd.f32 %v1487, %v1763
  %1765 = vadd.xlane.f32.xlu0 %v1764
  %v1766 = vpop.xlane.xlu0 %1765
  %v1767 = vsel %vm1030, %v1490, 0.0
  %v1768 = vadd.f32 %v1489, %v1767
  %1769 = vadd.xlane.f32.xlu0 %v1768
  %v1770 = vpop.xlane.xlu0 %1769
  %v1771 = vsel %vm1030, %v1492, 0.0
  %v1772 = vadd.f32 %v1491, %v1771
  %1773 = vadd.xlane.f32.xlu0 %v1772
  %v1774 = vpop.xlane.xlu0 %1773
  %v1775 = vsel %vm1030, %v1494, 0.0
  %v1776 = vadd.f32 %v1493, %v1775
  %1777 = vadd.xlane.f32.xlu0 %v1776
  %v1778 = vpop.xlane.xlu0 %1777
  %v1779 = vsel %vm1030, %v1496, 0.0
  %v1780 = vadd.f32 %v1495, %v1779
  %1781 = vadd.xlane.f32.xlu0 %v1780
  %v1782 = vpop.xlane.xlu0 %1781
  %v1783 = vsel %vm1030, %v1498, 0.0
  %v1784 = vadd.f32 %v1497, %v1783
  %1785 = vadd.xlane.f32.xlu0 %v1784
  %v1786 = vpop.xlane.xlu0 %1785
  %v1787 = vsel %vm1030, %v1500, 0.0
  %v1788 = vadd.f32 %v1499, %v1787
  %1789 = vadd.xlane.f32.xlu0 %v1788
  %v1790 = vpop.xlane.xlu0 %1789
  %v1791 = vsel %vm1030, %v1502, 0.0
  %v1792 = vadd.f32 %v1501, %v1791
  %1793 = vadd.xlane.f32.xlu0 %v1792
  %v1794 = vpop.xlane.xlu0 %1793
  %v1795 = vsel %vm1030, %v1504, 0.0
  %v1796 = vadd.f32 %v1503, %v1795
  %1797 = vadd.xlane.f32.xlu0 %v1796
  %v1798 = vpop.xlane.xlu0 %1797
  %v1799 = vsel %vm1030, %v1506, 0.0
  %v1800 = vadd.f32 %v1505, %v1799
  %1801 = vadd.xlane.f32.xlu0 %v1800
  %v1802 = vpop.xlane.xlu0 %1801
  %v1803 = vsel %vm1030, %v1508, 0.0
  %v1804 = vadd.f32 %v1507, %v1803
  %1805 = vadd.xlane.f32.xlu0 %v1804
  %v1806 = vpop.xlane.xlu0 %1805
  %v1807 = vsel %vm1030, %v1510, 0.0
  %v1808 = vadd.f32 %v1509, %v1807
  %1809 = vadd.xlane.f32.xlu0 %v1808
  %v1810 = vpop.xlane.xlu0 %1809
  %v1811 = vsel %vm1030, %v1512, 0.0
  %v1812 = vadd.f32 %v1511, %v1811
  %1813 = vadd.xlane.f32.xlu0 %v1812
  %v1814 = vpop.xlane.xlu0 %1813
  %v1815 = vsel %vm1030, %v1514, 0.0
  %v1816 = vadd.f32 %v1513, %v1815
  %1817 = vadd.xlane.f32.xlu0 %v1816
  %v1818 = vpop.xlane.xlu0 %1817
  %v1819 = vsel %vm1030, %v1516, 0.0
  %v1820 = vadd.f32 %v1515, %v1819
  %1821 = vadd.xlane.f32.xlu0 %v1820
  %v1822 = vpop.xlane.xlu0 %1821
  %v1823 = vsel %vm1030, %v1518, 0.0
  %v1824 = vadd.f32 %v1517, %v1823
  %1825 = vadd.xlane.f32.xlu0 %v1824
  %v1826 = vpop.xlane.xlu0 %1825
  %v1827 = vsel %vm1030, %v1520, 0.0
  %v1828 = vadd.f32 %v1519, %v1827
  %1829 = vadd.xlane.f32.xlu0 %v1828
  %v1830 = vpop.xlane.xlu0 %1829
  %v1831 = vsel %vm1030, %v1522, 0.0
  %v1832 = vadd.f32 %v1521, %v1831
  %1833 = vadd.xlane.f32.xlu0 %v1832
  %v1834 = vpop.xlane.xlu0 %1833
  %v1835 = vsel %vm1030, %v1524, 0.0
  %v1836 = vadd.f32 %v1523, %v1835
  %1837 = vadd.xlane.f32.xlu0 %v1836
  %v1838 = vpop.xlane.xlu0 %1837
  %v1839 = vsel %vm1030, %v1526, 0.0
  %v1840 = vadd.f32 %v1525, %v1839
  %1841 = vadd.xlane.f32.xlu0 %v1840
  %v1842 = vpop.xlane.xlu0 %1841
  %v1843 = vsel %vm1030, %v1528, 0.0
  %v1844 = vadd.f32 %v1527, %v1843
  %1845 = vadd.xlane.f32.xlu0 %v1844
  %v1846 = vpop.xlane.xlu0 %1845
  %v1847 = vsel %vm1030, %v1530, 0.0
  %v1848 = vadd.f32 %v1529, %v1847
  %1849 = vadd.xlane.f32.xlu0 %v1848
  %v1850 = vpop.xlane.xlu0 %1849
  %v1851 = vsel %vm1030, %v1532, 0.0
  %v1852 = vadd.f32 %v1531, %v1851
  %1853 = vadd.xlane.f32.xlu0 %v1852
  %v1854 = vpop.xlane.xlu0 %1853
  %v1855 = vsel %vm1030, %v1534, 0.0
  %v1856 = vadd.f32 %v1533, %v1855
  %1857 = vadd.xlane.f32.xlu0 %v1856
  %v1858 = vpop.xlane.xlu0 %1857
  %v1859 = vsel %vm1030, %v1536, 0.0
  %v1860 = vadd.f32 %v1535, %v1859
  %1861 = vadd.xlane.f32.xlu0 %v1860
  %v1862 = vpop.xlane.xlu0 %1861
  %v1863 = vsel %vm1030, %v1538, 0.0
  %v1864 = vadd.f32 %v1537, %v1863
  %1865 = vadd.xlane.f32.xlu0 %v1864
  %v1866 = vpop.xlane.xlu0 %1865
  %v1867 = vsel %vm1030, %v1540, 0.0
  %v1868 = vadd.f32 %v1539, %v1867
  %1869 = vadd.xlane.f32.xlu0 %v1868
  %v1870 = vpop.xlane.xlu0 %1869
  %v1871 = vsel %vm1030, %v1542, 0.0
  %v1872 = vadd.f32 %v1541, %v1871
  %1873 = vadd.xlane.f32.xlu0 %v1872
  %v1874 = vpop.xlane.xlu0 %1873
  %v1875 = vsel %vm1030, %v1544, 0.0
  %v1876 = vadd.f32 %v1543, %v1875
  %1877 = vadd.xlane.f32.xlu0 %v1876
  %v1878 = vpop.xlane.xlu0 %1877
  %v1879 = vsel %vm1030, %v1546, 0.0
  %v1880 = vadd.f32 %v1545, %v1879
  %1881 = vadd.xlane.f32.xlu0 %v1880
  %v1882 = vpop.xlane.xlu0 %1881
  %v1883 = vsel %vm1030, %v1548, 0.0
  %v1884 = vadd.f32 %v1547, %v1883
  %1885 = vadd.xlane.f32.xlu0 %v1884
  %v1886 = vpop.xlane.xlu0 %1885
  %v1887 = vsel %vm1030, %v1550, 0.0
  %v1888 = vadd.f32 %v1549, %v1887
  %1889 = vadd.xlane.f32.xlu0 %v1888
  %v1890 = vpop.xlane.xlu0 %1889
  %v1891 = vsel %vm1030, %v1552, 0.0
  %v1892 = vadd.f32 %v1551, %v1891
  %1893 = vadd.xlane.f32.xlu0 %v1892
  %v1894 = vpop.xlane.xlu0 %1893
  %v1895 = vsel %vm1030, %v1554, 0.0
  %v1896 = vadd.f32 %v1553, %v1895
  %1897 = vadd.xlane.f32.xlu0 %v1896
  %v1898 = vpop.xlane.xlu0 %1897
  %v1899 = vsel %vm1030, %v1556, 0.0
  %v1900 = vadd.f32 %v1555, %v1899
  %1901 = vadd.xlane.f32.xlu0 %v1900
  %v1902 = vpop.xlane.xlu0 %1901
  %v1903 = vsel %vm1030, %v1558, 0.0
  %v1904 = vadd.f32 %v1557, %v1903
  %1905 = vadd.xlane.f32.xlu0 %v1904
  %v1906 = vpop.xlane.xlu0 %1905
  %v1907 = vsel %vm1030, %v1560, 0.0
  %v1908 = vadd.f32 %v1559, %v1907
  %1909 = vadd.xlane.f32.xlu0 %v1908
  %v1910 = vpop.xlane.xlu0 %1909
  %v1911 = vsel %vm1030, %v1562, 0.0
  %v1912 = vadd.f32 %v1561, %v1911
  %1913 = vadd.xlane.f32.xlu0 %v1912
  %v1914 = vpop.xlane.xlu0 %1913
  %v1915 = vsel %vm1030, %v1564, 0.0
  %v1916 = vadd.f32 %v1563, %v1915
  %1917 = vadd.xlane.f32.xlu0 %v1916
  %v1918 = vpop.xlane.xlu0 %1917
  %v1919 = vsel %vm1030, %v1566, 0.0
  %v1920 = vadd.f32 %v1565, %v1919
  %1921 = vadd.xlane.f32.xlu0 %v1920
  %v1922 = vpop.xlane.xlu0 %1921
  %v1923 = vsel %vm1030, %v1568, 0.0
  %v1924 = vadd.f32 %v1567, %v1923
  %1925 = vadd.xlane.f32.xlu0 %v1924
  %v1926 = vpop.xlane.xlu0 %1925
  %v1927 = vsel %vm1030, %v1570, 0.0
  %v1928 = vadd.f32 %v1569, %v1927
  %1929 = vadd.xlane.f32.xlu0 %v1928
  %v1930 = vpop.xlane.xlu0 %1929
  %v1931 = vmul.f32 %v1034, 0.0051020407
  %v1932 = vmul.f32 %v1038, 0.0051020407
  %v1933 = vmul.f32 %v1042, 0.0051020407
  %v1934 = vmul.f32 %v1046, 0.0051020407
  %v1935 = vmul.f32 %v1050, 0.0051020407
  %v1936 = vmul.f32 %v1054, 0.0051020407
  %v1937 = vmul.f32 %v1058, 0.0051020407
  %v1938 = vmul.f32 %v1062, 0.0051020407
  %v1939 = vmul.f32 %v1066, 0.0051020407
  %v1940 = vmul.f32 %v1070, 0.0051020407
  %v1941 = vmul.f32 %v1074, 0.0051020407
  %v1942 = vmul.f32 %v1078, 0.0051020407
  %v1943 = vmul.f32 %v1082, 0.0051020407
  %v1944 = vmul.f32 %v1086, 0.0051020407
  %v1945 = vmul.f32 %v1090, 0.0051020407
  %v1946 = vmul.f32 %v1094, 0.0051020407
  %v1947 = vmul.f32 %v1098, 0.0051020407
  %v1948 = vmul.f32 %v1102, 0.0051020407
  %v1949 = vmul.f32 %v1106, 0.0051020407
  %v1950 = vmul.f32 %v1110, 0.0051020407
  %v1951 = vmul.f32 %v1114, 0.0051020407
  %v1952 = vmul.f32 %v1118, 0.0051020407
  %v1953 = vmul.f32 %v1122, 0.0051020407
  %v1954 = vmul.f32 %v1126, 0.0051020407
  %v1955 = vmul.f32 %v1130, 0.0051020407
  %v1956 = vmul.f32 %v1134, 0.0051020407
  %v1957 = vmul.f32 %v1138, 0.0051020407
  %v1958 = vmul.f32 %v1142, 0.0051020407
  %v1959 = vmul.f32 %v1146, 0.0051020407
  %v1960 = vmul.f32 %v1150, 0.0051020407
  %v1961 = vmul.f32 %v1154, 0.0051020407
  %v1962 = vmul.f32 %v1158, 0.0051020407
  %v1963 = vmul.f32 %v1162, 0.0051020407
  %v1964 = vmul.f32 %v1166, 0.0051020407
  %v1965 = vmul.f32 %v1170, 0.0051020407
  %v1966 = vmul.f32 %v1174, 0.0051020407
  %v1967 = vmul.f32 %v1178, 0.0051020407
  %v1968 = vmul.f32 %v1182, 0.0051020407
  %v1969 = vmul.f32 %v1186, 0.0051020407
  %v1970 = vmul.f32 %v1190, 0.0051020407
  %v1971 = vmul.f32 %v1194, 0.0051020407
  %v1972 = vmul.f32 %v1198, 0.0051020407
  %v1973 = vmul.f32 %v1202, 0.0051020407
  %v1974 = vmul.f32 %v1206, 0.0051020407
  %v1975 = vmul.f32 %v1210, 0.0051020407
  %v1976 = vmul.f32 %v1214, 0.0051020407
  %v1977 = vmul.f32 %v1218, 0.0051020407
  %v1978 = vmul.f32 %v1222, 0.0051020407
  %v1979 = vmul.f32 %v1226, 0.0051020407
  %v1980 = vmul.f32 %v1230, 0.0051020407
  %v1981 = vmul.f32 %v1234, 0.0051020407
  %v1982 = vmul.f32 %v1238, 0.0051020407
  %v1983 = vmul.f32 %v1242, 0.0051020407
  %v1984 = vmul.f32 %v1246, 0.0051020407
  %v1985 = vmul.f32 %v1250, 0.0051020407
  %v1986 = vmul.f32 %v1254, 0.0051020407
  %v1987 = vmul.f32 %v1258, 0.0051020407
  %v1988 = vmul.f32 %v1262, 0.0051020407
  %v1989 = vmul.f32 %v1266, 0.0051020407
  %v1990 = vmul.f32 %v1270, 0.0051020407
  %v1991 = vmul.f32 %v1274, 0.0051020407
  %v1992 = vmul.f32 %v1278, 0.0051020407
  %v1993 = vmul.f32 %v1282, 0.0051020407
  %v1994 = vmul.f32 %v1286, 0.0051020407
  %v1995 = vmul.f32 %v1290, 0.0051020407
  %v1996 = vmul.f32 %v1294, 0.0051020407
  %v1997 = vmul.f32 %v1298, 0.0051020407
  %v1998 = vmul.f32 %v1302, 0.0051020407
  %v1999 = vmul.f32 %v1306, 0.0051020407
  %v2000 = vmul.f32 %v1310, 0.0051020407
  %v2001 = vmul.f32 %v1314, 0.0051020407
  %v2002 = vmul.f32 %v1318, 0.0051020407
  %v2003 = vmul.f32 %v1322, 0.0051020407
  %v2004 = vmul.f32 %v1326, 0.0051020407
  %v2005 = vmul.f32 %v1330, 0.0051020407
  %v2006 = vmul.f32 %v1334, 0.0051020407
  %v2007 = vmul.f32 %v1338, 0.0051020407
  %v2008 = vmul.f32 %v1342, 0.0051020407
  %v2009 = vmul.f32 %v1346, 0.0051020407
  %v2010 = vmul.f32 %v1350, 0.0051020407
  %v2011 = vmul.f32 %v1354, 0.0051020407
  %v2012 = vmul.f32 %v1358, 0.0051020407
  %v2013 = vmul.f32 %v1362, 0.0051020407
  %v2014 = vmul.f32 %v1366, 0.0051020407
  %v2015 = vmul.f32 %v1370, 0.0051020407
  %v2016 = vmul.f32 %v1374, 0.0051020407
  %v2017 = vmul.f32 %v1378, 0.0051020407
  %v2018 = vmul.f32 %v1382, 0.0051020407
  %v2019 = vmul.f32 %v1386, 0.0051020407
  %v2020 = vmul.f32 %v1390, 0.0051020407
  %v2021 = vmul.f32 %v1574, 0.0051020407
  %v2022 = vmul.f32 %v1578, 0.0051020407
  %v2023 = vmul.f32 %v1582, 0.0051020407
  %v2024 = vmul.f32 %v1586, 0.0051020407
  %v2025 = vmul.f32 %v1590, 0.0051020407
  %v2026 = vmul.f32 %v1594, 0.0051020407
  %v2027 = vmul.f32 %v1598, 0.0051020407
  %v2028 = vmul.f32 %v1602, 0.0051020407
  %v2029 = vmul.f32 %v1606, 0.0051020407
  %v2030 = vmul.f32 %v1610, 0.0051020407
  %v2031 = vmul.f32 %v1614, 0.0051020407
  %v2032 = vmul.f32 %v1618, 0.0051020407
  %v2033 = vmul.f32 %v1622, 0.0051020407
  %v2034 = vmul.f32 %v1626, 0.0051020407
  %v2035 = vmul.f32 %v1630, 0.0051020407
  %v2036 = vmul.f32 %v1634, 0.0051020407
  %v2037 = vmul.f32 %v1638, 0.0051020407
  %v2038 = vmul.f32 %v1642, 0.0051020407
  %v2039 = vmul.f32 %v1646, 0.0051020407
  %v2040 = vmul.f32 %v1650, 0.0051020407
  %v2041 = vmul.f32 %v1654, 0.0051020407
  %v2042 = vmul.f32 %v1658, 0.0051020407
  %v2043 = vmul.f32 %v1662, 0.0051020407
  %v2044 = vmul.f32 %v1666, 0.0051020407
  %v2045 = vmul.f32 %v1670, 0.0051020407
  %v2046 = vmul.f32 %v1674, 0.0051020407
  %v2047 = vmul.f32 %v1678, 0.0051020407
  %v2048 = vmul.f32 %v1682, 0.0051020407
  %v2049 = vmul.f32 %v1686, 0.0051020407
  %v2050 = vmul.f32 %v1690, 0.0051020407
  %v2051 = vmul.f32 %v1694, 0.0051020407
  %v2052 = vmul.f32 %v1698, 0.0051020407
  %v2053 = vmul.f32 %v1702, 0.0051020407
  %v2054 = vmul.f32 %v1706, 0.0051020407
  %v2055 = vmul.f32 %v1710, 0.0051020407
  %v2056 = vmul.f32 %v1714, 0.0051020407
  %v2057 = vmul.f32 %v1718, 0.0051020407
  %v2058 = vmul.f32 %v1722, 0.0051020407
  %v2059 = vmul.f32 %v1726, 0.0051020407
  %v2060 = vmul.f32 %v1730, 0.0051020407
  %v2061 = vmul.f32 %v1734, 0.0051020407
  %v2062 = vmul.f32 %v1738, 0.0051020407
  %v2063 = vmul.f32 %v1742, 0.0051020407
  %v2064 = vmul.f32 %v1746, 0.0051020407
  %v2065 = vmul.f32 %v1750, 0.0051020407
  %v2066 = vmul.f32 %v1754, 0.0051020407
  %v2067 = vmul.f32 %v1758, 0.0051020407
  %v2068 = vmul.f32 %v1762, 0.0051020407
  %v2069 = vmul.f32 %v1766, 0.0051020407
  %v2070 = vmul.f32 %v1770, 0.0051020407
  %v2071 = vmul.f32 %v1774, 0.0051020407
  %v2072 = vmul.f32 %v1778, 0.0051020407
  %v2073 = vmul.f32 %v1782, 0.0051020407
  %v2074 = vmul.f32 %v1786, 0.0051020407
  %v2075 = vmul.f32 %v1790, 0.0051020407
  %v2076 = vmul.f32 %v1794, 0.0051020407
  %v2077 = vmul.f32 %v1798, 0.0051020407
  %v2078 = vmul.f32 %v1802, 0.0051020407
  %v2079 = vmul.f32 %v1806, 0.0051020407
  %v2080 = vmul.f32 %v1810, 0.0051020407
  %v2081 = vmul.f32 %v1814, 0.0051020407
  %v2082 = vmul.f32 %v1818, 0.0051020407
  %v2083 = vmul.f32 %v1822, 0.0051020407
  %v2084 = vmul.f32 %v1826, 0.0051020407
  %v2085 = vmul.f32 %v1830, 0.0051020407
  %v2086 = vmul.f32 %v1834, 0.0051020407
  %v2087 = vmul.f32 %v1838, 0.0051020407
  %v2088 = vmul.f32 %v1842, 0.0051020407
  %v2089 = vmul.f32 %v1846, 0.0051020407
  %v2090 = vmul.f32 %v1850, 0.0051020407
  %v2091 = vmul.f32 %v1854, 0.0051020407
  %v2092 = vmul.f32 %v1858, 0.0051020407
  %v2093 = vmul.f32 %v1862, 0.0051020407
  %v2094 = vmul.f32 %v1866, 0.0051020407
  %v2095 = vmul.f32 %v1870, 0.0051020407
  %v2096 = vmul.f32 %v1874, 0.0051020407
  %v2097 = vmul.f32 %v1878, 0.0051020407
  %v2098 = vmul.f32 %v1882, 0.0051020407
  %v2099 = vmul.f32 %v1886, 0.0051020407
  %v2100 = vmul.f32 %v1890, 0.0051020407
  %v2101 = vmul.f32 %v1894, 0.0051020407
  %v2102 = vmul.f32 %v1898, 0.0051020407
  %v2103 = vmul.f32 %v1902, 0.0051020407
  %v2104 = vmul.f32 %v1906, 0.0051020407
  %v2105 = vmul.f32 %v1910, 0.0051020407
  %v2106 = vmul.f32 %v1914, 0.0051020407
  %v2107 = vmul.f32 %v1918, 0.0051020407
  %v2108 = vmul.f32 %v1922, 0.0051020407
  %v2109 = vmul.f32 %v1926, 0.0051020407
  %v2110 = vmul.f32 %v1930, 0.0051020407
  %v2111 = vmul.f32 %v1931, %v1931
  %v2112 = vmul.f32 %v1932, %v1932
  %v2113 = vmul.f32 %v1933, %v1933
  %v2114 = vmul.f32 %v1934, %v1934
  %v2115 = vmul.f32 %v1935, %v1935
  %v2116 = vmul.f32 %v1936, %v1936
  %v2117 = vmul.f32 %v1937, %v1937
  %v2118 = vmul.f32 %v1938, %v1938
  %v2119 = vmul.f32 %v1939, %v1939
  %v2120 = vmul.f32 %v1940, %v1940
  %v2121 = vmul.f32 %v1941, %v1941
  %v2122 = vmul.f32 %v1942, %v1942
  %v2123 = vmul.f32 %v1943, %v1943
  %v2124 = vmul.f32 %v1944, %v1944
  %v2125 = vmul.f32 %v1945, %v1945
  %v2126 = vmul.f32 %v1946, %v1946
  %v2127 = vmul.f32 %v1947, %v1947
  %v2128 = vmul.f32 %v1948, %v1948
  %v2129 = vmul.f32 %v1949, %v1949
  %v2130 = vmul.f32 %v1950, %v1950
  %v2131 = vmul.f32 %v1951, %v1951
  %v2132 = vmul.f32 %v1952, %v1952
  %v2133 = vmul.f32 %v1953, %v1953
  %v2134 = vmul.f32 %v1954, %v1954
  %v2135 = vmul.f32 %v1955, %v1955
  %v2136 = vmul.f32 %v1956, %v1956
  %v2137 = vmul.f32 %v1957, %v1957
  %v2138 = vmul.f32 %v1958, %v1958
  %v2139 = vmul.f32 %v1959, %v1959
  %v2140 = vmul.f32 %v1960, %v1960
  %v2141 = vmul.f32 %v1961, %v1961
  %v2142 = vmul.f32 %v1962, %v1962
  %v2143 = vmul.f32 %v1963, %v1963
  %v2144 = vmul.f32 %v1964, %v1964
  %v2145 = vmul.f32 %v1965, %v1965
  %v2146 = vmul.f32 %v1966, %v1966
  %v2147 = vmul.f32 %v1967, %v1967
  %v2148 = vmul.f32 %v1968, %v1968
  %v2149 = vmul.f32 %v1969, %v1969
  %v2150 = vmul.f32 %v1970, %v1970
  %v2151 = vmul.f32 %v1971, %v1971
  %v2152 = vmul.f32 %v1972, %v1972
  %v2153 = vmul.f32 %v1973, %v1973
  %v2154 = vmul.f32 %v1974, %v1974
  %v2155 = vmul.f32 %v1975, %v1975
  %v2156 = vmul.f32 %v1976, %v1976
  %v2157 = vmul.f32 %v1977, %v1977
  %v2158 = vmul.f32 %v1978, %v1978
  %v2159 = vmul.f32 %v1979, %v1979
  %v2160 = vmul.f32 %v1980, %v1980
  %v2161 = vmul.f32 %v1981, %v1981
  %v2162 = vmul.f32 %v1982, %v1982
  %v2163 = vmul.f32 %v1983, %v1983
  %v2164 = vmul.f32 %v1984, %v1984
  %v2165 = vmul.f32 %v1985, %v1985
  %v2166 = vmul.f32 %v1986, %v1986
  %v2167 = vmul.f32 %v1987, %v1987
  %v2168 = vmul.f32 %v1988, %v1988
  %v2169 = vmul.f32 %v1989, %v1989
  %v2170 = vmul.f32 %v1990, %v1990
  %v2171 = vmul.f32 %v1991, %v1991
  %v2172 = vmul.f32 %v1992, %v1992
  %v2173 = vmul.f32 %v1993, %v1993
  %v2174 = vmul.f32 %v1994, %v1994
  %v2175 = vmul.f32 %v1995, %v1995
  %v2176 = vmul.f32 %v1996, %v1996
  %v2177 = vmul.f32 %v1997, %v1997
  %v2178 = vmul.f32 %v1998, %v1998
  %v2179 = vmul.f32 %v1999, %v1999
  %v2180 = vmul.f32 %v2000, %v2000
  %v2181 = vmul.f32 %v2001, %v2001
  %v2182 = vmul.f32 %v2002, %v2002
  %v2183 = vmul.f32 %v2003, %v2003
  %v2184 = vmul.f32 %v2004, %v2004
  %v2185 = vmul.f32 %v2005, %v2005
  %v2186 = vmul.f32 %v2006, %v2006
  %v2187 = vmul.f32 %v2007, %v2007
  %v2188 = vmul.f32 %v2008, %v2008
  %v2189 = vmul.f32 %v2009, %v2009
  %v2190 = vmul.f32 %v2010, %v2010
  %v2191 = vmul.f32 %v2011, %v2011
  %v2192 = vmul.f32 %v2012, %v2012
  %v2193 = vmul.f32 %v2013, %v2013
  %v2194 = vmul.f32 %v2014, %v2014
  %v2195 = vmul.f32 %v2015, %v2015
  %v2196 = vmul.f32 %v2016, %v2016
  %v2197 = vmul.f32 %v2017, %v2017
  %v2198 = vmul.f32 %v2018, %v2018
  %v2199 = vmul.f32 %v2019, %v2019
  %v2200 = vmul.f32 %v2020, %v2020
  %v2201 = vsub.f32 %v2021, %v2111
  %v2202 = vsub.f32 %v2022, %v2112
  %v2203 = vsub.f32 %v2023, %v2113
  %v2204 = vsub.f32 %v2024, %v2114
  %v2205 = vsub.f32 %v2025, %v2115
  %v2206 = vsub.f32 %v2026, %v2116
  %v2207 = vsub.f32 %v2027, %v2117
  %v2208 = vsub.f32 %v2028, %v2118
  %v2209 = vsub.f32 %v2029, %v2119
  %v2210 = vsub.f32 %v2030, %v2120
  %v2211 = vsub.f32 %v2031, %v2121
  %v2212 = vsub.f32 %v2032, %v2122
  %v2213 = vsub.f32 %v2033, %v2123
  %v2214 = vsub.f32 %v2034, %v2124
  %v2215 = vsub.f32 %v2035, %v2125
  %v2216 = vsub.f32 %v2036, %v2126
  %v2217 = vsub.f32 %v2037, %v2127
  %v2218 = vsub.f32 %v2038, %v2128
  %v2219 = vsub.f32 %v2039, %v2129
  %v2220 = vsub.f32 %v2040, %v2130
  %v2221 = vsub.f32 %v2041, %v2131
  %v2222 = vsub.f32 %v2042, %v2132
  %v2223 = vsub.f32 %v2043, %v2133
  %v2224 = vsub.f32 %v2044, %v2134
  %v2225 = vsub.f32 %v2045, %v2135
  %v2226 = vsub.f32 %v2046, %v2136
  %v2227 = vsub.f32 %v2047, %v2137
  %v2228 = vsub.f32 %v2048, %v2138
  %v2229 = vsub.f32 %v2049, %v2139
  %v2230 = vsub.f32 %v2050, %v2140
  %v2231 = vsub.f32 %v2051, %v2141
  %v2232 = vsub.f32 %v2052, %v2142
  %v2233 = vsub.f32 %v2053, %v2143
  %v2234 = vsub.f32 %v2054, %v2144
  %v2235 = vsub.f32 %v2055, %v2145
  %v2236 = vsub.f32 %v2056, %v2146
  %v2237 = vsub.f32 %v2057, %v2147
  %v2238 = vsub.f32 %v2058, %v2148
  %v2239 = vsub.f32 %v2059, %v2149
  %v2240 = vsub.f32 %v2060, %v2150
  %v2241 = vsub.f32 %v2061, %v2151
  %v2242 = vsub.f32 %v2062, %v2152
  %v2243 = vsub.f32 %v2063, %v2153
  %v2244 = vsub.f32 %v2064, %v2154
  %v2245 = vsub.f32 %v2065, %v2155
  %v2246 = vsub.f32 %v2066, %v2156
  %v2247 = vsub.f32 %v2067, %v2157
  %v2248 = vsub.f32 %v2068, %v2158
  %v2249 = vsub.f32 %v2069, %v2159
  %v2250 = vsub.f32 %v2070, %v2160
  %v2251 = vsub.f32 %v2071, %v2161
  %v2252 = vsub.f32 %v2072, %v2162
  %v2253 = vsub.f32 %v2073, %v2163
  %v2254 = vsub.f32 %v2074, %v2164
  %v2255 = vsub.f32 %v2075, %v2165
  %v2256 = vsub.f32 %v2076, %v2166
  %v2257 = vsub.f32 %v2077, %v2167
  %v2258 = vsub.f32 %v2078, %v2168
  %v2259 = vsub.f32 %v2079, %v2169
  %v2260 = vsub.f32 %v2080, %v2170
  %v2261 = vsub.f32 %v2081, %v2171
  %v2262 = vsub.f32 %v2082, %v2172
  %v2263 = vsub.f32 %v2083, %v2173
  %v2264 = vsub.f32 %v2084, %v2174
  %v2265 = vsub.f32 %v2085, %v2175
  %v2266 = vsub.f32 %v2086, %v2176
  %v2267 = vsub.f32 %v2087, %v2177
  %v2268 = vsub.f32 %v2088, %v2178
  %v2269 = vsub.f32 %v2089, %v2179
  %v2270 = vsub.f32 %v2090, %v2180
  %v2271 = vsub.f32 %v2091, %v2181
  %v2272 = vsub.f32 %v2092, %v2182
  %v2273 = vsub.f32 %v2093, %v2183
  %v2274 = vsub.f32 %v2094, %v2184
  %v2275 = vsub.f32 %v2095, %v2185
  %v2276 = vsub.f32 %v2096, %v2186
  %v2277 = vsub.f32 %v2097, %v2187
  %v2278 = vsub.f32 %v2098, %v2188
  %v2279 = vsub.f32 %v2099, %v2189
  %v2280 = vsub.f32 %v2100, %v2190
  %v2281 = vsub.f32 %v2101, %v2191
  %v2282 = vsub.f32 %v2102, %v2192
  %v2283 = vsub.f32 %v2103, %v2193
  %v2284 = vsub.f32 %v2104, %v2194
  %v2285 = vsub.f32 %v2105, %v2195
  %v2286 = vsub.f32 %v2106, %v2196
  %v2287 = vsub.f32 %v2107, %v2197
  %v2288 = vsub.f32 %v2108, %v2198
  %v2289 = vsub.f32 %v2109, %v2199
  %v2290 = vsub.f32 %v2110, %v2200
  %v2291 = vmax.f32 %v2201, 0.0
  %v2292 = vmax.f32 %v2202, 0.0
  %v2293 = vmax.f32 %v2203, 0.0
  %v2294 = vmax.f32 %v2204, 0.0
  %v2295 = vmax.f32 %v2205, 0.0
  %v2296 = vmax.f32 %v2206, 0.0
  %v2297 = vmax.f32 %v2207, 0.0
  %v2298 = vmax.f32 %v2208, 0.0
  %v2299 = vmax.f32 %v2209, 0.0
  %v2300 = vmax.f32 %v2210, 0.0
  %v2301 = vmax.f32 %v2211, 0.0
  %v2302 = vmax.f32 %v2212, 0.0
  %v2303 = vmax.f32 %v2213, 0.0
  %v2304 = vmax.f32 %v2214, 0.0
  %v2305 = vmax.f32 %v2215, 0.0
  %v2306 = vmax.f32 %v2216, 0.0
  %v2307 = vmax.f32 %v2217, 0.0
  %v2308 = vmax.f32 %v2218, 0.0
  %v2309 = vmax.f32 %v2219, 0.0
  %v2310 = vmax.f32 %v2220, 0.0
  %v2311 = vmax.f32 %v2221, 0.0
  %v2312 = vmax.f32 %v2222, 0.0
  %v2313 = vmax.f32 %v2223, 0.0
  %v2314 = vmax.f32 %v2224, 0.0
  %v2315 = vmax.f32 %v2225, 0.0
  %v2316 = vmax.f32 %v2226, 0.0
  %v2317 = vmax.f32 %v2227, 0.0
  %v2318 = vmax.f32 %v2228, 0.0
  %v2319 = vmax.f32 %v2229, 0.0
  %v2320 = vmax.f32 %v2230, 0.0
  %v2321 = vmax.f32 %v2231, 0.0
  %v2322 = vmax.f32 %v2232, 0.0
  %v2323 = vmax.f32 %v2233, 0.0
  %v2324 = vmax.f32 %v2234, 0.0
  %v2325 = vmax.f32 %v2235, 0.0
  %v2326 = vmax.f32 %v2236, 0.0
  %v2327 = vmax.f32 %v2237, 0.0
  %v2328 = vmax.f32 %v2238, 0.0
  %v2329 = vmax.f32 %v2239, 0.0
  %v2330 = vmax.f32 %v2240, 0.0
  %v2331 = vmax.f32 %v2241, 0.0
  %v2332 = vmax.f32 %v2242, 0.0
  %v2333 = vmax.f32 %v2243, 0.0
  %v2334 = vmax.f32 %v2244, 0.0
  %v2335 = vmax.f32 %v2245, 0.0
  %v2336 = vmax.f32 %v2246, 0.0
  %v2337 = vmax.f32 %v2247, 0.0
  %v2338 = vmax.f32 %v2248, 0.0
  %v2339 = vmax.f32 %v2249, 0.0
  %v2340 = vmax.f32 %v2250, 0.0
  %v2341 = vmax.f32 %v2251, 0.0
  %v2342 = vmax.f32 %v2252, 0.0
  %v2343 = vmax.f32 %v2253, 0.0
  %v2344 = vmax.f32 %v2254, 0.0
  %v2345 = vmax.f32 %v2255, 0.0
  %v2346 = vmax.f32 %v2256, 0.0
  %v2347 = vmax.f32 %v2257, 0.0
  %v2348 = vmax.f32 %v2258, 0.0
  %v2349 = vmax.f32 %v2259, 0.0
  %v2350 = vmax.f32 %v2260, 0.0
  %v2351 = vmax.f32 %v2261, 0.0
  %v2352 = vmax.f32 %v2262, 0.0
  %v2353 = vmax.f32 %v2263, 0.0
  %v2354 = vmax.f32 %v2264, 0.0
  %v2355 = vmax.f32 %v2265, 0.0
  %v2356 = vmax.f32 %v2266, 0.0
  %v2357 = vmax.f32 %v2267, 0.0
  %v2358 = vmax.f32 %v2268, 0.0
  %v2359 = vmax.f32 %v2269, 0.0
  %v2360 = vmax.f32 %v2270, 0.0
  %v2361 = vmax.f32 %v2271, 0.0
  %v2362 = vmax.f32 %v2272, 0.0
  %v2363 = vmax.f32 %v2273, 0.0
  %v2364 = vmax.f32 %v2274, 0.0
  %v2365 = vmax.f32 %v2275, 0.0
  %v2366 = vmax.f32 %v2276, 0.0
  %v2367 = vmax.f32 %v2277, 0.0
  %v2368 = vmax.f32 %v2278, 0.0
  %v2369 = vmax.f32 %v2279, 0.0
  %v2370 = vmax.f32 %v2280, 0.0
  %v2371 = vmax.f32 %v2281, 0.0
  %v2372 = vmax.f32 %v2282, 0.0
  %v2373 = vmax.f32 %v2283, 0.0
  %v2374 = vmax.f32 %v2284, 0.0
  %v2375 = vmax.f32 %v2285, 0.0
  %v2376 = vmax.f32 %v2286, 0.0
  %v2377 = vmax.f32 %v2287, 0.0
  %v2378 = vmax.f32 %v2288, 0.0
  %v2379 = vmax.f32 %v2289, 0.0
  %v2380 = vmax.f32 %v2290, 0.0
  %v2381 = vld [vmem:[%s2] sm:$0xff]
  %v2382 = vld [vmem:[%s2 + $0x8] sm:$0xff]
  %v2383 = vld [vmem:[%s2 + $0x10] sm:$0xff]
  %v2384 = vld [vmem:[%s2 + $0x18] sm:$0xff]
  %v2385 = vld [vmem:[%s2 + $0x20] sm:$0xff]
  %v2386 = vld [vmem:[%s2 + $0x28] sm:$0xff]
  %v2387 = vld [vmem:[%s2 + $0x30] sm:$0xff]
  %v2388 = vld [vmem:[%s2 + $0x38] sm:$0xff]
  %v2389 = vld [vmem:[%s2 + $0x40] sm:$0xff]
  %v2390 = vld [vmem:[%s2 + $0x48] sm:$0xff]
  %v2391 = vld [vmem:[%s2 + $0x50] sm:$0xff]
  %v2392 = vld [vmem:[%s2 + $0x58] sm:$0xff]
  %v2393 = vld [vmem:[%s2 + $0x60] sm:$0xff]
  %v2394 = vld [vmem:[%s2 + $0x68] sm:$0xff]
  %v2395 = vld [vmem:[%s2 + $0x70] sm:$0xff]
  %v2396 = vld [vmem:[%s2 + $0x78] sm:$0xff]
  %v2397 = vld [vmem:[%s2 + $0x80] sm:$0xff]
  %v2398 = vld [vmem:[%s2 + $0x88] sm:$0xff]
  %v2399 = vld [vmem:[%s2 + $0x90] sm:$0xff]
  %v2400 = vld [vmem:[%s2 + $0x98] sm:$0xff]
  %v2401 = vld [vmem:[%s2 + $0xa0] sm:$0xff]
  %v2402 = vld [vmem:[%s2 + $0xa8] sm:$0xff]
  %v2403 = vld [vmem:[%s2 + $0xb0] sm:$0xff]
  %v2404 = vld [vmem:[%s2 + $0xb8] sm:$0xff]
  %v2405 = vld [vmem:[%s2 + $0xc0] sm:$0xff]
  %v2406 = vld [vmem:[%s2 + $0xc8] sm:$0xff]
  %v2407 = vld [vmem:[%s2 + $0xd0] sm:$0xff]
  %v2408 = vld [vmem:[%s2 + $0xd8] sm:$0xff]
  %v2409 = vld [vmem:[%s2 + $0xe0] sm:$0xff]
  %v2410 = vld [vmem:[%s2 + $0xe8] sm:$0xff]
  %v2411 = vld [vmem:[%s2 + $0xf0] sm:$0xff]
  %v2412 = vld [vmem:[%s2 + $0xf8] sm:$0xff]
  %v2413 = vld [vmem:[%s2 + $0x100] sm:$0xff]
  %v2414 = vld [vmem:[%s2 + $0x108] sm:$0xff]
  %v2415 = vld [vmem:[%s2 + $0x110] sm:$0xff]
  %v2416 = vld [vmem:[%s2 + $0x118] sm:$0xff]
  %v2417 = vld [vmem:[%s2 + $0x120] sm:$0xff]
  %v2418 = vld [vmem:[%s2 + $0x128] sm:$0xff]
  %v2419 = vld [vmem:[%s2 + $0x130] sm:$0xff]
  %v2420 = vld [vmem:[%s2 + $0x138] sm:$0xff]
  %v2421 = vld [vmem:[%s2 + $0x140] sm:$0xff]
  %v2422 = vld [vmem:[%s2 + $0x148] sm:$0xff]
  %v2423 = vld [vmem:[%s2 + $0x150] sm:$0xff]
  %v2424 = vld [vmem:[%s2 + $0x158] sm:$0xff]
  %v2425 = vld [vmem:[%s2 + $0x160] sm:$0xff]
  %v2426 = vld [vmem:[%s2 + $0x168] sm:$0xff]
  %v2427 = vld [vmem:[%s2 + $0x170] sm:$0xff]
  %v2428 = vld [vmem:[%s2 + $0x178] sm:$0xff]
  %v2429 = vld [vmem:[%s2 + $0x180] sm:$0xff]
  %v2430 = vld [vmem:[%s2 + $0x188] sm:$0xff]
  %v2431 = vld [vmem:[%s2 + $0x190] sm:$0xff]
  %v2432 = vld [vmem:[%s2 + $0x198] sm:$0xff]
  %v2433 = vld [vmem:[%s2 + $0x1a0] sm:$0xff]
  %v2434 = vld [vmem:[%s2 + $0x1a8] sm:$0xff]
  %v2435 = vld [vmem:[%s2 + $0x1b0] sm:$0xff]
  %v2436 = vld [vmem:[%s2 + $0x1b8] sm:$0xff]
  %v2437 = vld [vmem:[%s2 + $0x1c0] sm:$0xff]
  %v2438 = vld [vmem:[%s2 + $0x1c8] sm:$0xff]
  %v2439 = vld [vmem:[%s2 + $0x1d0] sm:$0xff]
  %v2440 = vld [vmem:[%s2 + $0x1d8] sm:$0xff]
  %v2441 = vld [vmem:[%s2 + $0x1e0] sm:$0xff]
  %v2442 = vld [vmem:[%s2 + $0x1e8] sm:$0xff]
  %v2443 = vld [vmem:[%s2 + $0x1f0] sm:$0xff]
  %v2444 = vld [vmem:[%s2 + $0x1f8] sm:$0xff]
  %v2445 = vld [vmem:[%s2 + $0x200] sm:$0xff]
  %v2446 = vld [vmem:[%s2 + $0x208] sm:$0xff]
  %v2447 = vld [vmem:[%s2 + $0x210] sm:$0xff]
  %v2448 = vld [vmem:[%s2 + $0x218] sm:$0xff]
  %v2449 = vld [vmem:[%s2 + $0x220] sm:$0xff]
  %v2450 = vld [vmem:[%s2 + $0x228] sm:$0xff]
  %v2451 = vld [vmem:[%s2 + $0x230] sm:$0xff]
  %v2452 = vld [vmem:[%s2 + $0x238] sm:$0xff]
  %v2453 = vld [vmem:[%s2 + $0x240] sm:$0xff]
  %v2454 = vld [vmem:[%s2 + $0x248] sm:$0xff]
  %v2455 = vld [vmem:[%s2 + $0x250] sm:$0xff]
  %v2456 = vld [vmem:[%s2 + $0x258] sm:$0xff]
  %v2457 = vld [vmem:[%s2 + $0x260] sm:$0xff]
  %v2458 = vld [vmem:[%s2 + $0x268] sm:$0xff]
  %v2459 = vld [vmem:[%s2 + $0x270] sm:$0xff]
  %v2460 = vld [vmem:[%s2 + $0x278] sm:$0xff]
  %v2461 = vld [vmem:[%s2 + $0x280] sm:$0xff]
  %v2462 = vld [vmem:[%s2 + $0x288] sm:$0xff]
  %v2463 = vld [vmem:[%s2 + $0x290] sm:$0xff]
  %v2464 = vld [vmem:[%s2 + $0x298] sm:$0xff]
  %v2465 = vld [vmem:[%s2 + $0x2a0] sm:$0xff]
  %v2466 = vld [vmem:[%s2 + $0x2a8] sm:$0xff]
  %v2467 = vld [vmem:[%s2 + $0x2b0] sm:$0xff]
  %v2468 = vld [vmem:[%s2 + $0x2b8] sm:$0xff]
  %v2469 = vld [vmem:[%s2 + $0x2c0] sm:$0xff]
  %v2470 = vld [vmem:[%s2 + $0x2c8] sm:$0xff]
  %v2471 = vadd.f32 %v2291, 1e-05
  %v2472 = vadd.f32 %v2292, 1e-05
  %v2473 = vadd.f32 %v2293, 1e-05
  %v2474 = vadd.f32 %v2294, 1e-05
  %v2475 = vadd.f32 %v2295, 1e-05
  %v2476 = vadd.f32 %v2296, 1e-05
  %v2477 = vadd.f32 %v2297, 1e-05
  %v2478 = vadd.f32 %v2298, 1e-05
  %v2479 = vadd.f32 %v2299, 1e-05
  %v2480 = vadd.f32 %v2300, 1e-05
  %v2481 = vadd.f32 %v2301, 1e-05
  %v2482 = vadd.f32 %v2302, 1e-05
  %v2483 = vadd.f32 %v2303, 1e-05
  %v2484 = vadd.f32 %v2304, 1e-05
  %v2485 = vadd.f32 %v2305, 1e-05
  %v2486 = vadd.f32 %v2306, 1e-05
  %v2487 = vadd.f32 %v2307, 1e-05
  %v2488 = vadd.f32 %v2308, 1e-05
  %v2489 = vadd.f32 %v2309, 1e-05
  %v2490 = vadd.f32 %v2310, 1e-05
  %v2491 = vadd.f32 %v2311, 1e-05
  %v2492 = vadd.f32 %v2312, 1e-05
  %v2493 = vadd.f32 %v2313, 1e-05
  %v2494 = vadd.f32 %v2314, 1e-05
  %v2495 = vadd.f32 %v2315, 1e-05
  %v2496 = vadd.f32 %v2316, 1e-05
  %v2497 = vadd.f32 %v2317, 1e-05
  %v2498 = vadd.f32 %v2318, 1e-05
  %v2499 = vadd.f32 %v2319, 1e-05
  %v2500 = vadd.f32 %v2320, 1e-05
  %v2501 = vadd.f32 %v2321, 1e-05
  %v2502 = vadd.f32 %v2322, 1e-05
  %v2503 = vadd.f32 %v2323, 1e-05
  %v2504 = vadd.f32 %v2324, 1e-05
  %v2505 = vadd.f32 %v2325, 1e-05
  %v2506 = vadd.f32 %v2326, 1e-05
  %v2507 = vadd.f32 %v2327, 1e-05
  %v2508 = vadd.f32 %v2328, 1e-05
  %v2509 = vadd.f32 %v2329, 1e-05
  %v2510 = vadd.f32 %v2330, 1e-05
  %v2511 = vadd.f32 %v2331, 1e-05
  %v2512 = vadd.f32 %v2332, 1e-05
  %v2513 = vadd.f32 %v2333, 1e-05
  %v2514 = vadd.f32 %v2334, 1e-05
  %v2515 = vadd.f32 %v2335, 1e-05
  %v2516 = vadd.f32 %v2336, 1e-05
  %v2517 = vadd.f32 %v2337, 1e-05
  %v2518 = vadd.f32 %v2338, 1e-05
  %v2519 = vadd.f32 %v2339, 1e-05
  %v2520 = vadd.f32 %v2340, 1e-05
  %v2521 = vadd.f32 %v2341, 1e-05
  %v2522 = vadd.f32 %v2342, 1e-05
  %v2523 = vadd.f32 %v2343, 1e-05
  %v2524 = vadd.f32 %v2344, 1e-05
  %v2525 = vadd.f32 %v2345, 1e-05
  %v2526 = vadd.f32 %v2346, 1e-05
  %v2527 = vadd.f32 %v2347, 1e-05
  %v2528 = vadd.f32 %v2348, 1e-05
  %v2529 = vadd.f32 %v2349, 1e-05
  %v2530 = vadd.f32 %v2350, 1e-05
  %v2531 = vadd.f32 %v2351, 1e-05
  %v2532 = vadd.f32 %v2352, 1e-05
  %v2533 = vadd.f32 %v2353, 1e-05
  %v2534 = vadd.f32 %v2354, 1e-05
  %v2535 = vadd.f32 %v2355, 1e-05
  %v2536 = vadd.f32 %v2356, 1e-05
  %v2537 = vadd.f32 %v2357, 1e-05
  %v2538 = vadd.f32 %v2358, 1e-05
  %v2539 = vadd.f32 %v2359, 1e-05
  %v2540 = vadd.f32 %v2360, 1e-05
  %v2541 = vadd.f32 %v2361, 1e-05
  %v2542 = vadd.f32 %v2362, 1e-05
  %v2543 = vadd.f32 %v2363, 1e-05
  %v2544 = vadd.f32 %v2364, 1e-05
  %v2545 = vadd.f32 %v2365, 1e-05
  %v2546 = vadd.f32 %v2366, 1e-05
  %v2547 = vadd.f32 %v2367, 1e-05
  %v2548 = vadd.f32 %v2368, 1e-05
  %v2549 = vadd.f32 %v2369, 1e-05
  %v2550 = vadd.f32 %v2370, 1e-05
  %v2551 = vadd.f32 %v2371, 1e-05
  %v2552 = vadd.f32 %v2372, 1e-05
  %v2553 = vadd.f32 %v2373, 1e-05
  %v2554 = vadd.f32 %v2374, 1e-05
  %v2555 = vadd.f32 %v2375, 1e-05
  %v2556 = vadd.f32 %v2376, 1e-05
  %v2557 = vadd.f32 %v2377, 1e-05
  %v2558 = vadd.f32 %v2378, 1e-05
  %v2559 = vadd.f32 %v2379, 1e-05
  %v2560 = vadd.f32 %v2380, 1e-05
  %v2561 = vrsqrt.pop %v2471
  %v2562 = vmul.f32 %v2561, %v2471
  %v2563 = vmul.f32 %v2562, %v2561
  %v2564 = vmul.f32 0.5, %v2563
  %v2565 = vsub.f32 1.5, %v2564
  %v2566 = vmul.f32 %v2561, %v2565
  %vm2567 = vweird.f32 %v2471
  %vm2568 = vweird.f32 %v2561
  %vm2569 = vmor %vm2567, %vm2568
  %v2570 = vsel %vm2569, %v2561, %v2566
  %v2571 = vrsqrt.pop %v2472
  %v2572 = vmul.f32 %v2571, %v2472
  %v2573 = vmul.f32 %v2572, %v2571
  %v2574 = vmul.f32 0.5, %v2573
  %v2575 = vsub.f32 1.5, %v2574
  %v2576 = vmul.f32 %v2571, %v2575
  %vm2577 = vweird.f32 %v2472
  %vm2578 = vweird.f32 %v2571
  %vm2579 = vmor %vm2577, %vm2578
  %v2580 = vsel %vm2579, %v2571, %v2576
  %v2581 = vrsqrt.pop %v2473
  %v2582 = vmul.f32 %v2581, %v2473
  %v2583 = vmul.f32 %v2582, %v2581
  %v2584 = vmul.f32 0.5, %v2583
  %v2585 = vsub.f32 1.5, %v2584
  %v2586 = vmul.f32 %v2581, %v2585
  %vm2587 = vweird.f32 %v2473
  %vm2588 = vweird.f32 %v2581
  %vm2589 = vmor %vm2587, %vm2588
  %v2590 = vsel %vm2589, %v2581, %v2586
  %v2591 = vrsqrt.pop %v2474
  %v2592 = vmul.f32 %v2591, %v2474
  %v2593 = vmul.f32 %v2592, %v2591
  %v2594 = vmul.f32 0.5, %v2593
  %v2595 = vsub.f32 1.5, %v2594
  %v2596 = vmul.f32 %v2591, %v2595
  %vm2597 = vweird.f32 %v2474
  %vm2598 = vweird.f32 %v2591
  %vm2599 = vmor %vm2597, %vm2598
  %v2600 = vsel %vm2599, %v2591, %v2596
  %v2601 = vrsqrt.pop %v2475
  %v2602 = vmul.f32 %v2601, %v2475
  %v2603 = vmul.f32 %v2602, %v2601
  %v2604 = vmul.f32 0.5, %v2603
  %v2605 = vsub.f32 1.5, %v2604
  %v2606 = vmul.f32 %v2601, %v2605
  %vm2607 = vweird.f32 %v2475
  %vm2608 = vweird.f32 %v2601
  %vm2609 = vmor %vm2607, %vm2608
  %v2610 = vsel %vm2609, %v2601, %v2606
  %v2611 = vrsqrt.pop %v2476
  %v2612 = vmul.f32 %v2611, %v2476
  %v2613 = vmul.f32 %v2612, %v2611
  %v2614 = vmul.f32 0.5, %v2613
  %v2615 = vsub.f32 1.5, %v2614
  %v2616 = vmul.f32 %v2611, %v2615
  %vm2617 = vweird.f32 %v2476
  %vm2618 = vweird.f32 %v2611
  %vm2619 = vmor %vm2617, %vm2618
  %v2620 = vsel %vm2619, %v2611, %v2616
  %v2621 = vrsqrt.pop %v2477
  %v2622 = vmul.f32 %v2621, %v2477
  %v2623 = vmul.f32 %v2622, %v2621
  %v2624 = vmul.f32 0.5, %v2623
  %v2625 = vsub.f32 1.5, %v2624
  %v2626 = vmul.f32 %v2621, %v2625
  %vm2627 = vweird.f32 %v2477
  %vm2628 = vweird.f32 %v2621
  %vm2629 = vmor %vm2627, %vm2628
  %v2630 = vsel %vm2629, %v2621, %v2626
  %v2631 = vrsqrt.pop %v2478
  %v2632 = vmul.f32 %v2631, %v2478
  %v2633 = vmul.f32 %v2632, %v2631
  %v2634 = vmul.f32 0.5, %v2633
  %v2635 = vsub.f32 1.5, %v2634
  %v2636 = vmul.f32 %v2631, %v2635
  %vm2637 = vweird.f32 %v2478
  %vm2638 = vweird.f32 %v2631
  %vm2639 = vmor %vm2637, %vm2638
  %v2640 = vsel %vm2639, %v2631, %v2636
  %v2641 = vrsqrt.pop %v2479
  %v2642 = vmul.f32 %v2641, %v2479
  %v2643 = vmul.f32 %v2642, %v2641
  %v2644 = vmul.f32 0.5, %v2643
  %v2645 = vsub.f32 1.5, %v2644
  %v2646 = vmul.f32 %v2641, %v2645
  %vm2647 = vweird.f32 %v2479
  %vm2648 = vweird.f32 %v2641
  %vm2649 = vmor %vm2647, %vm2648
  %v2650 = vsel %vm2649, %v2641, %v2646
  %v2651 = vrsqrt.pop %v2480
  %v2652 = vmul.f32 %v2651, %v2480
  %v2653 = vmul.f32 %v2652, %v2651
  %v2654 = vmul.f32 0.5, %v2653
  %v2655 = vsub.f32 1.5, %v2654
  %v2656 = vmul.f32 %v2651, %v2655
  %vm2657 = vweird.f32 %v2480
  %vm2658 = vweird.f32 %v2651
  %vm2659 = vmor %vm2657, %vm2658
  %v2660 = vsel %vm2659, %v2651, %v2656
  %v2661 = vrsqrt.pop %v2481
  %v2662 = vmul.f32 %v2661, %v2481
  %v2663 = vmul.f32 %v2662, %v2661
  %v2664 = vmul.f32 0.5, %v2663
  %v2665 = vsub.f32 1.5, %v2664
  %v2666 = vmul.f32 %v2661, %v2665
  %vm2667 = vweird.f32 %v2481
  %vm2668 = vweird.f32 %v2661
  %vm2669 = vmor %vm2667, %vm2668
  %v2670 = vsel %vm2669, %v2661, %v2666
  %v2671 = vrsqrt.pop %v2482
  %v2672 = vmul.f32 %v2671, %v2482
  %v2673 = vmul.f32 %v2672, %v2671
  %v2674 = vmul.f32 0.5, %v2673
  %v2675 = vsub.f32 1.5, %v2674
  %v2676 = vmul.f32 %v2671, %v2675
  %vm2677 = vweird.f32 %v2482
  %vm2678 = vweird.f32 %v2671
  %vm2679 = vmor %vm2677, %vm2678
  %v2680 = vsel %vm2679, %v2671, %v2676
  %v2681 = vrsqrt.pop %v2483
  %v2682 = vmul.f32 %v2681, %v2483
  %v2683 = vmul.f32 %v2682, %v2681
  %v2684 = vmul.f32 0.5, %v2683
  %v2685 = vsub.f32 1.5, %v2684
  %v2686 = vmul.f32 %v2681, %v2685
  %vm2687 = vweird.f32 %v2483
  %vm2688 = vweird.f32 %v2681
  %vm2689 = vmor %vm2687, %vm2688
  %v2690 = vsel %vm2689, %v2681, %v2686
  %v2691 = vrsqrt.pop %v2484
  %v2692 = vmul.f32 %v2691, %v2484
  %v2693 = vmul.f32 %v2692, %v2691
  %v2694 = vmul.f32 0.5, %v2693
  %v2695 = vsub.f32 1.5, %v2694
  %v2696 = vmul.f32 %v2691, %v2695
  %vm2697 = vweird.f32 %v2484
  %vm2698 = vweird.f32 %v2691
  %vm2699 = vmor %vm2697, %vm2698
  %v2700 = vsel %vm2699, %v2691, %v2696
  %v2701 = vrsqrt.pop %v2485
  %v2702 = vmul.f32 %v2701, %v2485
  %v2703 = vmul.f32 %v2702, %v2701
  %v2704 = vmul.f32 0.5, %v2703
  %v2705 = vsub.f32 1.5, %v2704
  %v2706 = vmul.f32 %v2701, %v2705
  %vm2707 = vweird.f32 %v2485
  %vm2708 = vweird.f32 %v2701
  %vm2709 = vmor %vm2707, %vm2708
  %v2710 = vsel %vm2709, %v2701, %v2706
  %v2711 = vrsqrt.pop %v2486
  %v2712 = vmul.f32 %v2711, %v2486
  %v2713 = vmul.f32 %v2712, %v2711
  %v2714 = vmul.f32 0.5, %v2713
  %v2715 = vsub.f32 1.5, %v2714
  %v2716 = vmul.f32 %v2711, %v2715
  %vm2717 = vweird.f32 %v2486
  %vm2718 = vweird.f32 %v2711
  %vm2719 = vmor %vm2717, %vm2718
  %v2720 = vsel %vm2719, %v2711, %v2716
  %v2721 = vrsqrt.pop %v2487
  %v2722 = vmul.f32 %v2721, %v2487
  %v2723 = vmul.f32 %v2722, %v2721
  %v2724 = vmul.f32 0.5, %v2723
  %v2725 = vsub.f32 1.5, %v2724
  %v2726 = vmul.f32 %v2721, %v2725
  %vm2727 = vweird.f32 %v2487
  %vm2728 = vweird.f32 %v2721
  %vm2729 = vmor %vm2727, %vm2728
  %v2730 = vsel %vm2729, %v2721, %v2726
  %v2731 = vrsqrt.pop %v2488
  %v2732 = vmul.f32 %v2731, %v2488
  %v2733 = vmul.f32 %v2732, %v2731
  %v2734 = vmul.f32 0.5, %v2733
  %v2735 = vsub.f32 1.5, %v2734
  %v2736 = vmul.f32 %v2731, %v2735
  %vm2737 = vweird.f32 %v2488
  %vm2738 = vweird.f32 %v2731
  %vm2739 = vmor %vm2737, %vm2738
  %v2740 = vsel %vm2739, %v2731, %v2736
  %v2741 = vrsqrt.pop %v2489
  %v2742 = vmul.f32 %v2741, %v2489
  %v2743 = vmul.f32 %v2742, %v2741
  %v2744 = vmul.f32 0.5, %v2743
  %v2745 = vsub.f32 1.5, %v2744
  %v2746 = vmul.f32 %v2741, %v2745
  %vm2747 = vweird.f32 %v2489
  %vm2748 = vweird.f32 %v2741
  %vm2749 = vmor %vm2747, %vm2748
  %v2750 = vsel %vm2749, %v2741, %v2746
  %v2751 = vrsqrt.pop %v2490
  %v2752 = vmul.f32 %v2751, %v2490
  %v2753 = vmul.f32 %v2752, %v2751
  %v2754 = vmul.f32 0.5, %v2753
  %v2755 = vsub.f32 1.5, %v2754
  %v2756 = vmul.f32 %v2751, %v2755
  %vm2757 = vweird.f32 %v2490
  %vm2758 = vweird.f32 %v2751
  %vm2759 = vmor %vm2757, %vm2758
  %v2760 = vsel %vm2759, %v2751, %v2756
  %v2761 = vrsqrt.pop %v2491
  %v2762 = vmul.f32 %v2761, %v2491
  %v2763 = vmul.f32 %v2762, %v2761
  %v2764 = vmul.f32 0.5, %v2763
  %v2765 = vsub.f32 1.5, %v2764
  %v2766 = vmul.f32 %v2761, %v2765
  %vm2767 = vweird.f32 %v2491
  %vm2768 = vweird.f32 %v2761
  %vm2769 = vmor %vm2767, %vm2768
  %v2770 = vsel %vm2769, %v2761, %v2766
  %v2771 = vrsqrt.pop %v2492
  %v2772 = vmul.f32 %v2771, %v2492
  %v2773 = vmul.f32 %v2772, %v2771
  %v2774 = vmul.f32 0.5, %v2773
  %v2775 = vsub.f32 1.5, %v2774
  %v2776 = vmul.f32 %v2771, %v2775
  %vm2777 = vweird.f32 %v2492
  %vm2778 = vweird.f32 %v2771
  %vm2779 = vmor %vm2777, %vm2778
  %v2780 = vsel %vm2779, %v2771, %v2776
  %v2781 = vrsqrt.pop %v2493
  %v2782 = vmul.f32 %v2781, %v2493
  %v2783 = vmul.f32 %v2782, %v2781
  %v2784 = vmul.f32 0.5, %v2783
  %v2785 = vsub.f32 1.5, %v2784
  %v2786 = vmul.f32 %v2781, %v2785
  %vm2787 = vweird.f32 %v2493
  %vm2788 = vweird.f32 %v2781
  %vm2789 = vmor %vm2787, %vm2788
  %v2790 = vsel %vm2789, %v2781, %v2786
  %v2791 = vrsqrt.pop %v2494
  %v2792 = vmul.f32 %v2791, %v2494
  %v2793 = vmul.f32 %v2792, %v2791
  %v2794 = vmul.f32 0.5, %v2793
  %v2795 = vsub.f32 1.5, %v2794
  %v2796 = vmul.f32 %v2791, %v2795
  %vm2797 = vweird.f32 %v2494
  %vm2798 = vweird.f32 %v2791
  %vm2799 = vmor %vm2797, %vm2798
  %v2800 = vsel %vm2799, %v2791, %v2796
  %v2801 = vrsqrt.pop %v2495
  %v2802 = vmul.f32 %v2801, %v2495
  %v2803 = vmul.f32 %v2802, %v2801
  %v2804 = vmul.f32 0.5, %v2803
  %v2805 = vsub.f32 1.5, %v2804
  %v2806 = vmul.f32 %v2801, %v2805
  %vm2807 = vweird.f32 %v2495
  %vm2808 = vweird.f32 %v2801
  %vm2809 = vmor %vm2807, %vm2808
  %v2810 = vsel %vm2809, %v2801, %v2806
  %v2811 = vrsqrt.pop %v2496
  %v2812 = vmul.f32 %v2811, %v2496
  %v2813 = vmul.f32 %v2812, %v2811
  %v2814 = vmul.f32 0.5, %v2813
  %v2815 = vsub.f32 1.5, %v2814
  %v2816 = vmul.f32 %v2811, %v2815
  %vm2817 = vweird.f32 %v2496
  %vm2818 = vweird.f32 %v2811
  %vm2819 = vmor %vm2817, %vm2818
  %v2820 = vsel %vm2819, %v2811, %v2816
  %v2821 = vrsqrt.pop %v2497
  %v2822 = vmul.f32 %v2821, %v2497
  %v2823 = vmul.f32 %v2822, %v2821
  %v2824 = vmul.f32 0.5, %v2823
  %v2825 = vsub.f32 1.5, %v2824
  %v2826 = vmul.f32 %v2821, %v2825
  %vm2827 = vweird.f32 %v2497
  %vm2828 = vweird.f32 %v2821
  %vm2829 = vmor %vm2827, %vm2828
  %v2830 = vsel %vm2829, %v2821, %v2826
  %v2831 = vrsqrt.pop %v2498
  %v2832 = vmul.f32 %v2831, %v2498
  %v2833 = vmul.f32 %v2832, %v2831
  %v2834 = vmul.f32 0.5, %v2833
  %v2835 = vsub.f32 1.5, %v2834
  %v2836 = vmul.f32 %v2831, %v2835
  %vm2837 = vweird.f32 %v2498
  %vm2838 = vweird.f32 %v2831
  %vm2839 = vmor %vm2837, %vm2838
  %v2840 = vsel %vm2839, %v2831, %v2836
  %v2841 = vrsqrt.pop %v2499
  %v2842 = vmul.f32 %v2841, %v2499
  %v2843 = vmul.f32 %v2842, %v2841
  %v2844 = vmul.f32 0.5, %v2843
  %v2845 = vsub.f32 1.5, %v2844
  %v2846 = vmul.f32 %v2841, %v2845
  %vm2847 = vweird.f32 %v2499
  %vm2848 = vweird.f32 %v2841
  %vm2849 = vmor %vm2847, %vm2848
  %v2850 = vsel %vm2849, %v2841, %v2846
  %v2851 = vrsqrt.pop %v2500
  %v2852 = vmul.f32 %v2851, %v2500
  %v2853 = vmul.f32 %v2852, %v2851
  %v2854 = vmul.f32 0.5, %v2853
  %v2855 = vsub.f32 1.5, %v2854
  %v2856 = vmul.f32 %v2851, %v2855
  %vm2857 = vweird.f32 %v2500
  %vm2858 = vweird.f32 %v2851
  %vm2859 = vmor %vm2857, %vm2858
  %v2860 = vsel %vm2859, %v2851, %v2856
  %v2861 = vrsqrt.pop %v2501
  %v2862 = vmul.f32 %v2861, %v2501
  %v2863 = vmul.f32 %v2862, %v2861
  %v2864 = vmul.f32 0.5, %v2863
  %v2865 = vsub.f32 1.5, %v2864
  %v2866 = vmul.f32 %v2861, %v2865
  %vm2867 = vweird.f32 %v2501
  %vm2868 = vweird.f32 %v2861
  %vm2869 = vmor %vm2867, %vm2868
  %v2870 = vsel %vm2869, %v2861, %v2866
  %v2871 = vrsqrt.pop %v2502
  %v2872 = vmul.f32 %v2871, %v2502
  %v2873 = vmul.f32 %v2872, %v2871
  %v2874 = vmul.f32 0.5, %v2873
  %v2875 = vsub.f32 1.5, %v2874
  %v2876 = vmul.f32 %v2871, %v2875
  %vm2877 = vweird.f32 %v2502
  %vm2878 = vweird.f32 %v2871
  %vm2879 = vmor %vm2877, %vm2878
  %v2880 = vsel %vm2879, %v2871, %v2876
  %v2881 = vrsqrt.pop %v2503
  %v2882 = vmul.f32 %v2881, %v2503
  %v2883 = vmul.f32 %v2882, %v2881
  %v2884 = vmul.f32 0.5, %v2883
  %v2885 = vsub.f32 1.5, %v2884
  %v2886 = vmul.f32 %v2881, %v2885
  %vm2887 = vweird.f32 %v2503
  %vm2888 = vweird.f32 %v2881
  %vm2889 = vmor %vm2887, %vm2888
  %v2890 = vsel %vm2889, %v2881, %v2886
  %v2891 = vrsqrt.pop %v2504
  %v2892 = vmul.f32 %v2891, %v2504
  %v2893 = vmul.f32 %v2892, %v2891
  %v2894 = vmul.f32 0.5, %v2893
  %v2895 = vsub.f32 1.5, %v2894
  %v2896 = vmul.f32 %v2891, %v2895
  %vm2897 = vweird.f32 %v2504
  %vm2898 = vweird.f32 %v2891
  %vm2899 = vmor %vm2897, %vm2898
  %v2900 = vsel %vm2899, %v2891, %v2896
  %v2901 = vrsqrt.pop %v2505
  %v2902 = vmul.f32 %v2901, %v2505
  %v2903 = vmul.f32 %v2902, %v2901
  %v2904 = vmul.f32 0.5, %v2903
  %v2905 = vsub.f32 1.5, %v2904
  %v2906 = vmul.f32 %v2901, %v2905
  %vm2907 = vweird.f32 %v2505
  %vm2908 = vweird.f32 %v2901
  %vm2909 = vmor %vm2907, %vm2908
  %v2910 = vsel %vm2909, %v2901, %v2906
  %v2911 = vrsqrt.pop %v2506
  %v2912 = vmul.f32 %v2911, %v2506
  %v2913 = vmul.f32 %v2912, %v2911
  %v2914 = vmul.f32 0.5, %v2913
  %v2915 = vsub.f32 1.5, %v2914
  %v2916 = vmul.f32 %v2911, %v2915
  %vm2917 = vweird.f32 %v2506
  %vm2918 = vweird.f32 %v2911
  %vm2919 = vmor %vm2917, %vm2918
  %v2920 = vsel %vm2919, %v2911, %v2916
  %v2921 = vrsqrt.pop %v2507
  %v2922 = vmul.f32 %v2921, %v2507
  %v2923 = vmul.f32 %v2922, %v2921
  %v2924 = vmul.f32 0.5, %v2923
  %v2925 = vsub.f32 1.5, %v2924
  %v2926 = vmul.f32 %v2921, %v2925
  %vm2927 = vweird.f32 %v2507
  %vm2928 = vweird.f32 %v2921
  %vm2929 = vmor %vm2927, %vm2928
  %v2930 = vsel %vm2929, %v2921, %v2926
  %v2931 = vrsqrt.pop %v2508
  %v2932 = vmul.f32 %v2931, %v2508
  %v2933 = vmul.f32 %v2932, %v2931
  %v2934 = vmul.f32 0.5, %v2933
  %v2935 = vsub.f32 1.5, %v2934
  %v2936 = vmul.f32 %v2931, %v2935
  %vm2937 = vweird.f32 %v2508
  %vm2938 = vweird.f32 %v2931
  %vm2939 = vmor %vm2937, %vm2938
  %v2940 = vsel %vm2939, %v2931, %v2936
  %v2941 = vrsqrt.pop %v2509
  %v2942 = vmul.f32 %v2941, %v2509
  %v2943 = vmul.f32 %v2942, %v2941
  %v2944 = vmul.f32 0.5, %v2943
  %v2945 = vsub.f32 1.5, %v2944
  %v2946 = vmul.f32 %v2941, %v2945
  %vm2947 = vweird.f32 %v2509
  %vm2948 = vweird.f32 %v2941
  %vm2949 = vmor %vm2947, %vm2948
  %v2950 = vsel %vm2949, %v2941, %v2946
  %v2951 = vrsqrt.pop %v2510
  %v2952 = vmul.f32 %v2951, %v2510
  %v2953 = vmul.f32 %v2952, %v2951
  %v2954 = vmul.f32 0.5, %v2953
  %v2955 = vsub.f32 1.5, %v2954
  %v2956 = vmul.f32 %v2951, %v2955
  %vm2957 = vweird.f32 %v2510
  %vm2958 = vweird.f32 %v2951
  %vm2959 = vmor %vm2957, %vm2958
  %v2960 = vsel %vm2959, %v2951, %v2956
  %v2961 = vrsqrt.pop %v2511
  %v2962 = vmul.f32 %v2961, %v2511
  %v2963 = vmul.f32 %v2962, %v2961
  %v2964 = vmul.f32 0.5, %v2963
  %v2965 = vsub.f32 1.5, %v2964
  %v2966 = vmul.f32 %v2961, %v2965
  %vm2967 = vweird.f32 %v2511
  %vm2968 = vweird.f32 %v2961
  %vm2969 = vmor %vm2967, %vm2968
  %v2970 = vsel %vm2969, %v2961, %v2966
  %v2971 = vrsqrt.pop %v2512
  %v2972 = vmul.f32 %v2971, %v2512
  %v2973 = vmul.f32 %v2972, %v2971
  %v2974 = vmul.f32 0.5, %v2973
  %v2975 = vsub.f32 1.5, %v2974
  %v2976 = vmul.f32 %v2971, %v2975
  %vm2977 = vweird.f32 %v2512
  %vm2978 = vweird.f32 %v2971
  %vm2979 = vmor %vm2977, %vm2978
  %v2980 = vsel %vm2979, %v2971, %v2976
  %v2981 = vrsqrt.pop %v2513
  %v2982 = vmul.f32 %v2981, %v2513
  %v2983 = vmul.f32 %v2982, %v2981
  %v2984 = vmul.f32 0.5, %v2983
  %v2985 = vsub.f32 1.5, %v2984
  %v2986 = vmul.f32 %v2981, %v2985
  %vm2987 = vweird.f32 %v2513
  %vm2988 = vweird.f32 %v2981
  %vm2989 = vmor %vm2987, %vm2988
  %v2990 = vsel %vm2989, %v2981, %v2986
  %v2991 = vrsqrt.pop %v2514
  %v2992 = vmul.f32 %v2991, %v2514
  %v2993 = vmul.f32 %v2992, %v2991
  %v2994 = vmul.f32 0.5, %v2993
  %v2995 = vsub.f32 1.5, %v2994
  %v2996 = vmul.f32 %v2991, %v2995
  %vm2997 = vweird.f32 %v2514
  %vm2998 = vweird.f32 %v2991
  %vm2999 = vmor %vm2997, %vm2998
  %v3000 = vsel %vm2999, %v2991, %v2996
  %v3001 = vrsqrt.pop %v2515
  %v3002 = vmul.f32 %v3001, %v2515
  %v3003 = vmul.f32 %v3002, %v3001
  %v3004 = vmul.f32 0.5, %v3003
  %v3005 = vsub.f32 1.5, %v3004
  %v3006 = vmul.f32 %v3001, %v3005
  %vm3007 = vweird.f32 %v2515
  %vm3008 = vweird.f32 %v3001
  %vm3009 = vmor %vm3007, %vm3008
  %v3010 = vsel %vm3009, %v3001, %v3006
  %v3011 = vrsqrt.pop %v2516
  %v3012 = vmul.f32 %v3011, %v2516
  %v3013 = vmul.f32 %v3012, %v3011
  %v3014 = vmul.f32 0.5, %v3013
  %v3015 = vsub.f32 1.5, %v3014
  %v3016 = vmul.f32 %v3011, %v3015
  %vm3017 = vweird.f32 %v2516
  %vm3018 = vweird.f32 %v3011
  %vm3019 = vmor %vm3017, %vm3018
  %v3020 = vsel %vm3019, %v3011, %v3016
  %v3021 = vrsqrt.pop %v2517
  %v3022 = vmul.f32 %v3021, %v2517
  %v3023 = vmul.f32 %v3022, %v3021
  %v3024 = vmul.f32 0.5, %v3023
  %v3025 = vsub.f32 1.5, %v3024
  %v3026 = vmul.f32 %v3021, %v3025
  %vm3027 = vweird.f32 %v2517
  %vm3028 = vweird.f32 %v3021
  %vm3029 = vmor %vm3027, %vm3028
  %v3030 = vsel %vm3029, %v3021, %v3026
  %v3031 = vrsqrt.pop %v2518
  %v3032 = vmul.f32 %v3031, %v2518
  %v3033 = vmul.f32 %v3032, %v3031
  %v3034 = vmul.f32 0.5, %v3033
  %v3035 = vsub.f32 1.5, %v3034
  %v3036 = vmul.f32 %v3031, %v3035
  %vm3037 = vweird.f32 %v2518
  %vm3038 = vweird.f32 %v3031
  %vm3039 = vmor %vm3037, %vm3038
  %v3040 = vsel %vm3039, %v3031, %v3036
  %v3041 = vrsqrt.pop %v2519
  %v3042 = vmul.f32 %v3041, %v2519
  %v3043 = vmul.f32 %v3042, %v3041
  %v3044 = vmul.f32 0.5, %v3043
  %v3045 = vsub.f32 1.5, %v3044
  %v3046 = vmul.f32 %v3041, %v3045
  %vm3047 = vweird.f32 %v2519
  %vm3048 = vweird.f32 %v3041
  %vm3049 = vmor %vm3047, %vm3048
  %v3050 = vsel %vm3049, %v3041, %v3046
  %v3051 = vrsqrt.pop %v2520
  %v3052 = vmul.f32 %v3051, %v2520
  %v3053 = vmul.f32 %v3052, %v3051
  %v3054 = vmul.f32 0.5, %v3053
  %v3055 = vsub.f32 1.5, %v3054
  %v3056 = vmul.f32 %v3051, %v3055
  %vm3057 = vweird.f32 %v2520
  %vm3058 = vweird.f32 %v3051
  %vm3059 = vmor %vm3057, %vm3058
  %v3060 = vsel %vm3059, %v3051, %v3056
  %v3061 = vrsqrt.pop %v2521
  %v3062 = vmul.f32 %v3061, %v2521
  %v3063 = vmul.f32 %v3062, %v3061
  %v3064 = vmul.f32 0.5, %v3063
  %v3065 = vsub.f32 1.5, %v3064
  %v3066 = vmul.f32 %v3061, %v3065
  %vm3067 = vweird.f32 %v2521
  %vm3068 = vweird.f32 %v3061
  %vm3069 = vmor %vm3067, %vm3068
  %v3070 = vsel %vm3069, %v3061, %v3066
  %v3071 = vrsqrt.pop %v2522
  %v3072 = vmul.f32 %v3071, %v2522
  %v3073 = vmul.f32 %v3072, %v3071
  %v3074 = vmul.f32 0.5, %v3073
  %v3075 = vsub.f32 1.5, %v3074
  %v3076 = vmul.f32 %v3071, %v3075
  %vm3077 = vweird.f32 %v2522
  %vm3078 = vweird.f32 %v3071
  %vm3079 = vmor %vm3077, %vm3078
  %v3080 = vsel %vm3079, %v3071, %v3076
  %v3081 = vrsqrt.pop %v2523
  %v3082 = vmul.f32 %v3081, %v2523
  %v3083 = vmul.f32 %v3082, %v3081
  %v3084 = vmul.f32 0.5, %v3083
  %v3085 = vsub.f32 1.5, %v3084
  %v3086 = vmul.f32 %v3081, %v3085
  %vm3087 = vweird.f32 %v2523
  %vm3088 = vweird.f32 %v3081
  %vm3089 = vmor %vm3087, %vm3088
  %v3090 = vsel %vm3089, %v3081, %v3086
  %v3091 = vrsqrt.pop %v2524
  %v3092 = vmul.f32 %v3091, %v2524
  %v3093 = vmul.f32 %v3092, %v3091
  %v3094 = vmul.f32 0.5, %v3093
  %v3095 = vsub.f32 1.5, %v3094
  %v3096 = vmul.f32 %v3091, %v3095
  %vm3097 = vweird.f32 %v2524
  %vm3098 = vweird.f32 %v3091
  %vm3099 = vmor %vm3097, %vm3098
  %v3100 = vsel %vm3099, %v3091, %v3096
  %v3101 = vrsqrt.pop %v2525
  %v3102 = vmul.f32 %v3101, %v2525
  %v3103 = vmul.f32 %v3102, %v3101
  %v3104 = vmul.f32 0.5, %v3103
  %v3105 = vsub.f32 1.5, %v3104
  %v3106 = vmul.f32 %v3101, %v3105
  %vm3107 = vweird.f32 %v2525
  %vm3108 = vweird.f32 %v3101
  %vm3109 = vmor %vm3107, %vm3108
  %v3110 = vsel %vm3109, %v3101, %v3106
  %v3111 = vrsqrt.pop %v2526
  %v3112 = vmul.f32 %v3111, %v2526
  %v3113 = vmul.f32 %v3112, %v3111
  %v3114 = vmul.f32 0.5, %v3113
  %v3115 = vsub.f32 1.5, %v3114
  %v3116 = vmul.f32 %v3111, %v3115
  %vm3117 = vweird.f32 %v2526
  %vm3118 = vweird.f32 %v3111
  %vm3119 = vmor %vm3117, %vm3118
  %v3120 = vsel %vm3119, %v3111, %v3116
  %v3121 = vrsqrt.pop %v2527
  %v3122 = vmul.f32 %v3121, %v2527
  %v3123 = vmul.f32 %v3122, %v3121
  %v3124 = vmul.f32 0.5, %v3123
  %v3125 = vsub.f32 1.5, %v3124
  %v3126 = vmul.f32 %v3121, %v3125
  %vm3127 = vweird.f32 %v2527
  %vm3128 = vweird.f32 %v3121
  %vm3129 = vmor %vm3127, %vm3128
  %v3130 = vsel %vm3129, %v3121, %v3126
  %v3131 = vrsqrt.pop %v2528
  %v3132 = vmul.f32 %v3131, %v2528
  %v3133 = vmul.f32 %v3132, %v3131
  %v3134 = vmul.f32 0.5, %v3133
  %v3135 = vsub.f32 1.5, %v3134
  %v3136 = vmul.f32 %v3131, %v3135
  %vm3137 = vweird.f32 %v2528
  %vm3138 = vweird.f32 %v3131
  %vm3139 = vmor %vm3137, %vm3138
  %v3140 = vsel %vm3139, %v3131, %v3136
  %v3141 = vrsqrt.pop %v2529
  %v3142 = vmul.f32 %v3141, %v2529
  %v3143 = vmul.f32 %v3142, %v3141
  %v3144 = vmul.f32 0.5, %v3143
  %v3145 = vsub.f32 1.5, %v3144
  %v3146 = vmul.f32 %v3141, %v3145
  %vm3147 = vweird.f32 %v2529
  %vm3148 = vweird.f32 %v3141
  %vm3149 = vmor %vm3147, %vm3148
  %v3150 = vsel %vm3149, %v3141, %v3146
  %v3151 = vrsqrt.pop %v2530
  %v3152 = vmul.f32 %v3151, %v2530
  %v3153 = vmul.f32 %v3152, %v3151
  %v3154 = vmul.f32 0.5, %v3153
  %v3155 = vsub.f32 1.5, %v3154
  %v3156 = vmul.f32 %v3151, %v3155
  %vm3157 = vweird.f32 %v2530
  %vm3158 = vweird.f32 %v3151
  %vm3159 = vmor %vm3157, %vm3158
  %v3160 = vsel %vm3159, %v3151, %v3156
  %v3161 = vrsqrt.pop %v2531
  %v3162 = vmul.f32 %v3161, %v2531
  %v3163 = vmul.f32 %v3162, %v3161
  %v3164 = vmul.f32 0.5, %v3163
  %v3165 = vsub.f32 1.5, %v3164
  %v3166 = vmul.f32 %v3161, %v3165
  %vm3167 = vweird.f32 %v2531
  %vm3168 = vweird.f32 %v3161
  %vm3169 = vmor %vm3167, %vm3168
  %v3170 = vsel %vm3169, %v3161, %v3166
  %v3171 = vrsqrt.pop %v2532
  %v3172 = vmul.f32 %v3171, %v2532
  %v3173 = vmul.f32 %v3172, %v3171
  %v3174 = vmul.f32 0.5, %v3173
  %v3175 = vsub.f32 1.5, %v3174
  %v3176 = vmul.f32 %v3171, %v3175
  %vm3177 = vweird.f32 %v2532
  %vm3178 = vweird.f32 %v3171
  %vm3179 = vmor %vm3177, %vm3178
  %v3180 = vsel %vm3179, %v3171, %v3176
  %v3181 = vrsqrt.pop %v2533
  %v3182 = vmul.f32 %v3181, %v2533
  %v3183 = vmul.f32 %v3182, %v3181
  %v3184 = vmul.f32 0.5, %v3183
  %v3185 = vsub.f32 1.5, %v3184
  %v3186 = vmul.f32 %v3181, %v3185
  %vm3187 = vweird.f32 %v2533
  %vm3188 = vweird.f32 %v3181
  %vm3189 = vmor %vm3187, %vm3188
  %v3190 = vsel %vm3189, %v3181, %v3186
  %v3191 = vrsqrt.pop %v2534
  %v3192 = vmul.f32 %v3191, %v2534
  %v3193 = vmul.f32 %v3192, %v3191
  %v3194 = vmul.f32 0.5, %v3193
  %v3195 = vsub.f32 1.5, %v3194
  %v3196 = vmul.f32 %v3191, %v3195
  %vm3197 = vweird.f32 %v2534
  %vm3198 = vweird.f32 %v3191
  %vm3199 = vmor %vm3197, %vm3198
  %v3200 = vsel %vm3199, %v3191, %v3196
  %v3201 = vrsqrt.pop %v2535
  %v3202 = vmul.f32 %v3201, %v2535
  %v3203 = vmul.f32 %v3202, %v3201
  %v3204 = vmul.f32 0.5, %v3203
  %v3205 = vsub.f32 1.5, %v3204
  %v3206 = vmul.f32 %v3201, %v3205
  %vm3207 = vweird.f32 %v2535
  %vm3208 = vweird.f32 %v3201
  %vm3209 = vmor %vm3207, %vm3208
  %v3210 = vsel %vm3209, %v3201, %v3206
  %v3211 = vrsqrt.pop %v2536
  %v3212 = vmul.f32 %v3211, %v2536
  %v3213 = vmul.f32 %v3212, %v3211
  %v3214 = vmul.f32 0.5, %v3213
  %v3215 = vsub.f32 1.5, %v3214
  %v3216 = vmul.f32 %v3211, %v3215
  %vm3217 = vweird.f32 %v2536
  %vm3218 = vweird.f32 %v3211
  %vm3219 = vmor %vm3217, %vm3218
  %v3220 = vsel %vm3219, %v3211, %v3216
  %v3221 = vrsqrt.pop %v2537
  %v3222 = vmul.f32 %v3221, %v2537
  %v3223 = vmul.f32 %v3222, %v3221
  %v3224 = vmul.f32 0.5, %v3223
  %v3225 = vsub.f32 1.5, %v3224
  %v3226 = vmul.f32 %v3221, %v3225
  %vm3227 = vweird.f32 %v2537
  %vm3228 = vweird.f32 %v3221
  %vm3229 = vmor %vm3227, %vm3228
  %v3230 = vsel %vm3229, %v3221, %v3226
  %v3231 = vrsqrt.pop %v2538
  %v3232 = vmul.f32 %v3231, %v2538
  %v3233 = vmul.f32 %v3232, %v3231
  %v3234 = vmul.f32 0.5, %v3233
  %v3235 = vsub.f32 1.5, %v3234
  %v3236 = vmul.f32 %v3231, %v3235
  %vm3237 = vweird.f32 %v2538
  %vm3238 = vweird.f32 %v3231
  %vm3239 = vmor %vm3237, %vm3238
  %v3240 = vsel %vm3239, %v3231, %v3236
  %v3241 = vrsqrt.pop %v2539
  %v3242 = vmul.f32 %v3241, %v2539
  %v3243 = vmul.f32 %v3242, %v3241
  %v3244 = vmul.f32 0.5, %v3243
  %v3245 = vsub.f32 1.5, %v3244
  %v3246 = vmul.f32 %v3241, %v3245
  %vm3247 = vweird.f32 %v2539
  %vm3248 = vweird.f32 %v3241
  %vm3249 = vmor %vm3247, %vm3248
  %v3250 = vsel %vm3249, %v3241, %v3246
  %v3251 = vrsqrt.pop %v2540
  %v3252 = vmul.f32 %v3251, %v2540
  %v3253 = vmul.f32 %v3252, %v3251
  %v3254 = vmul.f32 0.5, %v3253
  %v3255 = vsub.f32 1.5, %v3254
  %v3256 = vmul.f32 %v3251, %v3255
  %vm3257 = vweird.f32 %v2540
  %vm3258 = vweird.f32 %v3251
  %vm3259 = vmor %vm3257, %vm3258
  %v3260 = vsel %vm3259, %v3251, %v3256
  %v3261 = vrsqrt.pop %v2541
  %v3262 = vmul.f32 %v3261, %v2541
  %v3263 = vmul.f32 %v3262, %v3261
  %v3264 = vmul.f32 0.5, %v3263
  %v3265 = vsub.f32 1.5, %v3264
  %v3266 = vmul.f32 %v3261, %v3265
  %vm3267 = vweird.f32 %v2541
  %vm3268 = vweird.f32 %v3261
  %vm3269 = vmor %vm3267, %vm3268
  %v3270 = vsel %vm3269, %v3261, %v3266
  %v3271 = vrsqrt.pop %v2542
  %v3272 = vmul.f32 %v3271, %v2542
  %v3273 = vmul.f32 %v3272, %v3271
  %v3274 = vmul.f32 0.5, %v3273
  %v3275 = vsub.f32 1.5, %v3274
  %v3276 = vmul.f32 %v3271, %v3275
  %vm3277 = vweird.f32 %v2542
  %vm3278 = vweird.f32 %v3271
  %vm3279 = vmor %vm3277, %vm3278
  %v3280 = vsel %vm3279, %v3271, %v3276
  %v3281 = vrsqrt.pop %v2543
  %v3282 = vmul.f32 %v3281, %v2543
  %v3283 = vmul.f32 %v3282, %v3281
  %v3284 = vmul.f32 0.5, %v3283
  %v3285 = vsub.f32 1.5, %v3284
  %v3286 = vmul.f32 %v3281, %v3285
  %vm3287 = vweird.f32 %v2543
  %vm3288 = vweird.f32 %v3281
  %vm3289 = vmor %vm3287, %vm3288
  %v3290 = vsel %vm3289, %v3281, %v3286
  %v3291 = vrsqrt.pop %v2544
  %v3292 = vmul.f32 %v3291, %v2544
  %v3293 = vmul.f32 %v3292, %v3291
  %v3294 = vmul.f32 0.5, %v3293
  %v3295 = vsub.f32 1.5, %v3294
  %v3296 = vmul.f32 %v3291, %v3295
  %vm3297 = vweird.f32 %v2544
  %vm3298 = vweird.f32 %v3291
  %vm3299 = vmor %vm3297, %vm3298
  %v3300 = vsel %vm3299, %v3291, %v3296
  %v3301 = vrsqrt.pop %v2545
  %v3302 = vmul.f32 %v3301, %v2545
  %v3303 = vmul.f32 %v3302, %v3301
  %v3304 = vmul.f32 0.5, %v3303
  %v3305 = vsub.f32 1.5, %v3304
  %v3306 = vmul.f32 %v3301, %v3305
  %vm3307 = vweird.f32 %v2545
  %vm3308 = vweird.f32 %v3301
  %vm3309 = vmor %vm3307, %vm3308
  %v3310 = vsel %vm3309, %v3301, %v3306
  %v3311 = vrsqrt.pop %v2546
  %v3312 = vmul.f32 %v3311, %v2546
  %v3313 = vmul.f32 %v3312, %v3311
  %v3314 = vmul.f32 0.5, %v3313
  %v3315 = vsub.f32 1.5, %v3314
  %v3316 = vmul.f32 %v3311, %v3315
  %vm3317 = vweird.f32 %v2546
  %vm3318 = vweird.f32 %v3311
  %vm3319 = vmor %vm3317, %vm3318
  %v3320 = vsel %vm3319, %v3311, %v3316
  %v3321 = vrsqrt.pop %v2547
  %v3322 = vmul.f32 %v3321, %v2547
  %v3323 = vmul.f32 %v3322, %v3321
  %v3324 = vmul.f32 0.5, %v3323
  %v3325 = vsub.f32 1.5, %v3324
  %v3326 = vmul.f32 %v3321, %v3325
  %vm3327 = vweird.f32 %v2547
  %vm3328 = vweird.f32 %v3321
  %vm3329 = vmor %vm3327, %vm3328
  %v3330 = vsel %vm3329, %v3321, %v3326
  %v3331 = vrsqrt.pop %v2548
  %v3332 = vmul.f32 %v3331, %v2548
  %v3333 = vmul.f32 %v3332, %v3331
  %v3334 = vmul.f32 0.5, %v3333
  %v3335 = vsub.f32 1.5, %v3334
  %v3336 = vmul.f32 %v3331, %v3335
  %vm3337 = vweird.f32 %v2548
  %vm3338 = vweird.f32 %v3331
  %vm3339 = vmor %vm3337, %vm3338
  %v3340 = vsel %vm3339, %v3331, %v3336
  %v3341 = vrsqrt.pop %v2549
  %v3342 = vmul.f32 %v3341, %v2549
  %v3343 = vmul.f32 %v3342, %v3341
  %v3344 = vmul.f32 0.5, %v3343
  %v3345 = vsub.f32 1.5, %v3344
  %v3346 = vmul.f32 %v3341, %v3345
  %vm3347 = vweird.f32 %v2549
  %vm3348 = vweird.f32 %v3341
  %vm3349 = vmor %vm3347, %vm3348
  %v3350 = vsel %vm3349, %v3341, %v3346
  %v3351 = vrsqrt.pop %v2550
  %v3352 = vmul.f32 %v3351, %v2550
  %v3353 = vmul.f32 %v3352, %v3351
  %v3354 = vmul.f32 0.5, %v3353
  %v3355 = vsub.f32 1.5, %v3354
  %v3356 = vmul.f32 %v3351, %v3355
  %vm3357 = vweird.f32 %v2550
  %vm3358 = vweird.f32 %v3351
  %vm3359 = vmor %vm3357, %vm3358
  %v3360 = vsel %vm3359, %v3351, %v3356
  %v3361 = vrsqrt.pop %v2551
  %v3362 = vmul.f32 %v3361, %v2551
  %v3363 = vmul.f32 %v3362, %v3361
  %v3364 = vmul.f32 0.5, %v3363
  %v3365 = vsub.f32 1.5, %v3364
  %v3366 = vmul.f32 %v3361, %v3365
  %vm3367 = vweird.f32 %v2551
  %vm3368 = vweird.f32 %v3361
  %vm3369 = vmor %vm3367, %vm3368
  %v3370 = vsel %vm3369, %v3361, %v3366
  %v3371 = vrsqrt.pop %v2552
  %v3372 = vmul.f32 %v3371, %v2552
  %v3373 = vmul.f32 %v3372, %v3371
  %v3374 = vmul.f32 0.5, %v3373
  %v3375 = vsub.f32 1.5, %v3374
  %v3376 = vmul.f32 %v3371, %v3375
  %vm3377 = vweird.f32 %v2552
  %vm3378 = vweird.f32 %v3371
  %vm3379 = vmor %vm3377, %vm3378
  %v3380 = vsel %vm3379, %v3371, %v3376
  %v3381 = vrsqrt.pop %v2553
  %v3382 = vmul.f32 %v3381, %v2553
  %v3383 = vmul.f32 %v3382, %v3381
  %v3384 = vmul.f32 0.5, %v3383
  %v3385 = vsub.f32 1.5, %v3384
  %v3386 = vmul.f32 %v3381, %v3385
  %vm3387 = vweird.f32 %v2553
  %vm3388 = vweird.f32 %v3381
  %vm3389 = vmor %vm3387, %vm3388
  %v3390 = vsel %vm3389, %v3381, %v3386
  %v3391 = vrsqrt.pop %v2554
  %v3392 = vmul.f32 %v3391, %v2554
  %v3393 = vmul.f32 %v3392, %v3391
  %v3394 = vmul.f32 0.5, %v3393
  %v3395 = vsub.f32 1.5, %v3394
  %v3396 = vmul.f32 %v3391, %v3395
  %vm3397 = vweird.f32 %v2554
  %vm3398 = vweird.f32 %v3391
  %vm3399 = vmor %vm3397, %vm3398
  %v3400 = vsel %vm3399, %v3391, %v3396
  %v3401 = vrsqrt.pop %v2555
  %v3402 = vmul.f32 %v3401, %v2555
  %v3403 = vmul.f32 %v3402, %v3401
  %v3404 = vmul.f32 0.5, %v3403
  %v3405 = vsub.f32 1.5, %v3404
  %v3406 = vmul.f32 %v3401, %v3405
  %vm3407 = vweird.f32 %v2555
  %vm3408 = vweird.f32 %v3401
  %vm3409 = vmor %vm3407, %vm3408
  %v3410 = vsel %vm3409, %v3401, %v3406
  %v3411 = vrsqrt.pop %v2556
  %v3412 = vmul.f32 %v3411, %v2556
  %v3413 = vmul.f32 %v3412, %v3411
  %v3414 = vmul.f32 0.5, %v3413
  %v3415 = vsub.f32 1.5, %v3414
  %v3416 = vmul.f32 %v3411, %v3415
  %vm3417 = vweird.f32 %v2556
  %vm3418 = vweird.f32 %v3411
  %vm3419 = vmor %vm3417, %vm3418
  %v3420 = vsel %vm3419, %v3411, %v3416
  %v3421 = vrsqrt.pop %v2557
  %v3422 = vmul.f32 %v3421, %v2557
  %v3423 = vmul.f32 %v3422, %v3421
  %v3424 = vmul.f32 0.5, %v3423
  %v3425 = vsub.f32 1.5, %v3424
  %v3426 = vmul.f32 %v3421, %v3425
  %vm3427 = vweird.f32 %v2557
  %vm3428 = vweird.f32 %v3421
  %vm3429 = vmor %vm3427, %vm3428
  %v3430 = vsel %vm3429, %v3421, %v3426
  %v3431 = vrsqrt.pop %v2558
  %v3432 = vmul.f32 %v3431, %v2558
  %v3433 = vmul.f32 %v3432, %v3431
  %v3434 = vmul.f32 0.5, %v3433
  %v3435 = vsub.f32 1.5, %v3434
  %v3436 = vmul.f32 %v3431, %v3435
  %vm3437 = vweird.f32 %v2558
  %vm3438 = vweird.f32 %v3431
  %vm3439 = vmor %vm3437, %vm3438
  %v3440 = vsel %vm3439, %v3431, %v3436
  %v3441 = vrsqrt.pop %v2559
  %v3442 = vmul.f32 %v3441, %v2559
  %v3443 = vmul.f32 %v3442, %v3441
  %v3444 = vmul.f32 0.5, %v3443
  %v3445 = vsub.f32 1.5, %v3444
  %v3446 = vmul.f32 %v3441, %v3445
  %vm3447 = vweird.f32 %v2559
  %vm3448 = vweird.f32 %v3441
  %vm3449 = vmor %vm3447, %vm3448
  %v3450 = vsel %vm3449, %v3441, %v3446
  %v3451 = vrsqrt.pop %v2560
  %v3452 = vmul.f32 %v3451, %v2560
  %v3453 = vmul.f32 %v3452, %v3451
  %v3454 = vmul.f32 0.5, %v3453
  %v3455 = vsub.f32 1.5, %v3454
  %v3456 = vmul.f32 %v3451, %v3455
  %vm3457 = vweird.f32 %v2560
  %vm3458 = vweird.f32 %v3451
  %vm3459 = vmor %vm3457, %vm3458
  %v3460 = vsel %vm3459, %v3451, %v3456
  %v3461 = vmul.f32 %v2570, %v2381
  %v3462 = vmul.f32 %v2580, %v2382
  %v3463 = vmul.f32 %v2590, %v2383
  %v3464 = vmul.f32 %v2600, %v2384
  %v3465 = vmul.f32 %v2610, %v2385
  %v3466 = vmul.f32 %v2620, %v2386
  %v3467 = vmul.f32 %v2630, %v2387
  %v3468 = vmul.f32 %v2640, %v2388
  %v3469 = vmul.f32 %v2650, %v2389
  %v3470 = vmul.f32 %v2660, %v2390
  %v3471 = vmul.f32 %v2670, %v2391
  %v3472 = vmul.f32 %v2680, %v2392
  %v3473 = vmul.f32 %v2690, %v2393
  %v3474 = vmul.f32 %v2700, %v2394
  %v3475 = vmul.f32 %v2710, %v2395
  %v3476 = vmul.f32 %v2720, %v2396
  %v3477 = vmul.f32 %v2730, %v2397
  %v3478 = vmul.f32 %v2740, %v2398
  %v3479 = vmul.f32 %v2750, %v2399
  %v3480 = vmul.f32 %v2760, %v2400
  %v3481 = vmul.f32 %v2770, %v2401
  %v3482 = vmul.f32 %v2780, %v2402
  %v3483 = vmul.f32 %v2790, %v2403
  %v3484 = vmul.f32 %v2800, %v2404
  %v3485 = vmul.f32 %v2810, %v2405
  %v3486 = vmul.f32 %v2820, %v2406
  %v3487 = vmul.f32 %v2830, %v2407
  %v3488 = vmul.f32 %v2840, %v2408
  %v3489 = vmul.f32 %v2850, %v2409
  %v3490 = vmul.f32 %v2860, %v2410
  %v3491 = vmul.f32 %v2870, %v2411
  %v3492 = vmul.f32 %v2880, %v2412
  %v3493 = vmul.f32 %v2890, %v2413
  %v3494 = vmul.f32 %v2900, %v2414
  %v3495 = vmul.f32 %v2910, %v2415
  %v3496 = vmul.f32 %v2920, %v2416
  %v3497 = vmul.f32 %v2930, %v2417
  %v3498 = vmul.f32 %v2940, %v2418
  %v3499 = vmul.f32 %v2950, %v2419
  %v3500 = vmul.f32 %v2960, %v2420
  %v3501 = vmul.f32 %v2970, %v2421
  %v3502 = vmul.f32 %v2980, %v2422
  %v3503 = vmul.f32 %v2990, %v2423
  %v3504 = vmul.f32 %v3000, %v2424
  %v3505 = vmul.f32 %v3010, %v2425
  %v3506 = vmul.f32 %v3020, %v2426
  %v3507 = vmul.f32 %v3030, %v2427
  %v3508 = vmul.f32 %v3040, %v2428
  %v3509 = vmul.f32 %v3050, %v2429
  %v3510 = vmul.f32 %v3060, %v2430
  %v3511 = vmul.f32 %v3070, %v2431
  %v3512 = vmul.f32 %v3080, %v2432
  %v3513 = vmul.f32 %v3090, %v2433
  %v3514 = vmul.f32 %v3100, %v2434
  %v3515 = vmul.f32 %v3110, %v2435
  %v3516 = vmul.f32 %v3120, %v2436
  %v3517 = vmul.f32 %v3130, %v2437
  %v3518 = vmul.f32 %v3140, %v2438
  %v3519 = vmul.f32 %v3150, %v2439
  %v3520 = vmul.f32 %v3160, %v2440
  %v3521 = vmul.f32 %v3170, %v2441
  %v3522 = vmul.f32 %v3180, %v2442
  %v3523 = vmul.f32 %v3190, %v2443
  %v3524 = vmul.f32 %v3200, %v2444
  %v3525 = vmul.f32 %v3210, %v2445
  %v3526 = vmul.f32 %v3220, %v2446
  %v3527 = vmul.f32 %v3230, %v2447
  %v3528 = vmul.f32 %v3240, %v2448
  %v3529 = vmul.f32 %v3250, %v2449
  %v3530 = vmul.f32 %v3260, %v2450
  %v3531 = vmul.f32 %v3270, %v2451
  %v3532 = vmul.f32 %v3280, %v2452
  %v3533 = vmul.f32 %v3290, %v2453
  %v3534 = vmul.f32 %v3300, %v2454
  %v3535 = vmul.f32 %v3310, %v2455
  %v3536 = vmul.f32 %v3320, %v2456
  %v3537 = vmul.f32 %v3330, %v2457
  %v3538 = vmul.f32 %v3340, %v2458
  %v3539 = vmul.f32 %v3350, %v2459
  %v3540 = vmul.f32 %v3360, %v2460
  %v3541 = vmul.f32 %v3370, %v2461
  %v3542 = vmul.f32 %v3380, %v2462
  %v3543 = vmul.f32 %v3390, %v2463
  %v3544 = vmul.f32 %v3400, %v2464
  %v3545 = vmul.f32 %v3410, %v2465
  %v3546 = vmul.f32 %v3420, %v2466
  %v3547 = vmul.f32 %v3430, %v2467
  %v3548 = vmul.f32 %v3440, %v2468
  %v3549 = vmul.f32 %v3450, %v2469
  %v3550 = vmul.f32 %v3460, %v2470
  %v3551 = vmul.f32 %v1931, %v3461
  %v3552 = vmul.f32 %v1932, %v3462
  %v3553 = vmul.f32 %v1933, %v3463
  %v3554 = vmul.f32 %v1934, %v3464
  %v3555 = vmul.f32 %v1935, %v3465
  %v3556 = vmul.f32 %v1936, %v3466
  %v3557 = vmul.f32 %v1937, %v3467
  %v3558 = vmul.f32 %v1938, %v3468
  %v3559 = vmul.f32 %v1939, %v3469
  %v3560 = vmul.f32 %v1940, %v3470
  %v3561 = vmul.f32 %v1941, %v3471
  %v3562 = vmul.f32 %v1942, %v3472
  %v3563 = vmul.f32 %v1943, %v3473
  %v3564 = vmul.f32 %v1944, %v3474
  %v3565 = vmul.f32 %v1945, %v3475
  %v3566 = vmul.f32 %v1946, %v3476
  %v3567 = vmul.f32 %v1947, %v3477
  %v3568 = vmul.f32 %v1948, %v3478
  %v3569 = vmul.f32 %v1949, %v3479
  %v3570 = vmul.f32 %v1950, %v3480
  %v3571 = vmul.f32 %v1951, %v3481
  %v3572 = vmul.f32 %v1952, %v3482
  %v3573 = vmul.f32 %v1953, %v3483
  %v3574 = vmul.f32 %v1954, %v3484
  %v3575 = vmul.f32 %v1955, %v3485
  %v3576 = vmul.f32 %v1956, %v3486
  %v3577 = vmul.f32 %v1957, %v3487
  %v3578 = vmul.f32 %v1958, %v3488
  %v3579 = vmul.f32 %v1959, %v3489
  %v3580 = vmul.f32 %v1960, %v3490
  %v3581 = vmul.f32 %v1961, %v3491
  %v3582 = vmul.f32 %v1962, %v3492
  %v3583 = vmul.f32 %v1963, %v3493
  %v3584 = vmul.f32 %v1964, %v3494
  %v3585 = vmul.f32 %v1965, %v3495
  %v3586 = vmul.f32 %v1966, %v3496
  %v3587 = vmul.f32 %v1967, %v3497
  %v3588 = vmul.f32 %v1968, %v3498
  %v3589 = vmul.f32 %v1969, %v3499
  %v3590 = vmul.f32 %v1970, %v3500
  %v3591 = vmul.f32 %v1971, %v3501
  %v3592 = vmul.f32 %v1972, %v3502
  %v3593 = vmul.f32 %v1973, %v3503
  %v3594 = vmul.f32 %v1974, %v3504
  %v3595 = vmul.f32 %v1975, %v3505
  %v3596 = vmul.f32 %v1976, %v3506
  %v3597 = vmul.f32 %v1977, %v3507
  %v3598 = vmul.f32 %v1978, %v3508
  %v3599 = vmul.f32 %v1979, %v3509
  %v3600 = vmul.f32 %v1980, %v3510
  %v3601 = vmul.f32 %v1981, %v3511
  %v3602 = vmul.f32 %v1982, %v3512
  %v3603 = vmul.f32 %v1983, %v3513
  %v3604 = vmul.f32 %v1984, %v3514
  %v3605 = vmul.f32 %v1985, %v3515
  %v3606 = vmul.f32 %v1986, %v3516
  %v3607 = vmul.f32 %v1987, %v3517
  %v3608 = vmul.f32 %v1988, %v3518
  %v3609 = vmul.f32 %v1989, %v3519
  %v3610 = vmul.f32 %v1990, %v3520
  %v3611 = vmul.f32 %v1991, %v3521
  %v3612 = vmul.f32 %v1992, %v3522
  %v3613 = vmul.f32 %v1993, %v3523
  %v3614 = vmul.f32 %v1994, %v3524
  %v3615 = vmul.f32 %v1995, %v3525
  %v3616 = vmul.f32 %v1996, %v3526
  %v3617 = vmul.f32 %v1997, %v3527
  %v3618 = vmul.f32 %v1998, %v3528
  %v3619 = vmul.f32 %v1999, %v3529
  %v3620 = vmul.f32 %v2000, %v3530
  %v3621 = vmul.f32 %v2001, %v3531
  %v3622 = vmul.f32 %v2002, %v3532
  %v3623 = vmul.f32 %v2003, %v3533
  %v3624 = vmul.f32 %v2004, %v3534
  %v3625 = vmul.f32 %v2005, %v3535
  %v3626 = vmul.f32 %v2006, %v3536
  %v3627 = vmul.f32 %v2007, %v3537
  %v3628 = vmul.f32 %v2008, %v3538
  %v3629 = vmul.f32 %v2009, %v3539
  %v3630 = vmul.f32 %v2010, %v3540
  %v3631 = vmul.f32 %v2011, %v3541
  %v3632 = vmul.f32 %v2012, %v3542
  %v3633 = vmul.f32 %v2013, %v3543
  %v3634 = vmul.f32 %v2014, %v3544
  %v3635 = vmul.f32 %v2015, %v3545
  %v3636 = vmul.f32 %v2016, %v3546
  %v3637 = vmul.f32 %v2017, %v3547
  %v3638 = vmul.f32 %v2018, %v3548
  %v3639 = vmul.f32 %v2019, %v3549
  %v3640 = vmul.f32 %v2020, %v3550
  %3731 = vrot.lane.b32.xlu0 %v3551, 1
  %v3732 = vpop.permute.xlu0 %3731
  %3733 = vrot.lane.b32.xlu0 %v3552, 1
  %v3734 = vpop.permute.xlu0 %3733
  %3735 = vrot.lane.b32.xlu0 %v3553, 1
  %v3736 = vpop.permute.xlu0 %3735
  %3737 = vrot.lane.b32.xlu0 %v3554, 1
  %v3738 = vpop.permute.xlu0 %3737
  %3739 = vrot.lane.b32.xlu0 %v3555, 1
  %v3740 = vpop.permute.xlu0 %3739
  %3741 = vrot.lane.b32.xlu0 %v3556, 1
  %v3742 = vpop.permute.xlu0 %3741
  %3743 = vrot.lane.b32.xlu0 %v3557, 1
  %v3744 = vpop.permute.xlu0 %3743
  %3745 = vrot.lane.b32.xlu0 %v3558, 1
  %v3746 = vpop.permute.xlu0 %3745
  %3747 = vrot.lane.b32.xlu0 %v3559, 1
  %v3748 = vpop.permute.xlu0 %3747
  %3749 = vrot.lane.b32.xlu0 %v3560, 1
  %v3750 = vpop.permute.xlu0 %3749
  %3751 = vrot.lane.b32.xlu0 %v3561, 1
  %v3752 = vpop.permute.xlu0 %3751
  %3753 = vrot.lane.b32.xlu0 %v3562, 1
  %v3754 = vpop.permute.xlu0 %3753
  %3755 = vrot.lane.b32.xlu0 %v3563, 1
  %v3756 = vpop.permute.xlu0 %3755
  %3757 = vrot.lane.b32.xlu0 %v3564, 1
  %v3758 = vpop.permute.xlu0 %3757
  %3759 = vrot.lane.b32.xlu0 %v3565, 1
  %v3760 = vpop.permute.xlu0 %3759
  %3761 = vrot.lane.b32.xlu0 %v3566, 1
  %v3762 = vpop.permute.xlu0 %3761
  %3763 = vrot.lane.b32.xlu0 %v3567, 1
  %v3764 = vpop.permute.xlu0 %3763
  %3765 = vrot.lane.b32.xlu0 %v3568, 1
  %v3766 = vpop.permute.xlu0 %3765
  %3767 = vrot.lane.b32.xlu0 %v3569, 1
  %v3768 = vpop.permute.xlu0 %3767
  %3769 = vrot.lane.b32.xlu0 %v3570, 1
  %v3770 = vpop.permute.xlu0 %3769
  %3771 = vrot.lane.b32.xlu0 %v3571, 1
  %v3772 = vpop.permute.xlu0 %3771
  %3773 = vrot.lane.b32.xlu0 %v3572, 1
  %v3774 = vpop.permute.xlu0 %3773
  %3775 = vrot.lane.b32.xlu0 %v3573, 1
  %v3776 = vpop.permute.xlu0 %3775
  %3777 = vrot.lane.b32.xlu0 %v3574, 1
  %v3778 = vpop.permute.xlu0 %3777
  %3779 = vrot.lane.b32.xlu0 %v3575, 1
  %v3780 = vpop.permute.xlu0 %3779
  %3781 = vrot.lane.b32.xlu0 %v3576, 1
  %v3782 = vpop.permute.xlu0 %3781
  %3783 = vrot.lane.b32.xlu0 %v3577, 1
  %v3784 = vpop.permute.xlu0 %3783
  %3785 = vrot.lane.b32.xlu0 %v3578, 1
  %v3786 = vpop.permute.xlu0 %3785
  %3787 = vrot.lane.b32.xlu0 %v3579, 1
  %v3788 = vpop.permute.xlu0 %3787
  %3789 = vrot.lane.b32.xlu0 %v3580, 1
  %v3790 = vpop.permute.xlu0 %3789
  %3791 = vrot.lane.b32.xlu0 %v3581, 1
  %v3792 = vpop.permute.xlu0 %3791
  %3793 = vrot.lane.b32.xlu0 %v3582, 1
  %v3794 = vpop.permute.xlu0 %3793
  %3795 = vrot.lane.b32.xlu0 %v3583, 1
  %v3796 = vpop.permute.xlu0 %3795
  %3797 = vrot.lane.b32.xlu0 %v3584, 1
  %v3798 = vpop.permute.xlu0 %3797
  %3799 = vrot.lane.b32.xlu0 %v3585, 1
  %v3800 = vpop.permute.xlu0 %3799
  %3801 = vrot.lane.b32.xlu0 %v3586, 1
  %v3802 = vpop.permute.xlu0 %3801
  %3803 = vrot.lane.b32.xlu0 %v3587, 1
  %v3804 = vpop.permute.xlu0 %3803
  %3805 = vrot.lane.b32.xlu0 %v3588, 1
  %v3806 = vpop.permute.xlu0 %3805
  %3807 = vrot.lane.b32.xlu0 %v3589, 1
  %v3808 = vpop.permute.xlu0 %3807
  %3809 = vrot.lane.b32.xlu0 %v3590, 1
  %v3810 = vpop.permute.xlu0 %3809
  %3811 = vrot.lane.b32.xlu0 %v3591, 1
  %v3812 = vpop.permute.xlu0 %3811
  %3813 = vrot.lane.b32.xlu0 %v3592, 1
  %v3814 = vpop.permute.xlu0 %3813
  %3815 = vrot.lane.b32.xlu0 %v3593, 1
  %v3816 = vpop.permute.xlu0 %3815
  %3817 = vrot.lane.b32.xlu0 %v3594, 1
  %v3818 = vpop.permute.xlu0 %3817
  %3819 = vrot.lane.b32.xlu0 %v3595, 1
  %v3820 = vpop.permute.xlu0 %3819
  %3821 = vrot.lane.b32.xlu0 %v3596, 1
  %v3822 = vpop.permute.xlu0 %3821
  %3823 = vrot.lane.b32.xlu0 %v3597, 1
  %v3824 = vpop.permute.xlu0 %3823
  %3825 = vrot.lane.b32.xlu0 %v3598, 1
  %v3826 = vpop.permute.xlu0 %3825
  %3827 = vrot.lane.b32.xlu0 %v3599, 1
  %v3828 = vpop.permute.xlu0 %3827
  %3829 = vrot.lane.b32.xlu0 %v3600, 1
  %v3830 = vpop.permute.xlu0 %3829
  %3831 = vrot.lane.b32.xlu0 %v3601, 1
  %v3832 = vpop.permute.xlu0 %3831
  %3833 = vrot.lane.b32.xlu0 %v3602, 1
  %v3834 = vpop.permute.xlu0 %3833
  %3835 = vrot.lane.b32.xlu0 %v3603, 1
  %v3836 = vpop.permute.xlu0 %3835
  %3837 = vrot.lane.b32.xlu0 %v3604, 1
  %v3838 = vpop.permute.xlu0 %3837
  %3839 = vrot.lane.b32.xlu0 %v3605, 1
  %v3840 = vpop.permute.xlu0 %3839
  %3841 = vrot.lane.b32.xlu0 %v3606, 1
  %v3842 = vpop.permute.xlu0 %3841
  %3843 = vrot.lane.b32.xlu0 %v3607, 1
  %v3844 = vpop.permute.xlu0 %3843
  %3845 = vrot.lane.b32.xlu0 %v3608, 1
  %v3846 = vpop.permute.xlu0 %3845
  %3847 = vrot.lane.b32.xlu0 %v3609, 1
  %v3848 = vpop.permute.xlu0 %3847
  %3849 = vrot.lane.b32.xlu0 %v3610, 1
  %v3850 = vpop.permute.xlu0 %3849
  %3851 = vrot.lane.b32.xlu0 %v3611, 1
  %v3852 = vpop.permute.xlu0 %3851
  %3853 = vrot.lane.b32.xlu0 %v3612, 1
  %v3854 = vpop.permute.xlu0 %3853
  %3855 = vrot.lane.b32.xlu0 %v3613, 1
  %v3856 = vpop.permute.xlu0 %3855
  %3857 = vrot.lane.b32.xlu0 %v3614, 1
  %v3858 = vpop.permute.xlu0 %3857
  %3859 = vrot.lane.b32.xlu0 %v3615, 1
  %v3860 = vpop.permute.xlu0 %3859
  %3861 = vrot.lane.b32.xlu0 %v3616, 1
  %v3862 = vpop.permute.xlu0 %3861
  %3863 = vrot.lane.b32.xlu0 %v3617, 1
  %v3864 = vpop.permute.xlu0 %3863
  %3865 = vrot.lane.b32.xlu0 %v3618, 1
  %v3866 = vpop.permute.xlu0 %3865
  %3867 = vrot.lane.b32.xlu0 %v3619, 1
  %v3868 = vpop.permute.xlu0 %3867
  %3869 = vrot.lane.b32.xlu0 %v3620, 1
  %v3870 = vpop.permute.xlu0 %3869
  %3871 = vrot.lane.b32.xlu0 %v3621, 1
  %v3872 = vpop.permute.xlu0 %3871
  %3873 = vrot.lane.b32.xlu0 %v3622, 1
  %v3874 = vpop.permute.xlu0 %3873
  %3875 = vrot.lane.b32.xlu0 %v3623, 1
  %v3876 = vpop.permute.xlu0 %3875
  %3877 = vrot.lane.b32.xlu0 %v3624, 1
  %v3878 = vpop.permute.xlu0 %3877
  %3879 = vrot.lane.b32.xlu0 %v3625, 1
  %v3880 = vpop.permute.xlu0 %3879
  %3881 = vrot.lane.b32.xlu0 %v3626, 1
  %v3882 = vpop.permute.xlu0 %3881
  %3883 = vrot.lane.b32.xlu0 %v3627, 1
  %v3884 = vpop.permute.xlu0 %3883
  %3885 = vrot.lane.b32.xlu0 %v3628, 1
  %v3886 = vpop.permute.xlu0 %3885
  %3887 = vrot.lane.b32.xlu0 %v3629, 1
  %v3888 = vpop.permute.xlu0 %3887
  %3889 = vrot.lane.b32.xlu0 %v3630, 1
  %v3890 = vpop.permute.xlu0 %3889
  %3891 = vrot.lane.b32.xlu0 %v3631, 1
  %v3892 = vpop.permute.xlu0 %3891
  %3893 = vrot.lane.b32.xlu0 %v3632, 1
  %v3894 = vpop.permute.xlu0 %3893
  %3895 = vrot.lane.b32.xlu0 %v3633, 1
  %v3896 = vpop.permute.xlu0 %3895
  %3897 = vrot.lane.b32.xlu0 %v3634, 1
  %v3898 = vpop.permute.xlu0 %3897
  %3899 = vrot.lane.b32.xlu0 %v3635, 1
  %v3900 = vpop.permute.xlu0 %3899
  %3901 = vrot.lane.b32.xlu0 %v3636, 1
  %v3902 = vpop.permute.xlu0 %3901
  %3903 = vrot.lane.b32.xlu0 %v3637, 1
  %v3904 = vpop.permute.xlu0 %3903
  %3905 = vrot.lane.b32.xlu0 %v3638, 1
  %v3906 = vpop.permute.xlu0 %3905
  %3907 = vrot.lane.b32.xlu0 %v3639, 1
  %v3908 = vpop.permute.xlu0 %3907
  %3909 = vrot.lane.b32.xlu0 %v3640, 1
  %v3910 = vpop.permute.xlu0 %3909
  %v4001 = vsub.f32 %v2381, %v3732
  %v4002 = vsub.f32 %v2382, %v3734
  %v4003 = vsub.f32 %v2383, %v3736
  %v4004 = vsub.f32 %v2384, %v3738
  %v4005 = vsub.f32 %v2385, %v3740
  %v4006 = vsub.f32 %v2386, %v3742
  %v4007 = vsub.f32 %v2387, %v3744
  %v4008 = vsub.f32 %v2388, %v3746
  %v4009 = vsub.f32 %v2389, %v3748
  %v4010 = vsub.f32 %v2390, %v3750
  %v4011 = vsub.f32 %v2391, %v3752
  %v4012 = vsub.f32 %v2392, %v3754
  %v4013 = vsub.f32 %v2393, %v3756
  %v4014 = vsub.f32 %v2394, %v3758
  %v4015 = vsub.f32 %v2395, %v3760
  %v4016 = vsub.f32 %v2396, %v3762
  %v4017 = vsub.f32 %v2397, %v3764
  %v4018 = vsub.f32 %v2398, %v3766
  %v4019 = vsub.f32 %v2399, %v3768
  %v4020 = vsub.f32 %v2400, %v3770
  %v4021 = vsub.f32 %v2401, %v3772
  %v4022 = vsub.f32 %v2402, %v3774
  %v4023 = vsub.f32 %v2403, %v3776
  %v4024 = vsub.f32 %v2404, %v3778
  %v4025 = vsub.f32 %v2405, %v3780
  %v4026 = vsub.f32 %v2406, %v3782
  %v4027 = vsub.f32 %v2407, %v3784
  %v4028 = vsub.f32 %v2408, %v3786
  %v4029 = vsub.f32 %v2409, %v3788
  %v4030 = vsub.f32 %v2410, %v3790
  %v4031 = vsub.f32 %v2411, %v3792
  %v4032 = vsub.f32 %v2412, %v3794
  %v4033 = vsub.f32 %v2413, %v3796
  %v4034 = vsub.f32 %v2414, %v3798
  %v4035 = vsub.f32 %v2415, %v3800
  %v4036 = vsub.f32 %v2416, %v3802
  %v4037 = vsub.f32 %v2417, %v3804
  %v4038 = vsub.f32 %v2418, %v3806
  %v4039 = vsub.f32 %v2419, %v3808
  %v4040 = vsub.f32 %v2420, %v3810
  %v4041 = vsub.f32 %v2421, %v3812
  %v4042 = vsub.f32 %v2422, %v3814
  %v4043 = vsub.f32 %v2423, %v3816
  %v4044 = vsub.f32 %v2424, %v3818
  %v4045 = vsub.f32 %v2425, %v3820
  %v4046 = vsub.f32 %v2426, %v3822
  %v4047 = vsub.f32 %v2427, %v3824
  %v4048 = vsub.f32 %v2428, %v3826
  %v4049 = vsub.f32 %v2429, %v3828
  %v4050 = vsub.f32 %v2430, %v3830
  %v4051 = vsub.f32 %v2431, %v3832
  %v4052 = vsub.f32 %v2432, %v3834
  %v4053 = vsub.f32 %v2433, %v3836
  %v4054 = vsub.f32 %v2434, %v3838
  %v4055 = vsub.f32 %v2435, %v3840
  %v4056 = vsub.f32 %v2436, %v3842
  %v4057 = vsub.f32 %v2437, %v3844
  %v4058 = vsub.f32 %v2438, %v3846
  %v4059 = vsub.f32 %v2439, %v3848
  %v4060 = vsub.f32 %v2440, %v3850
  %v4061 = vsub.f32 %v2441, %v3852
  %v4062 = vsub.f32 %v2442, %v3854
  %v4063 = vsub.f32 %v2443, %v3856
  %v4064 = vsub.f32 %v2444, %v3858
  %v4065 = vsub.f32 %v2445, %v3860
  %v4066 = vsub.f32 %v2446, %v3862
  %v4067 = vsub.f32 %v2447, %v3864
  %v4068 = vsub.f32 %v2448, %v3866
  %v4069 = vsub.f32 %v2449, %v3868
  %v4070 = vsub.f32 %v2450, %v3870
  %v4071 = vsub.f32 %v2451, %v3872
  %v4072 = vsub.f32 %v2452, %v3874
  %v4073 = vsub.f32 %v2453, %v3876
  %v4074 = vsub.f32 %v2454, %v3878
  %v4075 = vsub.f32 %v2455, %v3880
  %v4076 = vsub.f32 %v2456, %v3882
  %v4077 = vsub.f32 %v2457, %v3884
  %v4078 = vsub.f32 %v2458, %v3886
  %v4079 = vsub.f32 %v2459, %v3888
  %v4080 = vsub.f32 %v2460, %v3890
  %v4081 = vsub.f32 %v2461, %v3892
  %v4082 = vsub.f32 %v2462, %v3894
  %v4083 = vsub.f32 %v2463, %v3896
  %v4084 = vsub.f32 %v2464, %v3898
  %v4085 = vsub.f32 %v2465, %v3900
  %v4086 = vsub.f32 %v2466, %v3902
  %v4087 = vsub.f32 %v2467, %v3904
  %v4088 = vsub.f32 %v2468, %v3906
  %v4089 = vsub.f32 %v2469, %v3908
  %v4090 = vsub.f32 %v2470, %v3910
  %4092 = vset.pattern.permute.xlu0 0
  %4093 = vperm.xlu0 %4092, %v3461
  %v4094 = vpop.permute.xlu0 %4093
  %4097 = vset.pattern.permute.xlu0 0
  %4098 = vperm.xlu0 %4097, %v3462
  %v4099 = vpop.permute.xlu0 %4098
  %4102 = vset.pattern.permute.xlu0 0
  %4103 = vperm.xlu0 %4102, %v3463
  %v4104 = vpop.permute.xlu0 %4103
  %4107 = vset.pattern.permute.xlu0 0
  %4108 = vperm.xlu0 %4107, %v3464
  %v4109 = vpop.permute.xlu0 %4108
  %4112 = vset.pattern.permute.xlu0 0
  %4113 = vperm.xlu0 %4112, %v3465
  %v4114 = vpop.permute.xlu0 %4113
  %4117 = vset.pattern.permute.xlu0 0
  %4118 = vperm.xlu0 %4117, %v3466
  %v4119 = vpop.permute.xlu0 %4118
  %4122 = vset.pattern.permute.xlu0 0
  %4123 = vperm.xlu0 %4122, %v3467
  %v4124 = vpop.permute.xlu0 %4123
  %4127 = vset.pattern.permute.xlu0 0
  %4128 = vperm.xlu0 %4127, %v3468
  %v4129 = vpop.permute.xlu0 %4128
  %4132 = vset.pattern.permute.xlu0 0
  %4133 = vperm.xlu0 %4132, %v3469
  %v4134 = vpop.permute.xlu0 %4133
  %4137 = vset.pattern.permute.xlu0 0
  %4138 = vperm.xlu0 %4137, %v3470
  %v4139 = vpop.permute.xlu0 %4138
  %4142 = vset.pattern.permute.xlu0 0
  %4143 = vperm.xlu0 %4142, %v3471
  %v4144 = vpop.permute.xlu0 %4143
  %4147 = vset.pattern.permute.xlu0 0
  %4148 = vperm.xlu0 %4147, %v3472
  %v4149 = vpop.permute.xlu0 %4148
  %4152 = vset.pattern.permute.xlu0 0
  %4153 = vperm.xlu0 %4152, %v3473
  %v4154 = vpop.permute.xlu0 %4153
  %4157 = vset.pattern.permute.xlu0 0
  %4158 = vperm.xlu0 %4157, %v3474
  %v4159 = vpop.permute.xlu0 %4158
  %4162 = vset.pattern.permute.xlu0 0
  %4163 = vperm.xlu0 %4162, %v3475
  %v4164 = vpop.permute.xlu0 %4163
  %4167 = vset.pattern.permute.xlu0 0
  %4168 = vperm.xlu0 %4167, %v3476
  %v4169 = vpop.permute.xlu0 %4168
  %4172 = vset.pattern.permute.xlu0 0
  %4173 = vperm.xlu0 %4172, %v3477
  %v4174 = vpop.permute.xlu0 %4173
  %4177 = vset.pattern.permute.xlu0 0
  %4178 = vperm.xlu0 %4177, %v3478
  %v4179 = vpop.permute.xlu0 %4178
  %4182 = vset.pattern.permute.xlu0 0
  %4183 = vperm.xlu0 %4182, %v3479
  %v4184 = vpop.permute.xlu0 %4183
  %4187 = vset.pattern.permute.xlu0 0
  %4188 = vperm.xlu0 %4187, %v3480
  %v4189 = vpop.permute.xlu0 %4188
  %4192 = vset.pattern.permute.xlu0 0
  %4193 = vperm.xlu0 %4192, %v3481
  %v4194 = vpop.permute.xlu0 %4193
  %4197 = vset.pattern.permute.xlu0 0
  %4198 = vperm.xlu0 %4197, %v3482
  %v4199 = vpop.permute.xlu0 %4198
  %4202 = vset.pattern.permute.xlu0 0
  %4203 = vperm.xlu0 %4202, %v3483
  %v4204 = vpop.permute.xlu0 %4203
  %4207 = vset.pattern.permute.xlu0 0
  %4208 = vperm.xlu0 %4207, %v3484
  %v4209 = vpop.permute.xlu0 %4208
  %4212 = vset.pattern.permute.xlu0 0
  %4213 = vperm.xlu0 %4212, %v3485
  %v4214 = vpop.permute.xlu0 %4213
  %4217 = vset.pattern.permute.xlu0 0
  %4218 = vperm.xlu0 %4217, %v3486
  %v4219 = vpop.permute.xlu0 %4218
  %4222 = vset.pattern.permute.xlu0 0
  %4223 = vperm.xlu0 %4222, %v3487
  %v4224 = vpop.permute.xlu0 %4223
  %4227 = vset.pattern.permute.xlu0 0
  %4228 = vperm.xlu0 %4227, %v3488
  %v4229 = vpop.permute.xlu0 %4228
  %4232 = vset.pattern.permute.xlu0 0
  %4233 = vperm.xlu0 %4232, %v3489
  %v4234 = vpop.permute.xlu0 %4233
  %4237 = vset.pattern.permute.xlu0 0
  %4238 = vperm.xlu0 %4237, %v3490
  %v4239 = vpop.permute.xlu0 %4238
  %4242 = vset.pattern.permute.xlu0 0
  %4243 = vperm.xlu0 %4242, %v3491
  %v4244 = vpop.permute.xlu0 %4243
  %4247 = vset.pattern.permute.xlu0 0
  %4248 = vperm.xlu0 %4247, %v3492
  %v4249 = vpop.permute.xlu0 %4248
  %4252 = vset.pattern.permute.xlu0 0
  %4253 = vperm.xlu0 %4252, %v3493
  %v4254 = vpop.permute.xlu0 %4253
  %4257 = vset.pattern.permute.xlu0 0
  %4258 = vperm.xlu0 %4257, %v3494
  %v4259 = vpop.permute.xlu0 %4258
  %4262 = vset.pattern.permute.xlu0 0
  %4263 = vperm.xlu0 %4262, %v3495
  %v4264 = vpop.permute.xlu0 %4263
  %4267 = vset.pattern.permute.xlu0 0
  %4268 = vperm.xlu0 %4267, %v3496
  %v4269 = vpop.permute.xlu0 %4268
  %4272 = vset.pattern.permute.xlu0 0
  %4273 = vperm.xlu0 %4272, %v3497
  %v4274 = vpop.permute.xlu0 %4273
  %4277 = vset.pattern.permute.xlu0 0
  %4278 = vperm.xlu0 %4277, %v3498
  %v4279 = vpop.permute.xlu0 %4278
  %4282 = vset.pattern.permute.xlu0 0
  %4283 = vperm.xlu0 %4282, %v3499
  %v4284 = vpop.permute.xlu0 %4283
  %4287 = vset.pattern.permute.xlu0 0
  %4288 = vperm.xlu0 %4287, %v3500
  %v4289 = vpop.permute.xlu0 %4288
  %4292 = vset.pattern.permute.xlu0 0
  %4293 = vperm.xlu0 %4292, %v3501
  %v4294 = vpop.permute.xlu0 %4293
  %4297 = vset.pattern.permute.xlu0 0
  %4298 = vperm.xlu0 %4297, %v3502
  %v4299 = vpop.permute.xlu0 %4298
  %4302 = vset.pattern.permute.xlu0 0
  %4303 = vperm.xlu0 %4302, %v3503
  %v4304 = vpop.permute.xlu0 %4303
  %4307 = vset.pattern.permute.xlu0 0
  %4308 = vperm.xlu0 %4307, %v3504
  %v4309 = vpop.permute.xlu0 %4308
  %4312 = vset.pattern.permute.xlu0 0
  %4313 = vperm.xlu0 %4312, %v3505
  %v4314 = vpop.permute.xlu0 %4313
  %4317 = vset.pattern.permute.xlu0 0
  %4318 = vperm.xlu0 %4317, %v3506
  %v4319 = vpop.permute.xlu0 %4318
  %4322 = vset.pattern.permute.xlu0 0
  %4323 = vperm.xlu0 %4322, %v3507
  %v4324 = vpop.permute.xlu0 %4323
  %4327 = vset.pattern.permute.xlu0 0
  %4328 = vperm.xlu0 %4327, %v3508
  %v4329 = vpop.permute.xlu0 %4328
  %4332 = vset.pattern.permute.xlu0 0
  %4333 = vperm.xlu0 %4332, %v3509
  %v4334 = vpop.permute.xlu0 %4333
  %4337 = vset.pattern.permute.xlu0 0
  %4338 = vperm.xlu0 %4337, %v3510
  %v4339 = vpop.permute.xlu0 %4338
  %4342 = vset.pattern.permute.xlu0 0
  %4343 = vperm.xlu0 %4342, %v3511
  %v4344 = vpop.permute.xlu0 %4343
  %4347 = vset.pattern.permute.xlu0 0
  %4348 = vperm.xlu0 %4347, %v3512
  %v4349 = vpop.permute.xlu0 %4348
  %4352 = vset.pattern.permute.xlu0 0
  %4353 = vperm.xlu0 %4352, %v3513
  %v4354 = vpop.permute.xlu0 %4353
  %4357 = vset.pattern.permute.xlu0 0
  %4358 = vperm.xlu0 %4357, %v3514
  %v4359 = vpop.permute.xlu0 %4358
  %4362 = vset.pattern.permute.xlu0 0
  %4363 = vperm.xlu0 %4362, %v3515
  %v4364 = vpop.permute.xlu0 %4363
  %4367 = vset.pattern.permute.xlu0 0
  %4368 = vperm.xlu0 %4367, %v3516
  %v4369 = vpop.permute.xlu0 %4368
  %4372 = vset.pattern.permute.xlu0 0
  %4373 = vperm.xlu0 %4372, %v3517
  %v4374 = vpop.permute.xlu0 %4373
  %4377 = vset.pattern.permute.xlu0 0
  %4378 = vperm.xlu0 %4377, %v3518
  %v4379 = vpop.permute.xlu0 %4378
  %4382 = vset.pattern.permute.xlu0 0
  %4383 = vperm.xlu0 %4382, %v3519
  %v4384 = vpop.permute.xlu0 %4383
  %4387 = vset.pattern.permute.xlu0 0
  %4388 = vperm.xlu0 %4387, %v3520
  %v4389 = vpop.permute.xlu0 %4388
  %4392 = vset.pattern.permute.xlu0 0
  %4393 = vperm.xlu0 %4392, %v3521
  %v4394 = vpop.permute.xlu0 %4393
  %4397 = vset.pattern.permute.xlu0 0
  %4398 = vperm.xlu0 %4397, %v3522
  %v4399 = vpop.permute.xlu0 %4398
  %4402 = vset.pattern.permute.xlu0 0
  %4403 = vperm.xlu0 %4402, %v3523
  %v4404 = vpop.permute.xlu0 %4403
  %4407 = vset.pattern.permute.xlu0 0
  %4408 = vperm.xlu0 %4407, %v3524
  %v4409 = vpop.permute.xlu0 %4408
  %4412 = vset.pattern.permute.xlu0 0
  %4413 = vperm.xlu0 %4412, %v3525
  %v4414 = vpop.permute.xlu0 %4413
  %4417 = vset.pattern.permute.xlu0 0
  %4418 = vperm.xlu0 %4417, %v3526
  %v4419 = vpop.permute.xlu0 %4418
  %4422 = vset.pattern.permute.xlu0 0
  %4423 = vperm.xlu0 %4422, %v3527
  %v4424 = vpop.permute.xlu0 %4423
  %4427 = vset.pattern.permute.xlu0 0
  %4428 = vperm.xlu0 %4427, %v3528
  %v4429 = vpop.permute.xlu0 %4428
  %4432 = vset.pattern.permute.xlu0 0
  %4433 = vperm.xlu0 %4432, %v3529
  %v4434 = vpop.permute.xlu0 %4433
  %4437 = vset.pattern.permute.xlu0 0
  %4438 = vperm.xlu0 %4437, %v3530
  %v4439 = vpop.permute.xlu0 %4438
  %4442 = vset.pattern.permute.xlu0 0
  %4443 = vperm.xlu0 %4442, %v3531
  %v4444 = vpop.permute.xlu0 %4443
  %4447 = vset.pattern.permute.xlu0 0
  %4448 = vperm.xlu0 %4447, %v3532
  %v4449 = vpop.permute.xlu0 %4448
  %4452 = vset.pattern.permute.xlu0 0
  %4453 = vperm.xlu0 %4452, %v3533
  %v4454 = vpop.permute.xlu0 %4453
  %4457 = vset.pattern.permute.xlu0 0
  %4458 = vperm.xlu0 %4457, %v3534
  %v4459 = vpop.permute.xlu0 %4458
  %4462 = vset.pattern.permute.xlu0 0
  %4463 = vperm.xlu0 %4462, %v3535
  %v4464 = vpop.permute.xlu0 %4463
  %4467 = vset.pattern.permute.xlu0 0
  %4468 = vperm.xlu0 %4467, %v3536
  %v4469 = vpop.permute.xlu0 %4468
  %4472 = vset.pattern.permute.xlu0 0
  %4473 = vperm.xlu0 %4472, %v3537
  %v4474 = vpop.permute.xlu0 %4473
  %4477 = vset.pattern.permute.xlu0 0
  %4478 = vperm.xlu0 %4477, %v3538
  %v4479 = vpop.permute.xlu0 %4478
  %4482 = vset.pattern.permute.xlu0 0
  %4483 = vperm.xlu0 %4482, %v3539
  %v4484 = vpop.permute.xlu0 %4483
  %4487 = vset.pattern.permute.xlu0 0
  %4488 = vperm.xlu0 %4487, %v3540
  %v4489 = vpop.permute.xlu0 %4488
  %4492 = vset.pattern.permute.xlu0 0
  %4493 = vperm.xlu0 %4492, %v3541
  %v4494 = vpop.permute.xlu0 %4493
  %4497 = vset.pattern.permute.xlu0 0
  %4498 = vperm.xlu0 %4497, %v3542
  %v4499 = vpop.permute.xlu0 %4498
  %4502 = vset.pattern.permute.xlu0 0
  %4503 = vperm.xlu0 %4502, %v3543
  %v4504 = vpop.permute.xlu0 %4503
  %4507 = vset.pattern.permute.xlu0 0
  %4508 = vperm.xlu0 %4507, %v3544
  %v4509 = vpop.permute.xlu0 %4508
  %4512 = vset.pattern.permute.xlu0 0
  %4513 = vperm.xlu0 %4512, %v3545
  %v4514 = vpop.permute.xlu0 %4513
  %4517 = vset.pattern.permute.xlu0 0
  %4518 = vperm.xlu0 %4517, %v3546
  %v4519 = vpop.permute.xlu0 %4518
  %4522 = vset.pattern.permute.xlu0 0
  %4523 = vperm.xlu0 %4522, %v3547
  %v4524 = vpop.permute.xlu0 %4523
  %4527 = vset.pattern.permute.xlu0 0
  %4528 = vperm.xlu0 %4527, %v3548
  %v4529 = vpop.permute.xlu0 %4528
  %4532 = vset.pattern.permute.xlu0 0
  %4533 = vperm.xlu0 %4532, %v3549
  %v4534 = vpop.permute.xlu0 %4533
  %4537 = vset.pattern.permute.xlu0 0
  %4538 = vperm.xlu0 %4537, %v3550
  %v4539 = vpop.permute.xlu0 %4538
  %v4541 = vmul.f32 %v572, %v4094
  %v4542 = vmul.f32 %v806, %v4094
  %v4543 = vmul.f32 %v574, %v4099
  %v4544 = vmul.f32 %v808, %v4099
  %v4545 = vmul.f32 %v577, %v4104
  %v4546 = vmul.f32 %v811, %v4104
  %v4547 = vmul.f32 %v579, %v4109
  %v4548 = vmul.f32 %v813, %v4109
  %v4549 = vmul.f32 %v582, %v4114
  %v4550 = vmul.f32 %v816, %v4114
  %v4551 = vmul.f32 %v584, %v4119
  %v4552 = vmul.f32 %v818, %v4119
  %v4553 = vmul.f32 %v587, %v4124
  %v4554 = vmul.f32 %v821, %v4124
  %v4555 = vmul.f32 %v589, %v4129
  %v4556 = vmul.f32 %v823, %v4129
  %v4557 = vmul.f32 %v592, %v4134
  %v4558 = vmul.f32 %v826, %v4134
  %v4559 = vmul.f32 %v594, %v4139
  %v4560 = vmul.f32 %v828, %v4139
  %v4561 = vmul.f32 %v597, %v4144
  %v4562 = vmul.f32 %v831, %v4144
  %v4563 = vmul.f32 %v599, %v4149
  %v4564 = vmul.f32 %v833, %v4149
  %v4565 = vmul.f32 %v602, %v4154
  %v4566 = vmul.f32 %v836, %v4154
  %v4567 = vmul.f32 %v604, %v4159
  %v4568 = vmul.f32 %v838, %v4159
  %v4569 = vmul.f32 %v607, %v4164
  %v4570 = vmul.f32 %v841, %v4164
  %v4571 = vmul.f32 %v609, %v4169
  %v4572 = vmul.f32 %v843, %v4169
  %v4573 = vmul.f32 %v612, %v4174
  %v4574 = vmul.f32 %v846, %v4174
  %v4575 = vmul.f32 %v614, %v4179
  %v4576 = vmul.f32 %v848, %v4179
  %v4577 = vmul.f32 %v617, %v4184
  %v4578 = vmul.f32 %v851, %v4184
  %v4579 = vmul.f32 %v619, %v4189
  %v4580 = vmul.f32 %v853, %v4189
  %v4581 = vmul.f32 %v622, %v4194
  %v4582 = vmul.f32 %v856, %v4194
  %v4583 = vmul.f32 %v624, %v4199
  %v4584 = vmul.f32 %v858, %v4199
  %v4585 = vmul.f32 %v627, %v4204
  %v4586 = vmul.f32 %v861, %v4204
  %v4587 = vmul.f32 %v629, %v4209
  %v4588 = vmul.f32 %v863, %v4209
  %v4589 = vmul.f32 %v632, %v4214
  %v4590 = vmul.f32 %v866, %v4214
  %v4591 = vmul.f32 %v634, %v4219
  %v4592 = vmul.f32 %v868, %v4219
  %v4593 = vmul.f32 %v637, %v4224
  %v4594 = vmul.f32 %v871, %v4224
  %v4595 = vmul.f32 %v639, %v4229
  %v4596 = vmul.f32 %v873, %v4229
  %v4597 = vmul.f32 %v642, %v4234
  %v4598 = vmul.f32 %v876, %v4234
  %v4599 = vmul.f32 %v644, %v4239
  %v4600 = vmul.f32 %v878, %v4239
  %v4601 = vmul.f32 %v647, %v4244
  %v4602 = vmul.f32 %v881, %v4244
  %v4603 = vmul.f32 %v649, %v4249
  %v4604 = vmul.f32 %v883, %v4249
  %v4605 = vmul.f32 %v652, %v4254
  %v4606 = vmul.f32 %v886, %v4254
  %v4607 = vmul.f32 %v654, %v4259
  %v4608 = vmul.f32 %v888, %v4259
  %v4609 = vmul.f32 %v657, %v4264
  %v4610 = vmul.f32 %v891, %v4264
  %v4611 = vmul.f32 %v659, %v4269
  %v4612 = vmul.f32 %v893, %v4269
  %v4613 = vmul.f32 %v662, %v4274
  %v4614 = vmul.f32 %v896, %v4274
  %v4615 = vmul.f32 %v664, %v4279
  %v4616 = vmul.f32 %v898, %v4279
  %v4617 = vmul.f32 %v667, %v4284
  %v4618 = vmul.f32 %v901, %v4284
  %v4619 = vmul.f32 %v669, %v4289
  %v4620 = vmul.f32 %v903, %v4289
  %v4621 = vmul.f32 %v672, %v4294
  %v4622 = vmul.f32 %v906, %v4294
  %v4623 = vmul.f32 %v674, %v4299
  %v4624 = vmul.f32 %v908, %v4299
  %v4625 = vmul.f32 %v677, %v4304
  %v4626 = vmul.f32 %v911, %v4304
  %v4627 = vmul.f32 %v679, %v4309
  %v4628 = vmul.f32 %v913, %v4309
  %v4629 = vmul.f32 %v682, %v4314
  %v4630 = vmul.f32 %v916, %v4314
  %v4631 = vmul.f32 %v684, %v4319
  %v4632 = vmul.f32 %v918, %v4319
  %v4633 = vmul.f32 %v687, %v4324
  %v4634 = vmul.f32 %v921, %v4324
  %v4635 = vmul.f32 %v689, %v4329
  %v4636 = vmul.f32 %v923, %v4329
  %v4637 = vmul.f32 %v692, %v4334
  %v4638 = vmul.f32 %v926, %v4334
  %v4639 = vmul.f32 %v694, %v4339
  %v4640 = vmul.f32 %v928, %v4339
  %v4641 = vmul.f32 %v697, %v4344
  %v4642 = vmul.f32 %v931, %v4344
  %v4643 = vmul.f32 %v699, %v4349
  %v4644 = vmul.f32 %v933, %v4349
  %v4645 = vmul.f32 %v702, %v4354
  %v4646 = vmul.f32 %v936, %v4354
  %v4647 = vmul.f32 %v704, %v4359
  %v4648 = vmul.f32 %v938, %v4359
  %v4649 = vmul.f32 %v707, %v4364
  %v4650 = vmul.f32 %v941, %v4364
  %v4651 = vmul.f32 %v709, %v4369
  %v4652 = vmul.f32 %v943, %v4369
  %v4653 = vmul.f32 %v712, %v4374
  %v4654 = vmul.f32 %v946, %v4374
  %v4655 = vmul.f32 %v714, %v4379
  %v4656 = vmul.f32 %v948, %v4379
  %v4657 = vmul.f32 %v717, %v4384
  %v4658 = vmul.f32 %v951, %v4384
  %v4659 = vmul.f32 %v719, %v4389
  %v4660 = vmul.f32 %v953, %v4389
  %v4661 = vmul.f32 %v722, %v4394
  %v4662 = vmul.f32 %v956, %v4394
  %v4663 = vmul.f32 %v724, %v4399
  %v4664 = vmul.f32 %v958, %v4399
  %v4665 = vmul.f32 %v727, %v4404
  %v4666 = vmul.f32 %v961, %v4404
  %v4667 = vmul.f32 %v729, %v4409
  %v4668 = vmul.f32 %v963, %v4409
  %v4669 = vmul.f32 %v732, %v4414
  %v4670 = vmul.f32 %v966, %v4414
  %v4671 = vmul.f32 %v734, %v4419
  %v4672 = vmul.f32 %v968, %v4419
  %v4673 = vmul.f32 %v737, %v4424
  %v4674 = vmul.f32 %v971, %v4424
  %v4675 = vmul.f32 %v739, %v4429
  %v4676 = vmul.f32 %v973, %v4429
  %v4677 = vmul.f32 %v742, %v4434
  %v4678 = vmul.f32 %v976, %v4434
  %v4679 = vmul.f32 %v744, %v4439
  %v4680 = vmul.f32 %v978, %v4439
  %v4681 = vmul.f32 %v747, %v4444
  %v4682 = vmul.f32 %v981, %v4444
  %v4683 = vmul.f32 %v749, %v4449
  %v4684 = vmul.f32 %v983, %v4449
  %v4685 = vmul.f32 %v752, %v4454
  %v4686 = vmul.f32 %v986, %v4454
  %v4687 = vmul.f32 %v754, %v4459
  %v4688 = vmul.f32 %v988, %v4459
  %v4689 = vmul.f32 %v757, %v4464
  %v4690 = vmul.f32 %v991, %v4464
  %v4691 = vmul.f32 %v759, %v4469
  %v4692 = vmul.f32 %v993, %v4469
  %v4693 = vmul.f32 %v762, %v4474
  %v4694 = vmul.f32 %v996, %v4474
  %v4695 = vmul.f32 %v764, %v4479
  %v4696 = vmul.f32 %v998, %v4479
  %v4697 = vmul.f32 %v767, %v4484
  %v4698 = vmul.f32 %v1001, %v4484
  %v4699 = vmul.f32 %v769, %v4489
  %v4700 = vmul.f32 %v1003, %v4489
  %v4701 = vmul.f32 %v772, %v4494
  %v4702 = vmul.f32 %v1006, %v4494
  %v4703 = vmul.f32 %v774, %v4499
  %v4704 = vmul.f32 %v1008, %v4499
  %v4705 = vmul.f32 %v777, %v4504
  %v4706 = vmul.f32 %v1011, %v4504
  %v4707 = vmul.f32 %v779, %v4509
  %v4708 = vmul.f32 %v1013, %v4509
  %v4709 = vmul.f32 %v782, %v4514
  %v4710 = vmul.f32 %v1016, %v4514
  %v4711 = vmul.f32 %v784, %v4519
  %v4712 = vmul.f32 %v1018, %v4519
  %v4713 = vmul.f32 %v787, %v4524
  %v4714 = vmul.f32 %v1021, %v4524
  %v4715 = vmul.f32 %v789, %v4529
  %v4716 = vmul.f32 %v1023, %v4529
  %v4717 = vmul.f32 %v792, %v4534
  %v4718 = vmul.f32 %v1026, %v4534
  %v4719 = vmul.f32 %v794, %v4539
  %v4720 = vmul.f32 %v1028, %v4539
  %4722 = vset.pattern.permute.xlu0 1
  %4723 = vperm.xlu0 %4722, %v4001
  %v4724 = vpop.permute.xlu0 %4723
  %4727 = vset.pattern.permute.xlu0 1
  %4728 = vperm.xlu0 %4727, %v4002
  %v4729 = vpop.permute.xlu0 %4728
  %4732 = vset.pattern.permute.xlu0 1
  %4733 = vperm.xlu0 %4732, %v4003
  %v4734 = vpop.permute.xlu0 %4733
  %4737 = vset.pattern.permute.xlu0 1
  %4738 = vperm.xlu0 %4737, %v4004
  %v4739 = vpop.permute.xlu0 %4738
  %4742 = vset.pattern.permute.xlu0 1
  %4743 = vperm.xlu0 %4742, %v4005
  %v4744 = vpop.permute.xlu0 %4743
  %4747 = vset.pattern.permute.xlu0 1
  %4748 = vperm.xlu0 %4747, %v4006
  %v4749 = vpop.permute.xlu0 %4748
  %4752 = vset.pattern.permute.xlu0 1
  %4753 = vperm.xlu0 %4752, %v4007
  %v4754 = vpop.permute.xlu0 %4753
  %4757 = vset.pattern.permute.xlu0 1
  %4758 = vperm.xlu0 %4757, %v4008
  %v4759 = vpop.permute.xlu0 %4758
  %4762 = vset.pattern.permute.xlu0 1
  %4763 = vperm.xlu0 %4762, %v4009
  %v4764 = vpop.permute.xlu0 %4763
  %4767 = vset.pattern.permute.xlu0 1
  %4768 = vperm.xlu0 %4767, %v4010
  %v4769 = vpop.permute.xlu0 %4768
  %4772 = vset.pattern.permute.xlu0 1
  %4773 = vperm.xlu0 %4772, %v4011
  %v4774 = vpop.permute.xlu0 %4773
  %4777 = vset.pattern.permute.xlu0 1
  %4778 = vperm.xlu0 %4777, %v4012
  %v4779 = vpop.permute.xlu0 %4778
  %4782 = vset.pattern.permute.xlu0 1
  %4783 = vperm.xlu0 %4782, %v4013
  %v4784 = vpop.permute.xlu0 %4783
  %4787 = vset.pattern.permute.xlu0 1
  %4788 = vperm.xlu0 %4787, %v4014
  %v4789 = vpop.permute.xlu0 %4788
  %4792 = vset.pattern.permute.xlu0 1
  %4793 = vperm.xlu0 %4792, %v4015
  %v4794 = vpop.permute.xlu0 %4793
  %4797 = vset.pattern.permute.xlu0 1
  %4798 = vperm.xlu0 %4797, %v4016
  %v4799 = vpop.permute.xlu0 %4798
  %4802 = vset.pattern.permute.xlu0 1
  %4803 = vperm.xlu0 %4802, %v4017
  %v4804 = vpop.permute.xlu0 %4803
  %4807 = vset.pattern.permute.xlu0 1
  %4808 = vperm.xlu0 %4807, %v4018
  %v4809 = vpop.permute.xlu0 %4808
  %4812 = vset.pattern.permute.xlu0 1
  %4813 = vperm.xlu0 %4812, %v4019
  %v4814 = vpop.permute.xlu0 %4813
  %4817 = vset.pattern.permute.xlu0 1
  %4818 = vperm.xlu0 %4817, %v4020
  %v4819 = vpop.permute.xlu0 %4818
  %4822 = vset.pattern.permute.xlu0 1
  %4823 = vperm.xlu0 %4822, %v4021
  %v4824 = vpop.permute.xlu0 %4823
  %4827 = vset.pattern.permute.xlu0 1
  %4828 = vperm.xlu0 %4827, %v4022
  %v4829 = vpop.permute.xlu0 %4828
  %4832 = vset.pattern.permute.xlu0 1
  %4833 = vperm.xlu0 %4832, %v4023
  %v4834 = vpop.permute.xlu0 %4833
  %4837 = vset.pattern.permute.xlu0 1
  %4838 = vperm.xlu0 %4837, %v4024
  %v4839 = vpop.permute.xlu0 %4838
  %4842 = vset.pattern.permute.xlu0 1
  %4843 = vperm.xlu0 %4842, %v4025
  %v4844 = vpop.permute.xlu0 %4843
  %4847 = vset.pattern.permute.xlu0 1
  %4848 = vperm.xlu0 %4847, %v4026
  %v4849 = vpop.permute.xlu0 %4848
  %4852 = vset.pattern.permute.xlu0 1
  %4853 = vperm.xlu0 %4852, %v4027
  %v4854 = vpop.permute.xlu0 %4853
  %4857 = vset.pattern.permute.xlu0 1
  %4858 = vperm.xlu0 %4857, %v4028
  %v4859 = vpop.permute.xlu0 %4858
  %4862 = vset.pattern.permute.xlu0 1
  %4863 = vperm.xlu0 %4862, %v4029
  %v4864 = vpop.permute.xlu0 %4863
  %4867 = vset.pattern.permute.xlu0 1
  %4868 = vperm.xlu0 %4867, %v4030
  %v4869 = vpop.permute.xlu0 %4868
  %4872 = vset.pattern.permute.xlu0 1
  %4873 = vperm.xlu0 %4872, %v4031
  %v4874 = vpop.permute.xlu0 %4873
  %4877 = vset.pattern.permute.xlu0 1
  %4878 = vperm.xlu0 %4877, %v4032
  %v4879 = vpop.permute.xlu0 %4878
  %4882 = vset.pattern.permute.xlu0 1
  %4883 = vperm.xlu0 %4882, %v4033
  %v4884 = vpop.permute.xlu0 %4883
  %4887 = vset.pattern.permute.xlu0 1
  %4888 = vperm.xlu0 %4887, %v4034
  %v4889 = vpop.permute.xlu0 %4888
  %4892 = vset.pattern.permute.xlu0 1
  %4893 = vperm.xlu0 %4892, %v4035
  %v4894 = vpop.permute.xlu0 %4893
  %4897 = vset.pattern.permute.xlu0 1
  %4898 = vperm.xlu0 %4897, %v4036
  %v4899 = vpop.permute.xlu0 %4898
  %4902 = vset.pattern.permute.xlu0 1
  %4903 = vperm.xlu0 %4902, %v4037
  %v4904 = vpop.permute.xlu0 %4903
  %4907 = vset.pattern.permute.xlu0 1
  %4908 = vperm.xlu0 %4907, %v4038
  %v4909 = vpop.permute.xlu0 %4908
  %4912 = vset.pattern.permute.xlu0 1
  %4913 = vperm.xlu0 %4912, %v4039
  %v4914 = vpop.permute.xlu0 %4913
  %4917 = vset.pattern.permute.xlu0 1
  %4918 = vperm.xlu0 %4917, %v4040
  %v4919 = vpop.permute.xlu0 %4918
  %4922 = vset.pattern.permute.xlu0 1
  %4923 = vperm.xlu0 %4922, %v4041
  %v4924 = vpop.permute.xlu0 %4923
  %4927 = vset.pattern.permute.xlu0 1
  %4928 = vperm.xlu0 %4927, %v4042
  %v4929 = vpop.permute.xlu0 %4928
  %4932 = vset.pattern.permute.xlu0 1
  %4933 = vperm.xlu0 %4932, %v4043
  %v4934 = vpop.permute.xlu0 %4933
  %4937 = vset.pattern.permute.xlu0 1
  %4938 = vperm.xlu0 %4937, %v4044
  %v4939 = vpop.permute.xlu0 %4938
  %4942 = vset.pattern.permute.xlu0 1
  %4943 = vperm.xlu0 %4942, %v4045
  %v4944 = vpop.permute.xlu0 %4943
  %4947 = vset.pattern.permute.xlu0 1
  %4948 = vperm.xlu0 %4947, %v4046
  %v4949 = vpop.permute.xlu0 %4948
  %4952 = vset.pattern.permute.xlu0 1
  %4953 = vperm.xlu0 %4952, %v4047
  %v4954 = vpop.permute.xlu0 %4953
  %4957 = vset.pattern.permute.xlu0 1
  %4958 = vperm.xlu0 %4957, %v4048
  %v4959 = vpop.permute.xlu0 %4958
  %4962 = vset.pattern.permute.xlu0 1
  %4963 = vperm.xlu0 %4962, %v4049
  %v4964 = vpop.permute.xlu0 %4963
  %4967 = vset.pattern.permute.xlu0 1
  %4968 = vperm.xlu0 %4967, %v4050
  %v4969 = vpop.permute.xlu0 %4968
  %4972 = vset.pattern.permute.xlu0 1
  %4973 = vperm.xlu0 %4972, %v4051
  %v4974 = vpop.permute.xlu0 %4973
  %4977 = vset.pattern.permute.xlu0 1
  %4978 = vperm.xlu0 %4977, %v4052
  %v4979 = vpop.permute.xlu0 %4978
  %4982 = vset.pattern.permute.xlu0 1
  %4983 = vperm.xlu0 %4982, %v4053
  %v4984 = vpop.permute.xlu0 %4983
  %4987 = vset.pattern.permute.xlu0 1
  %4988 = vperm.xlu0 %4987, %v4054
  %v4989 = vpop.permute.xlu0 %4988
  %4992 = vset.pattern.permute.xlu0 1
  %4993 = vperm.xlu0 %4992, %v4055
  %v4994 = vpop.permute.xlu0 %4993
  %4997 = vset.pattern.permute.xlu0 1
  %4998 = vperm.xlu0 %4997, %v4056
  %v4999 = vpop.permute.xlu0 %4998
  %5002 = vset.pattern.permute.xlu0 1
  %5003 = vperm.xlu0 %5002, %v4057
  %v5004 = vpop.permute.xlu0 %5003
  %5007 = vset.pattern.permute.xlu0 1
  %5008 = vperm.xlu0 %5007, %v4058
  %v5009 = vpop.permute.xlu0 %5008
  %5012 = vset.pattern.permute.xlu0 1
  %5013 = vperm.xlu0 %5012, %v4059
  %v5014 = vpop.permute.xlu0 %5013
  %5017 = vset.pattern.permute.xlu0 1
  %5018 = vperm.xlu0 %5017, %v4060
  %v5019 = vpop.permute.xlu0 %5018
  %5022 = vset.pattern.permute.xlu0 1
  %5023 = vperm.xlu0 %5022, %v4061
  %v5024 = vpop.permute.xlu0 %5023
  %5027 = vset.pattern.permute.xlu0 1
  %5028 = vperm.xlu0 %5027, %v4062
  %v5029 = vpop.permute.xlu0 %5028
  %5032 = vset.pattern.permute.xlu0 1
  %5033 = vperm.xlu0 %5032, %v4063
  %v5034 = vpop.permute.xlu0 %5033
  %5037 = vset.pattern.permute.xlu0 1
  %5038 = vperm.xlu0 %5037, %v4064
  %v5039 = vpop.permute.xlu0 %5038
  %5042 = vset.pattern.permute.xlu0 1
  %5043 = vperm.xlu0 %5042, %v4065
  %v5044 = vpop.permute.xlu0 %5043
  %5047 = vset.pattern.permute.xlu0 1
  %5048 = vperm.xlu0 %5047, %v4066
  %v5049 = vpop.permute.xlu0 %5048
  %5052 = vset.pattern.permute.xlu0 1
  %5053 = vperm.xlu0 %5052, %v4067
  %v5054 = vpop.permute.xlu0 %5053
  %5057 = vset.pattern.permute.xlu0 1
  %5058 = vperm.xlu0 %5057, %v4068
  %v5059 = vpop.permute.xlu0 %5058
  %5062 = vset.pattern.permute.xlu0 1
  %5063 = vperm.xlu0 %5062, %v4069
  %v5064 = vpop.permute.xlu0 %5063
  %5067 = vset.pattern.permute.xlu0 1
  %5068 = vperm.xlu0 %5067, %v4070
  %v5069 = vpop.permute.xlu0 %5068
  %5072 = vset.pattern.permute.xlu0 1
  %5073 = vperm.xlu0 %5072, %v4071
  %v5074 = vpop.permute.xlu0 %5073
  %5077 = vset.pattern.permute.xlu0 1
  %5078 = vperm.xlu0 %5077, %v4072
  %v5079 = vpop.permute.xlu0 %5078
  %5082 = vset.pattern.permute.xlu0 1
  %5083 = vperm.xlu0 %5082, %v4073
  %v5084 = vpop.permute.xlu0 %5083
  %5087 = vset.pattern.permute.xlu0 1
  %5088 = vperm.xlu0 %5087, %v4074
  %v5089 = vpop.permute.xlu0 %5088
  %5092 = vset.pattern.permute.xlu0 1
  %5093 = vperm.xlu0 %5092, %v4075
  %v5094 = vpop.permute.xlu0 %5093
  %5097 = vset.pattern.permute.xlu0 1
  %5098 = vperm.xlu0 %5097, %v4076
  %v5099 = vpop.permute.xlu0 %5098
  %5102 = vset.pattern.permute.xlu0 1
  %5103 = vperm.xlu0 %5102, %v4077
  %v5104 = vpop.permute.xlu0 %5103
  %5107 = vset.pattern.permute.xlu0 1
  %5108 = vperm.xlu0 %5107, %v4078
  %v5109 = vpop.permute.xlu0 %5108
  %5112 = vset.pattern.permute.xlu0 1
  %5113 = vperm.xlu0 %5112, %v4079
  %v5114 = vpop.permute.xlu0 %5113
  %5117 = vset.pattern.permute.xlu0 1
  %5118 = vperm.xlu0 %5117, %v4080
  %v5119 = vpop.permute.xlu0 %5118
  %5122 = vset.pattern.permute.xlu0 1
  %5123 = vperm.xlu0 %5122, %v4081
  %v5124 = vpop.permute.xlu0 %5123
  %5127 = vset.pattern.permute.xlu0 1
  %5128 = vperm.xlu0 %5127, %v4082
  %v5129 = vpop.permute.xlu0 %5128
  %5132 = vset.pattern.permute.xlu0 1
  %5133 = vperm.xlu0 %5132, %v4083
  %v5134 = vpop.permute.xlu0 %5133
  %5137 = vset.pattern.permute.xlu0 1
  %5138 = vperm.xlu0 %5137, %v4084
  %v5139 = vpop.permute.xlu0 %5138
  %5142 = vset.pattern.permute.xlu0 1
  %5143 = vperm.xlu0 %5142, %v4085
  %v5144 = vpop.permute.xlu0 %5143
  %5147 = vset.pattern.permute.xlu0 1
  %5148 = vperm.xlu0 %5147, %v4086
  %v5149 = vpop.permute.xlu0 %5148
  %5152 = vset.pattern.permute.xlu0 1
  %5153 = vperm.xlu0 %5152, %v4087
  %v5154 = vpop.permute.xlu0 %5153
  %5157 = vset.pattern.permute.xlu0 1
  %5158 = vperm.xlu0 %5157, %v4088
  %v5159 = vpop.permute.xlu0 %5158
  %5162 = vset.pattern.permute.xlu0 1
  %5163 = vperm.xlu0 %5162, %v4089
  %v5164 = vpop.permute.xlu0 %5163
  %5167 = vset.pattern.permute.xlu0 1
  %5168 = vperm.xlu0 %5167, %v4090
  %v5169 = vpop.permute.xlu0 %5168
  %v5171 = vadd.f32 %v4541, %v4724
  %v5172 = vadd.f32 %v4542, %v4724
  %v5173 = vadd.f32 %v4543, %v4729
  %v5174 = vadd.f32 %v4544, %v4729
  %v5175 = vadd.f32 %v4545, %v4734
  %v5176 = vadd.f32 %v4546, %v4734
  %v5177 = vadd.f32 %v4547, %v4739
  %v5178 = vadd.f32 %v4548, %v4739
  %v5179 = vadd.f32 %v4549, %v4744
  %v5180 = vadd.f32 %v4550, %v4744
  %v5181 = vadd.f32 %v4551, %v4749
  %v5182 = vadd.f32 %v4552, %v4749
  %v5183 = vadd.f32 %v4553, %v4754
  %v5184 = vadd.f32 %v4554, %v4754
  %v5185 = vadd.f32 %v4555, %v4759
  %v5186 = vadd.f32 %v4556, %v4759
  %v5187 = vadd.f32 %v4557, %v4764
  %v5188 = vadd.f32 %v4558, %v4764
  %v5189 = vadd.f32 %v4559, %v4769
  %v5190 = vadd.f32 %v4560, %v4769
  %v5191 = vadd.f32 %v4561, %v4774
  %v5192 = vadd.f32 %v4562, %v4774
  %v5193 = vadd.f32 %v4563, %v4779
  %v5194 = vadd.f32 %v4564, %v4779
  %v5195 = vadd.f32 %v4565, %v4784
  %v5196 = vadd.f32 %v4566, %v4784
  %v5197 = vadd.f32 %v4567, %v4789
  %v5198 = vadd.f32 %v4568, %v4789
  %v5199 = vadd.f32 %v4569, %v4794
  %v5200 = vadd.f32 %v4570, %v4794
  %v5201 = vadd.f32 %v4571, %v4799
  %v5202 = vadd.f32 %v4572, %v4799
  %v5203 = vadd.f32 %v4573, %v4804
  %v5204 = vadd.f32 %v4574, %v4804
  %v5205 = vadd.f32 %v4575, %v4809
  %v5206 = vadd.f32 %v4576, %v4809
  %v5207 = vadd.f32 %v4577, %v4814
  %v5208 = vadd.f32 %v4578, %v4814
  %v5209 = vadd.f32 %v4579, %v4819
  %v5210 = vadd.f32 %v4580, %v4819
  %v5211 = vadd.f32 %v4581, %v4824
  %v5212 = vadd.f32 %v4582, %v4824
  %v5213 = vadd.f32 %v4583, %v4829
  %v5214 = vadd.f32 %v4584, %v4829
  %v5215 = vadd.f32 %v4585, %v4834
  %v5216 = vadd.f32 %v4586, %v4834
  %v5217 = vadd.f32 %v4587, %v4839
  %v5218 = vadd.f32 %v4588, %v4839
  %v5219 = vadd.f32 %v4589, %v4844
  %v5220 = vadd.f32 %v4590, %v4844
  %v5221 = vadd.f32 %v4591, %v4849
  %v5222 = vadd.f32 %v4592, %v4849
  %v5223 = vadd.f32 %v4593, %v4854
  %v5224 = vadd.f32 %v4594, %v4854
  %v5225 = vadd.f32 %v4595, %v4859
  %v5226 = vadd.f32 %v4596, %v4859
  %v5227 = vadd.f32 %v4597, %v4864
  %v5228 = vadd.f32 %v4598, %v4864
  %v5229 = vadd.f32 %v4599, %v4869
  %v5230 = vadd.f32 %v4600, %v4869
  %v5231 = vadd.f32 %v4601, %v4874
  %v5232 = vadd.f32 %v4602, %v4874
  %v5233 = vadd.f32 %v4603, %v4879
  %v5234 = vadd.f32 %v4604, %v4879
  %v5235 = vadd.f32 %v4605, %v4884
  %v5236 = vadd.f32 %v4606, %v4884
  %v5237 = vadd.f32 %v4607, %v4889
  %v5238 = vadd.f32 %v4608, %v4889
  %v5239 = vadd.f32 %v4609, %v4894
  %v5240 = vadd.f32 %v4610, %v4894
  %v5241 = vadd.f32 %v4611, %v4899
  %v5242 = vadd.f32 %v4612, %v4899
  %v5243 = vadd.f32 %v4613, %v4904
  %v5244 = vadd.f32 %v4614, %v4904
  %v5245 = vadd.f32 %v4615, %v4909
  %v5246 = vadd.f32 %v4616, %v4909
  %v5247 = vadd.f32 %v4617, %v4914
  %v5248 = vadd.f32 %v4618, %v4914
  %v5249 = vadd.f32 %v4619, %v4919
  %v5250 = vadd.f32 %v4620, %v4919
  %v5251 = vadd.f32 %v4621, %v4924
  %v5252 = vadd.f32 %v4622, %v4924
  %v5253 = vadd.f32 %v4623, %v4929
  %v5254 = vadd.f32 %v4624, %v4929
  %v5255 = vadd.f32 %v4625, %v4934
  %v5256 = vadd.f32 %v4626, %v4934
  %v5257 = vadd.f32 %v4627, %v4939
  %v5258 = vadd.f32 %v4628, %v4939
  %v5259 = vadd.f32 %v4629, %v4944
  %v5260 = vadd.f32 %v4630, %v4944
  %v5261 = vadd.f32 %v4631, %v4949
  %v5262 = vadd.f32 %v4632, %v4949
  %v5263 = vadd.f32 %v4633, %v4954
  %v5264 = vadd.f32 %v4634, %v4954
  %v5265 = vadd.f32 %v4635, %v4959
  %v5266 = vadd.f32 %v4636, %v4959
  %v5267 = vadd.f32 %v4637, %v4964
  %v5268 = vadd.f32 %v4638, %v4964
  %v5269 = vadd.f32 %v4639, %v4969
  %v5270 = vadd.f32 %v4640, %v4969
  %v5271 = vadd.f32 %v4641, %v4974
  %v5272 = vadd.f32 %v4642, %v4974
  %v5273 = vadd.f32 %v4643, %v4979
  %v5274 = vadd.f32 %v4644, %v4979
  %v5275 = vadd.f32 %v4645, %v4984
  %v5276 = vadd.f32 %v4646, %v4984
  %v5277 = vadd.f32 %v4647, %v4989
  %v5278 = vadd.f32 %v4648, %v4989
  %v5279 = vadd.f32 %v4649, %v4994
  %v5280 = vadd.f32 %v4650, %v4994
  %v5281 = vadd.f32 %v4651, %v4999
  %v5282 = vadd.f32 %v4652, %v4999
  %v5283 = vadd.f32 %v4653, %v5004
  %v5284 = vadd.f32 %v4654, %v5004
  %v5285 = vadd.f32 %v4655, %v5009
  %v5286 = vadd.f32 %v4656, %v5009
  %v5287 = vadd.f32 %v4657, %v5014
  %v5288 = vadd.f32 %v4658, %v5014
  %v5289 = vadd.f32 %v4659, %v5019
  %v5290 = vadd.f32 %v4660, %v5019
  %v5291 = vadd.f32 %v4661, %v5024
  %v5292 = vadd.f32 %v4662, %v5024
  %v5293 = vadd.f32 %v4663, %v5029
  %v5294 = vadd.f32 %v4664, %v5029
  %v5295 = vadd.f32 %v4665, %v5034
  %v5296 = vadd.f32 %v4666, %v5034
  %v5297 = vadd.f32 %v4667, %v5039
  %v5298 = vadd.f32 %v4668, %v5039
  %v5299 = vadd.f32 %v4669, %v5044
  %v5300 = vadd.f32 %v4670, %v5044
  %v5301 = vadd.f32 %v4671, %v5049
  %v5302 = vadd.f32 %v4672, %v5049
  %v5303 = vadd.f32 %v4673, %v5054
  %v5304 = vadd.f32 %v4674, %v5054
  %v5305 = vadd.f32 %v4675, %v5059
  %v5306 = vadd.f32 %v4676, %v5059
  %v5307 = vadd.f32 %v4677, %v5064
  %v5308 = vadd.f32 %v4678, %v5064
  %v5309 = vadd.f32 %v4679, %v5069
  %v5310 = vadd.f32 %v4680, %v5069
  %v5311 = vadd.f32 %v4681, %v5074
  %v5312 = vadd.f32 %v4682, %v5074
  %v5313 = vadd.f32 %v4683, %v5079
  %v5314 = vadd.f32 %v4684, %v5079
  %v5315 = vadd.f32 %v4685, %v5084
  %v5316 = vadd.f32 %v4686, %v5084
  %v5317 = vadd.f32 %v4687, %v5089
  %v5318 = vadd.f32 %v4688, %v5089
  %v5319 = vadd.f32 %v4689, %v5094
  %v5320 = vadd.f32 %v4690, %v5094
  %v5321 = vadd.f32 %v4691, %v5099
  %v5322 = vadd.f32 %v4692, %v5099
  %v5323 = vadd.f32 %v4693, %v5104
  %v5324 = vadd.f32 %v4694, %v5104
  %v5325 = vadd.f32 %v4695, %v5109
  %v5326 = vadd.f32 %v4696, %v5109
  %v5327 = vadd.f32 %v4697, %v5114
  %v5328 = vadd.f32 %v4698, %v5114
  %v5329 = vadd.f32 %v4699, %v5119
  %v5330 = vadd.f32 %v4700, %v5119
  %v5331 = vadd.f32 %v4701, %v5124
  %v5332 = vadd.f32 %v4702, %v5124
  %v5333 = vadd.f32 %v4703, %v5129
  %v5334 = vadd.f32 %v4704, %v5129
  %v5335 = vadd.f32 %v4705, %v5134
  %v5336 = vadd.f32 %v4706, %v5134
  %v5337 = vadd.f32 %v4707, %v5139
  %v5338 = vadd.f32 %v4708, %v5139
  %v5339 = vadd.f32 %v4709, %v5144
  %v5340 = vadd.f32 %v4710, %v5144
  %v5341 = vadd.f32 %v4711, %v5149
  %v5342 = vadd.f32 %v4712, %v5149
  %v5343 = vadd.f32 %v4713, %v5154
  %v5344 = vadd.f32 %v4714, %v5154
  %v5345 = vadd.f32 %v4715, %v5159
  %v5346 = vadd.f32 %v4716, %v5159
  %v5347 = vadd.f32 %v4717, %v5164
  %v5348 = vadd.f32 %v4718, %v5164
  %v5349 = vadd.f32 %v4719, %v5169
  %v5350 = vadd.f32 %v4720, %v5169
  %5351 = vst [vmem:[%s3] sm:$0xff] %v5171
  %5352 = vst.msk [vmem:[%s3 + $0x8] sm:$0xff] %vm1030, %v5172
  %5353 = vst [vmem:[%s3 + $0x10] sm:$0xff] %v5173
  %5354 = vst.msk [vmem:[%s3 + $0x18] sm:$0xff] %vm1030, %v5174
  %5355 = vst [vmem:[%s3 + $0x20] sm:$0xff] %v5175
  %5356 = vst.msk [vmem:[%s3 + $0x28] sm:$0xff] %vm1030, %v5176
  %5357 = vst [vmem:[%s3 + $0x30] sm:$0xff] %v5177
  %5358 = vst.msk [vmem:[%s3 + $0x38] sm:$0xff] %vm1030, %v5178
  %5359 = vst [vmem:[%s3 + $0x40] sm:$0xff] %v5179
  %5360 = vst.msk [vmem:[%s3 + $0x48] sm:$0xff] %vm1030, %v5180
  %5361 = vst [vmem:[%s3 + $0x50] sm:$0xff] %v5181
  %5362 = vst.msk [vmem:[%s3 + $0x58] sm:$0xff] %vm1030, %v5182
  %5363 = vst [vmem:[%s3 + $0x60] sm:$0xff] %v5183
  %5364 = vst.msk [vmem:[%s3 + $0x68] sm:$0xff] %vm1030, %v5184
  %5365 = vst [vmem:[%s3 + $0x70] sm:$0xff] %v5185
  %5366 = vst.msk [vmem:[%s3 + $0x78] sm:$0xff] %vm1030, %v5186
  %5367 = vst [vmem:[%s3 + $0x80] sm:$0xff] %v5187
  %5368 = vst.msk [vmem:[%s3 + $0x88] sm:$0xff] %vm1030, %v5188
  %5369 = vst [vmem:[%s3 + $0x90] sm:$0xff] %v5189
  %5370 = vst.msk [vmem:[%s3 + $0x98] sm:$0xff] %vm1030, %v5190
  %5371 = vst [vmem:[%s3 + $0xa0] sm:$0xff] %v5191
  %5372 = vst.msk [vmem:[%s3 + $0xa8] sm:$0xff] %vm1030, %v5192
  %5373 = vst [vmem:[%s3 + $0xb0] sm:$0xff] %v5193
  %5374 = vst.msk [vmem:[%s3 + $0xb8] sm:$0xff] %vm1030, %v5194
  %5375 = vst [vmem:[%s3 + $0xc0] sm:$0xff] %v5195
  %5376 = vst.msk [vmem:[%s3 + $0xc8] sm:$0xff] %vm1030, %v5196
  %5377 = vst [vmem:[%s3 + $0xd0] sm:$0xff] %v5197
  %5378 = vst.msk [vmem:[%s3 + $0xd8] sm:$0xff] %vm1030, %v5198
  %5379 = vst [vmem:[%s3 + $0xe0] sm:$0xff] %v5199
  %5380 = vst.msk [vmem:[%s3 + $0xe8] sm:$0xff] %vm1030, %v5200
  %5381 = vst [vmem:[%s3 + $0xf0] sm:$0xff] %v5201
  %5382 = vst.msk [vmem:[%s3 + $0xf8] sm:$0xff] %vm1030, %v5202
  %5383 = vst [vmem:[%s3 + $0x100] sm:$0xff] %v5203
  %5384 = vst.msk [vmem:[%s3 + $0x108] sm:$0xff] %vm1030, %v5204
  %5385 = vst [vmem:[%s3 + $0x110] sm:$0xff] %v5205
  %5386 = vst.msk [vmem:[%s3 + $0x118] sm:$0xff] %vm1030, %v5206
  %5387 = vst [vmem:[%s3 + $0x120] sm:$0xff] %v5207
  %5388 = vst.msk [vmem:[%s3 + $0x128] sm:$0xff] %vm1030, %v5208
  %5389 = vst [vmem:[%s3 + $0x130] sm:$0xff] %v5209
  %5390 = vst.msk [vmem:[%s3 + $0x138] sm:$0xff] %vm1030, %v5210
  %5391 = vst [vmem:[%s3 + $0x140] sm:$0xff] %v5211
  %5392 = vst.msk [vmem:[%s3 + $0x148] sm:$0xff] %vm1030, %v5212
  %5393 = vst [vmem:[%s3 + $0x150] sm:$0xff] %v5213
  %5394 = vst.msk [vmem:[%s3 + $0x158] sm:$0xff] %vm1030, %v5214
  %5395 = vst [vmem:[%s3 + $0x160] sm:$0xff] %v5215
  %5396 = vst.msk [vmem:[%s3 + $0x168] sm:$0xff] %vm1030, %v5216
  %5397 = vst [vmem:[%s3 + $0x170] sm:$0xff] %v5217
  %5398 = vst.msk [vmem:[%s3 + $0x178] sm:$0xff] %vm1030, %v5218
  %5399 = vst [vmem:[%s3 + $0x180] sm:$0xff] %v5219
  %5400 = vst.msk [vmem:[%s3 + $0x188] sm:$0xff] %vm1030, %v5220
  %5401 = vst [vmem:[%s3 + $0x190] sm:$0xff] %v5221
  %5402 = vst.msk [vmem:[%s3 + $0x198] sm:$0xff] %vm1030, %v5222
  %5403 = vst [vmem:[%s3 + $0x1a0] sm:$0xff] %v5223
  %5404 = vst.msk [vmem:[%s3 + $0x1a8] sm:$0xff] %vm1030, %v5224
  %5405 = vst [vmem:[%s3 + $0x1b0] sm:$0xff] %v5225
  %5406 = vst.msk [vmem:[%s3 + $0x1b8] sm:$0xff] %vm1030, %v5226
  %5407 = vst [vmem:[%s3 + $0x1c0] sm:$0xff] %v5227
  %5408 = vst.msk [vmem:[%s3 + $0x1c8] sm:$0xff] %vm1030, %v5228
  %5409 = vst [vmem:[%s3 + $0x1d0] sm:$0xff] %v5229
  %5410 = vst.msk [vmem:[%s3 + $0x1d8] sm:$0xff] %vm1030, %v5230
  %5411 = vst [vmem:[%s3 + $0x1e0] sm:$0xff] %v5231
  %5412 = vst.msk [vmem:[%s3 + $0x1e8] sm:$0xff] %vm1030, %v5232
  %5413 = vst [vmem:[%s3 + $0x1f0] sm:$0xff] %v5233
  %5414 = vst.msk [vmem:[%s3 + $0x1f8] sm:$0xff] %vm1030, %v5234
  %5415 = vst [vmem:[%s3 + $0x200] sm:$0xff] %v5235
  %5416 = vst.msk [vmem:[%s3 + $0x208] sm:$0xff] %vm1030, %v5236
  %5417 = vst [vmem:[%s3 + $0x210] sm:$0xff] %v5237
  %5418 = vst.msk [vmem:[%s3 + $0x218] sm:$0xff] %vm1030, %v5238
  %5419 = vst [vmem:[%s3 + $0x220] sm:$0xff] %v5239
  %5420 = vst.msk [vmem:[%s3 + $0x228] sm:$0xff] %vm1030, %v5240
  %5421 = vst [vmem:[%s3 + $0x230] sm:$0xff] %v5241
  %5422 = vst.msk [vmem:[%s3 + $0x238] sm:$0xff] %vm1030, %v5242
  %5423 = vst [vmem:[%s3 + $0x240] sm:$0xff] %v5243
  %5424 = vst.msk [vmem:[%s3 + $0x248] sm:$0xff] %vm1030, %v5244
  %5425 = vst [vmem:[%s3 + $0x250] sm:$0xff] %v5245
  %5426 = vst.msk [vmem:[%s3 + $0x258] sm:$0xff] %vm1030, %v5246
  %5427 = vst [vmem:[%s3 + $0x260] sm:$0xff] %v5247
  %5428 = vst.msk [vmem:[%s3 + $0x268] sm:$0xff] %vm1030, %v5248
  %5429 = vst [vmem:[%s3 + $0x270] sm:$0xff] %v5249
  %5430 = vst.msk [vmem:[%s3 + $0x278] sm:$0xff] %vm1030, %v5250
  %5431 = vst [vmem:[%s3 + $0x280] sm:$0xff] %v5251
  %5432 = vst.msk [vmem:[%s3 + $0x288] sm:$0xff] %vm1030, %v5252
  %5433 = vst [vmem:[%s3 + $0x290] sm:$0xff] %v5253
  %5434 = vst.msk [vmem:[%s3 + $0x298] sm:$0xff] %vm1030, %v5254
  %5435 = vst [vmem:[%s3 + $0x2a0] sm:$0xff] %v5255
  %5436 = vst.msk [vmem:[%s3 + $0x2a8] sm:$0xff] %vm1030, %v5256
  %5437 = vst [vmem:[%s3 + $0x2b0] sm:$0xff] %v5257
  %5438 = vst.msk [vmem:[%s3 + $0x2b8] sm:$0xff] %vm1030, %v5258
  %5439 = vst [vmem:[%s3 + $0x2c0] sm:$0xff] %v5259
  %5440 = vst.msk [vmem:[%s3 + $0x2c8] sm:$0xff] %vm1030, %v5260
  %5441 = vst [vmem:[%s3 + $0x2d0] sm:$0xff] %v5261
  %5442 = vst.msk [vmem:[%s3 + $0x2d8] sm:$0xff] %vm1030, %v5262
  %5443 = vst [vmem:[%s3 + $0x2e0] sm:$0xff] %v5263
  %5444 = vst.msk [vmem:[%s3 + $0x2e8] sm:$0xff] %vm1030, %v5264
  %5445 = vst [vmem:[%s3 + $0x2f0] sm:$0xff] %v5265
  %5446 = vst.msk [vmem:[%s3 + $0x2f8] sm:$0xff] %vm1030, %v5266
  %5447 = vst [vmem:[%s3 + $0x300] sm:$0xff] %v5267
  %5448 = vst.msk [vmem:[%s3 + $0x308] sm:$0xff] %vm1030, %v5268
  %5449 = vst [vmem:[%s3 + $0x310] sm:$0xff] %v5269
  %5450 = vst.msk [vmem:[%s3 + $0x318] sm:$0xff] %vm1030, %v5270
  %5451 = vst [vmem:[%s3 + $0x320] sm:$0xff] %v5271
  %5452 = vst.msk [vmem:[%s3 + $0x328] sm:$0xff] %vm1030, %v5272
  %5453 = vst [vmem:[%s3 + $0x330] sm:$0xff] %v5273
  %5454 = vst.msk [vmem:[%s3 + $0x338] sm:$0xff] %vm1030, %v5274
  %5455 = vst [vmem:[%s3 + $0x340] sm:$0xff] %v5275
  %5456 = vst.msk [vmem:[%s3 + $0x348] sm:$0xff] %vm1030, %v5276
  %5457 = vst [vmem:[%s3 + $0x350] sm:$0xff] %v5277
  %5458 = vst.msk [vmem:[%s3 + $0x358] sm:$0xff] %vm1030, %v5278
  %5459 = vst [vmem:[%s3 + $0x360] sm:$0xff] %v5279
  %5460 = vst.msk [vmem:[%s3 + $0x368] sm:$0xff] %vm1030, %v5280
  %5461 = vst [vmem:[%s3 + $0x370] sm:$0xff] %v5281
  %5462 = vst.msk [vmem:[%s3 + $0x378] sm:$0xff] %vm1030, %v5282
  %5463 = vst [vmem:[%s3 + $0x380] sm:$0xff] %v5283
  %5464 = vst.msk [vmem:[%s3 + $0x388] sm:$0xff] %vm1030, %v5284
  %5465 = vst [vmem:[%s3 + $0x390] sm:$0xff] %v5285
  %5466 = vst.msk [vmem:[%s3 + $0x398] sm:$0xff] %vm1030, %v5286
  %5467 = vst [vmem:[%s3 + $0x3a0] sm:$0xff] %v5287
  %5468 = vst.msk [vmem:[%s3 + $0x3a8] sm:$0xff] %vm1030, %v5288
  %5469 = vst [vmem:[%s3 + $0x3b0] sm:$0xff] %v5289
  %5470 = vst.msk [vmem:[%s3 + $0x3b8] sm:$0xff] %vm1030, %v5290
  %5471 = vst [vmem:[%s3 + $0x3c0] sm:$0xff] %v5291
  %5472 = vst.msk [vmem:[%s3 + $0x3c8] sm:$0xff] %vm1030, %v5292
  %5473 = vst [vmem:[%s3 + $0x3d0] sm:$0xff] %v5293
  %5474 = vst.msk [vmem:[%s3 + $0x3d8] sm:$0xff] %vm1030, %v5294
  %5475 = vst [vmem:[%s3 + $0x3e0] sm:$0xff] %v5295
  %5476 = vst.msk [vmem:[%s3 + $0x3e8] sm:$0xff] %vm1030, %v5296
  %5477 = vst [vmem:[%s3 + $0x3f0] sm:$0xff] %v5297
  %5478 = vst.msk [vmem:[%s3 + $0x3f8] sm:$0xff] %vm1030, %v5298
  %5479 = vst [vmem:[%s3 + $0x400] sm:$0xff] %v5299
  %5480 = vst.msk [vmem:[%s3 + $0x408] sm:$0xff] %vm1030, %v5300
  %5481 = vst [vmem:[%s3 + $0x410] sm:$0xff] %v5301
  %5482 = vst.msk [vmem:[%s3 + $0x418] sm:$0xff] %vm1030, %v5302
  %5483 = vst [vmem:[%s3 + $0x420] sm:$0xff] %v5303
  %5484 = vst.msk [vmem:[%s3 + $0x428] sm:$0xff] %vm1030, %v5304
  %5485 = vst [vmem:[%s3 + $0x430] sm:$0xff] %v5305
  %5486 = vst.msk [vmem:[%s3 + $0x438] sm:$0xff] %vm1030, %v5306
  %5487 = vst [vmem:[%s3 + $0x440] sm:$0xff] %v5307
  %5488 = vst.msk [vmem:[%s3 + $0x448] sm:$0xff] %vm1030, %v5308
  %5489 = vst [vmem:[%s3 + $0x450] sm:$0xff] %v5309
  %5490 = vst.msk [vmem:[%s3 + $0x458] sm:$0xff] %vm1030, %v5310
  %5491 = vst [vmem:[%s3 + $0x460] sm:$0xff] %v5311
  %5492 = vst.msk [vmem:[%s3 + $0x468] sm:$0xff] %vm1030, %v5312
  %5493 = vst [vmem:[%s3 + $0x470] sm:$0xff] %v5313
  %5494 = vst.msk [vmem:[%s3 + $0x478] sm:$0xff] %vm1030, %v5314
  %5495 = vst [vmem:[%s3 + $0x480] sm:$0xff] %v5315
  %5496 = vst.msk [vmem:[%s3 + $0x488] sm:$0xff] %vm1030, %v5316
  %5497 = vst [vmem:[%s3 + $0x490] sm:$0xff] %v5317
  %5498 = vst.msk [vmem:[%s3 + $0x498] sm:$0xff] %vm1030, %v5318
  %5499 = vst [vmem:[%s3 + $0x4a0] sm:$0xff] %v5319
  %5500 = vst.msk [vmem:[%s3 + $0x4a8] sm:$0xff] %vm1030, %v5320
  %5501 = vst [vmem:[%s3 + $0x4b0] sm:$0xff] %v5321
  %5502 = vst.msk [vmem:[%s3 + $0x4b8] sm:$0xff] %vm1030, %v5322
  %5503 = vst [vmem:[%s3 + $0x4c0] sm:$0xff] %v5323
  %5504 = vst.msk [vmem:[%s3 + $0x4c8] sm:$0xff] %vm1030, %v5324
  %5505 = vst [vmem:[%s3 + $0x4d0] sm:$0xff] %v5325
  %5506 = vst.msk [vmem:[%s3 + $0x4d8] sm:$0xff] %vm1030, %v5326
  %5507 = vst [vmem:[%s3 + $0x4e0] sm:$0xff] %v5327
  %5508 = vst.msk [vmem:[%s3 + $0x4e8] sm:$0xff] %vm1030, %v5328
  %5509 = vst [vmem:[%s3 + $0x4f0] sm:$0xff] %v5329
  %5510 = vst.msk [vmem:[%s3 + $0x4f8] sm:$0xff] %vm1030, %v5330
  %5511 = vst [vmem:[%s3 + $0x500] sm:$0xff] %v5331
  %5512 = vst.msk [vmem:[%s3 + $0x508] sm:$0xff] %vm1030, %v5332
  %5513 = vst [vmem:[%s3 + $0x510] sm:$0xff] %v5333
  %5514 = vst.msk [vmem:[%s3 + $0x518] sm:$0xff] %vm1030, %v5334
  %5515 = vst [vmem:[%s3 + $0x520] sm:$0xff] %v5335
  %5516 = vst.msk [vmem:[%s3 + $0x528] sm:$0xff] %vm1030, %v5336
  %5517 = vst [vmem:[%s3 + $0x530] sm:$0xff] %v5337
  %5518 = vst.msk [vmem:[%s3 + $0x538] sm:$0xff] %vm1030, %v5338
  %5519 = vst [vmem:[%s3 + $0x540] sm:$0xff] %v5339
  %5520 = vst.msk [vmem:[%s3 + $0x548] sm:$0xff] %vm1030, %v5340
  %5521 = vst [vmem:[%s3 + $0x550] sm:$0xff] %v5341
  %5522 = vst.msk [vmem:[%s3 + $0x558] sm:$0xff] %vm1030, %v5342
  %5523 = vst [vmem:[%s3 + $0x560] sm:$0xff] %v5343
  %5524 = vst.msk [vmem:[%s3 + $0x568] sm:$0xff] %vm1030, %v5344
  %5525 = vst [vmem:[%s3 + $0x570] sm:$0xff] %v5345
  %5526 = vst.msk [vmem:[%s3 + $0x578] sm:$0xff] %vm1030, %v5346
  %5527 = vst [vmem:[%s3 + $0x580] sm:$0xff] %v5347
  %5528 = vst.msk [vmem:[%s3 + $0x588] sm:$0xff] %vm1030, %v5348
  %5529 = vst [vmem:[%s3 + $0x590] sm:$0xff] %v5349
  %5530 = vst.msk [vmem:[%s3 + $0x598] sm:$0xff] %vm1030, %v5350
  // Predicated region
  $region14: #{tpu_custom_call.1} parent=0 // pred_check
    _
  $region15: #{tpu_custom_call.1} parent=0 // pred_check_branch
    %5532 = sbr.rel (0) target = $region17
  $region16: #{tpu_custom_call.1} parent=0 // pred_region
    _
  $region17: #{tpu_custom_call.1} parent=0 // pred_fallthru
    _
  // Predicated region
  $region18: #{tpu_custom_call.1} parent=0 // pred_check
    _
  $region19: #{tpu_custom_call.1} parent=0 // pred_check_branch
    %5534 = sbr.rel (0) target = $region21
  $region20: #{tpu_custom_call.1} parent=0 // pred_region
    _
  $region21: #{tpu_custom_call.1} parent=0 // pred_fallthru
    _

</llo_original>
